<compile_context>
chip_gen: v7x
topology: tpu7x:2x2x1
jax: 0.10.0
libtpu: 0.0.40
codegen_flags: <defaults>
</compile_context>

<pallas_src>
import jax
import jax.numpy as jnp
from jax.experimental import pallas as pl
from jax.experimental.pallas import tpu as pltpu

H = 128          # hidden / conv channel width fixed by the module
KSZ = 3          # conv kernel size (taps hard-coded in the kernel)
D1 = 512         # dense1 width


def _lstm_gates(g):
    # PyTorch gate order: i, f, g, o
    i = jax.nn.sigmoid(g[:, 0 * H:1 * H])
    f = jax.nn.sigmoid(g[:, 1 * H:2 * H])
    c = jnp.tanh(g[:, 2 * H:3 * H])
    o = jax.nn.sigmoid(g[:, 3 * H:4 * H])
    return i, f, c, o


def _fused_kernel(x_ref, wc1_ref, w_out_ref, w_in_ref, whh_ref, bias_ref,
                  o_ref, cols1_ref, cols2_ref, pool_ref, p2tm_ref):
    B, T, Cin = x_ref.shape
    T1 = T // 2 + 1                  # length after pool1
    T2 = T1 // 2 + 1                 # length after pool2
    P = T + 2                        # per-batch row stride inside pool_ref
    f32, bf16 = jnp.float32, jnp.bfloat16

    # Zero the padded scratches once; only interior rows/lanes are rewritten,
    # so the pad positions stay exactly zero (conv zero-pad; and zero == -inf
    # for the maxpools because their inputs are post-ReLU).
    cols1_ref[...] = jnp.zeros_like(cols1_ref)
    cols2_ref[...] = jnp.zeros_like(cols2_ref)
    pool_ref[...] = jnp.zeros_like(pool_ref)

    # ---- conv1 + ReLU: 3 shifted tap stores per batch, ONE batched matmul ---
    # cols1[b*T + t, k*Cin + c] = x[b, t + k - 1, c]  (zero out of range)
    for b in range(B):
        xb = x_ref[b]                                          # (T, Cin)
        r0 = b * T
        cols1_ref[r0 + 1:r0 + T, 0:Cin] = xb[0:T - 1]          # tap t-1
        cols1_ref[r0:r0 + T, Cin:2 * Cin] = xb                 # tap t
        cols1_ref[r0:r0 + T - 1, 2 * Cin:3 * Cin] = xb[1:T]    # tap t+1
    a1 = jnp.dot(cols1_ref[...].astype(bf16), wc1_ref[...],
                 preferred_element_type=f32)
    a1 = jnp.maximum(a1 + bias_ref[3:4, 0:H], 0.0)             # (B*T, H)

    # ---- pool1 (k=2,s=2,p=1) via strided max + conv2 im2col tap stores ------
    for b in range(B):
        pool_ref[b * P + 1:b * P + 1 + T, :] = a1[b * T:(b + 1) * T, :]
        p1b = jnp.maximum(pool_ref[pl.ds(b * P, T1, 2), :],
                          pool_ref[pl.ds(b * P + 1, T1, 2), :])  # (T1, H)
        r0 = b * T1
        cols2_ref[r0 + 1:r0 + T1, 0:H] = p1b[0:T1 - 1]
        cols2_ref[r0:r0 + T1, H:2 * H] = p1b
        cols2_ref[r0:r0 + T1 - 1, 2 * H:3 * H] = p1b[1:T1]

    # ---- conv2 + ReLU: ONE batched im2col matmul (B*T1, 3H) @ (3H, H) -------
    a2 = jnp.dot(cols2_ref[...].astype(bf16), w_out_ref[0:3 * H, :],
                 preferred_element_type=f32)
    a2 = jnp.maximum(a2 + bias_ref[3:4, H:2 * H], 0.0)         # (B*T1, H)

    # ---- pool2 + time-major restack (strided loads + strided row stores) ----
    # pool_ref row b*P (front pad) is still zero; rows 1..T1 are overwritten,
    # and pool2 only reads rows <= 2*T2-1 <= T1, so stale pool1 rows are never
    # touched.
    for b in range(B):
        pool_ref[b * P + 1:b * P + 1 + T1, :] = a2[b * T1:(b + 1) * T1, :]
        p2b = jnp.maximum(pool_ref[pl.ds(b * P, T2, 2), :],
                          pool_ref[pl.ds(b * P + 1, T2, 2), :])  # (T2, H)
        p2tm_ref[pl.ds(b, T2, B), :] = p2b      # time-major: row t*B + b

    # ---- 2-layer LSTM (step-synchronized == sequential two-layer LSTM) ------
    # Layer-1 input projection hoisted over ALL timesteps: one matmul.
    xin = jnp.dot(p2tm_ref[...].astype(bf16), w_in_ref[:, 0:4 * H],
                  preferred_element_type=f32) + bias_ref[0:1, :]   # (T2*B,4H)
    b2 = bias_ref[1:2, :]

    h1 = jnp.zeros((B, H), f32)
    c1 = jnp.zeros((B, H), f32)
    h2 = jnp.zeros((B, H), f32)
    c2 = jnp.zeros((B, H), f32)
    for t in range(T2):                          # tiny static loop (T2 = 5)
        # Both layers' recurrent projections in ONE K=2H matmul
        # (block-diagonal weight): rec[:, :4H] = h1@Whh1, rec[:, 4H:] = h2@Whh2
        hh = jnp.concatenate([h1, h2], axis=1).astype(bf16)        # (B, 2H)
        rec = jnp.dot(hh, whh_ref[...], preferred_element_type=f32)  # (B, 8H)

        g1 = xin[t * B:(t + 1) * B, :] + rec[:, 0:4 * H]
        i1, f1, gg1, o1 = _lstm_gates(g1)
        c1 = f1 * c1 + i1 * gg1
        h1 = o1 * jnp.tanh(c1)

        g2 = (jnp.dot(h1.astype(bf16), w_in_ref[:, 4 * H:8 * H],
                      preferred_element_type=f32)
              + rec[:, 4 * H:8 * H] + b2)
        i2, f2, gg2, o2 = _lstm_gates(g2)
        c2 = f2 * c2 + i2 * gg2
        h2 = o2 * jnp.tanh(c2)

    # ---- dense head (dropouts are eval-mode identities) ---------------------
    v = jnp.maximum(jnp.dot(h2.astype(bf16), w_in_ref[:, 8 * H:8 * H + D1],
                            preferred_element_type=f32)
                    + bias_ref[2:3, :], 0.0)                        # (B, D1)
    v = jnp.maximum(jnp.dot(v.astype(bf16), w_out_ref[3 * H:3 * H + D1, :],
                            preferred_element_type=f32)
                    + bias_ref[3:4, 2 * H:3 * H], 0.0)              # (B, H)
    # Final 128->1 projection kept lane-dense (weights zero-padded to 128
    # output lanes); the wrapper slices out column 0.
    o_ref[...] = (jnp.dot(v.astype(bf16),
                          w_in_ref[:, 8 * H + D1:8 * H + D1 + H],
                          preferred_element_type=f32)
                  + bias_ref[3:4, 3 * H:4 * H])


def conv_lstm_forward(x, p):
    """x: (B, T, C_in) -- same input as the PyTorch module (pre-permute)."""
    B, T, Cin = x.shape
    T1 = T // 2 + 1
    T2 = T1 // 2 + 1
    vmem = pl.BlockSpec(memory_space=pltpu.MemorySpace.VMEM)
    out = pl.pallas_call(
        _fused_kernel,
        out_shape=jax.ShapeDtypeStruct((B, H), jnp.float32),
        in_specs=[vmem] * 6,
        out_specs=vmem,
        scratch_shapes=[
            pltpu.VMEM((B * T, KSZ * Cin), jnp.float32),   # conv1 im2col
            pltpu.VMEM((B * T1, KSZ * H), jnp.float32),    # conv2 im2col
            pltpu.VMEM((B * (T + 2), H), jnp.float32),     # shared pool pad
            pltpu.VMEM((T2 * B, H), jnp.float32),          # time-major p2
        ],
    )(x, p["w_conv1"], p["w_out128"], p["w_in128"], p["w_hh_blk"], p["biases"])
    return out[:, :1]                                      # (B, 1)


def init_params(key, input_channels, kernel_size=3):
    assert kernel_size == 3, "kernel taps are specialized for kernel_size=3"
    Cin = input_channels
    ks = jax.random.split(key, 16)
    s = 0.05
    bf16 = jnp.bfloat16

    def nrm(k, shape):
        return s * jax.random.normal(k, shape, dtype=jnp.float32)

    # Conv weights in im2col / tap-major layout:
    #   w[k*Cin + c, out] == torch.convN.weight[out, c, k]
    w_c1 = nrm(ks[0], (kernel_size * Cin, H)); b_c1 = nrm(ks[1], (1, H))
    w_c2 = nrm(ks[2], (kernel_size * H, H));   b_c2 = nrm(ks[3], (1, H))
    # LSTM weights pre-transposed to (in, 4H); gate order i,f,g,o;
    # bias = b_ih + b_hh.
    w_ih1 = nrm(ks[4], (H, 4 * H)); w_hh1 = nrm(ks[5], (H, 4 * H))
    b1 = nrm(ks[6], (1, 4 * H))
    w_ih2 = nrm(ks[7], (H, 4 * H)); w_hh2 = nrm(ks[8], (H, 4 * H))
    b2 = nrm(ks[9], (1, 4 * H))
    # Dense head pre-transposed to (in, out).
    w_d1 = nrm(ks[10], (H, D1)); b_d1 = nrm(ks[11], (1, D1))
    w_d2 = nrm(ks[12], (D1, H)); b_d2 = nrm(ks[13], (1, H))
    w_d3 = nrm(ks[14], (H, 1));  b_d3 = nrm(ks[15], (1, 1))

    # 128->1 projection zero-padded to 128 output lanes (lane-dense store).
    w_d3p = jnp.concatenate([w_d3, jnp.zeros((H, H - 1), jnp.float32)], axis=1)
    b_d3p = jnp.concatenate([b_d3, jnp.zeros((1, H - 1), jnp.float32)], axis=1)
    # Block-diagonal recurrent weight: blockdiag(Whh1, Whh2) -> (2H, 8H).
    w_hh = jnp.zeros((2 * H, 8 * H), jnp.float32)
    w_hh = w_hh.at[:H, :4 * H].set(w_hh1).at[H:, 4 * H:].set(w_hh2)

    return {
        # Matmul operands stored in bf16 (f32 accumulation in-kernel).
        "w_conv1": w_c1.astype(bf16),                                # (K*Cin, H)
        "w_out128": jnp.concatenate([w_c2, w_d2], axis=0).astype(bf16),  # (3H+D1, H)
        "w_in128": jnp.concatenate([w_ih1, w_ih2, w_d1, w_d3p],
                                   axis=1).astype(bf16),             # (H, 8H+D1+H)
        "w_hh_blk": w_hh.astype(bf16),                               # (2H, 8H)
        # Bias pack (f32): row0=b1, row1=b2, row2=b_d1,
        #                  row3=[b_conv1 | b_conv2 | b_d2 | b_d3(pad)]
        "biases": jnp.concatenate(
            [b1, b2, b_d1,
             jnp.concatenate([b_c1, b_c2, b_d2, b_d3p], axis=1)],
            axis=0),                                                 # (4, 4H)
    }


if __name__ == "__main__":
    B, T, C_IN = 2, 16, 8
    key = jax.random.PRNGKey(0)
    k_x, k_p = jax.random.split(key)
    x = jax.random.normal(k_x, (B, T, C_IN), dtype=jnp.float32)
    params = init_params(k_p, C_IN)

    out = jax.jit(conv_lstm_forward)(x, params)
    out = jax.block_until_ready(out)

    assert out.shape == (B, 1), out.shape
    assert bool(jnp.all(jnp.isfinite(out)))
    print("KERNEL_OK")
</pallas_src>

<mosaic_0001>
module attributes {stable_mosaic.version = 11 : i64} {
  func.func @_fused_kernel(%arg0: memref<2x16x8xf32, #tpu.memory_space<vmem>>, %arg1: memref<24x128xbf16, #tpu.memory_space<vmem>>, %arg2: memref<896x128xbf16, #tpu.memory_space<vmem>>, %arg3: memref<128x1664xbf16, #tpu.memory_space<vmem>>, %arg4: memref<256x1024xbf16, #tpu.memory_space<vmem>>, %arg5: memref<4x512xf32, #tpu.memory_space<vmem>>, %arg6: memref<2x128xf32, #tpu.memory_space<vmem>>, %arg7: memref<32x24xf32, #tpu.memory_space<vmem>>, %arg8: memref<18x384xf32, #tpu.memory_space<vmem>>, %arg9: memref<36x128xf32, #tpu.memory_space<vmem>>, %arg10: memref<10x128xf32, #tpu.memory_space<vmem>>) attributes {dimension_semantics = [], scalar_prefetch = 0 : i64, scratch_operands = 4 : i64, tpu.core_type = #tpu.core_type<tc>} {
    %cst = arith.constant 0.000000e+00 : f32
    %0 = vector.broadcast %cst : f32 to vector<32x24xf32>
    %c0 = arith.constant 0 : index
    %c0_0 = arith.constant 0 : index
    %1 = vector.load %arg7[%c0, %c0_0] : memref<32x24xf32, #tpu.memory_space<vmem>>, vector<32x24xf32>
    tpu.vector_store %arg7[%c0, %c0_0], %0 {strides = array<i32>} : memref<32x24xf32, #tpu.memory_space<vmem>>, vector<32x24xf32>,
    %cst_1 = arith.constant 0.000000e+00 : f32
    %2 = vector.broadcast %cst_1 : f32 to vector<18x384xf32>
    %c0_2 = arith.constant 0 : index
    %c0_3 = arith.constant 0 : index
    %3 = vector.load %arg8[%c0_2, %c0_3] : memref<18x384xf32, #tpu.memory_space<vmem>>, vector<18x384xf32>
    tpu.vector_store %arg8[%c0_2, %c0_3], %2 {strides = array<i32>} : memref<18x384xf32, #tpu.memory_space<vmem>>, vector<18x384xf32>,
    %cst_4 = arith.constant 0.000000e+00 : f32
    %4 = vector.broadcast %cst_4 : f32 to vector<36x128xf32>
    %c0_5 = arith.constant 0 : index
    %c0_6 = arith.constant 0 : index
    %5 = vector.load %arg9[%c0_5, %c0_6] : memref<36x128xf32, #tpu.memory_space<vmem>>, vector<36x128xf32>
    tpu.vector_store %arg9[%c0_5, %c0_6], %4 {strides = array<i32>} : memref<36x128xf32, #tpu.memory_space<vmem>>, vector<36x128xf32>,
    %c0_7 = arith.constant 0 : index
    %c0_8 = arith.constant 0 : index
    %c0_9 = arith.constant 0 : index
    %6 = vector.load %arg0[%c0_7, %c0_8, %c0_9] : memref<2x16x8xf32, #tpu.memory_space<vmem>>, vector<1x16x8xf32>
    %7 = vector.shape_cast %6 : vector<1x16x8xf32> to vector<16x8xf32>
    %8 = vector.extract_strided_slice %7 {offsets = [0, 0], sizes = [15, 8], strides = [1, 1]} : vector<16x8xf32> to vector<15x8xf32>
    %c1 = arith.constant 1 : index
    %c0_10 = arith.constant 0 : index
    %9 = vector.load %arg7[%c1, %c0_10] : memref<32x24xf32, #tpu.memory_space<vmem>>, vector<15x8xf32>
    tpu.vector_store %arg7[%c1, %c0_10], %8 {strides = array<i32>} : memref<32x24xf32, #tpu.memory_space<vmem>>, vector<15x8xf32>,
    %c0_11 = arith.constant 0 : index
    %c8 = arith.constant 8 : index
    %10 = vector.load %arg7[%c0_11, %c8] : memref<32x24xf32, #tpu.memory_space<vmem>>, vector<16x8xf32>
    tpu.vector_store %arg7[%c0_11, %c8], %7 {strides = array<i32>} : memref<32x24xf32, #tpu.memory_space<vmem>>, vector<16x8xf32>,
    %11 = vector.extract_strided_slice %7 {offsets = [1, 0], sizes = [15, 8], strides = [1, 1]} : vector<16x8xf32> to vector<15x8xf32>
    %c0_12 = arith.constant 0 : index
    %c16 = arith.constant 16 : index
    %12 = vector.load %arg7[%c0_12, %c16] : memref<32x24xf32, #tpu.memory_space<vmem>>, vector<15x8xf32>
    tpu.vector_store %arg7[%c0_12, %c16], %11 {strides = array<i32>} : memref<32x24xf32, #tpu.memory_space<vmem>>, vector<15x8xf32>,
    %c1_13 = arith.constant 1 : index
    %c0_14 = arith.constant 0 : index
    %c0_15 = arith.constant 0 : index
    %13 = vector.load %arg0[%c1_13, %c0_14, %c0_15] : memref<2x16x8xf32, #tpu.memory_space<vmem>>, vector<1x16x8xf32>
    %14 = vector.shape_cast %13 : vector<1x16x8xf32> to vector<16x8xf32>
    %15 = vector.extract_strided_slice %14 {offsets = [0, 0], sizes = [15, 8], strides = [1, 1]} : vector<16x8xf32> to vector<15x8xf32>
    %c17 = arith.constant 17 : index
    %c0_16 = arith.constant 0 : index
    %16 = vector.load %arg7[%c17, %c0_16] : memref<32x24xf32, #tpu.memory_space<vmem>>, vector<15x8xf32>
    tpu.vector_store %arg7[%c17, %c0_16], %15 {strides = array<i32>} : memref<32x24xf32, #tpu.memory_space<vmem>>, vector<15x8xf32>,
    %c16_17 = arith.constant 16 : index
    %c8_18 = arith.constant 8 : index
    %17 = vector.load %arg7[%c16_17, %c8_18] : memref<32x24xf32, #tpu.memory_space<vmem>>, vector<16x8xf32>
    tpu.vector_store %arg7[%c16_17, %c8_18], %14 {strides = array<i32>} : memref<32x24xf32, #tpu.memory_space<vmem>>, vector<16x8xf32>,
    %18 = vector.extract_strided_slice %14 {offsets = [1, 0], sizes = [15, 8], strides = [1, 1]} : vector<16x8xf32> to vector<15x8xf32>
    %c16_19 = arith.constant 16 : index
    %c16_20 = arith.constant 16 : index
    %19 = vector.load %arg7[%c16_19, %c16_20] : memref<32x24xf32, #tpu.memory_space<vmem>>, vector<15x8xf32>
    tpu.vector_store %arg7[%c16_19, %c16_20], %18 {strides = array<i32>} : memref<32x24xf32, #tpu.memory_space<vmem>>, vector<15x8xf32>,
    %c0_21 = arith.constant 0 : index
    %c0_22 = arith.constant 0 : index
    %20 = vector.load %arg7[%c0_21, %c0_22] : memref<32x24xf32, #tpu.memory_space<vmem>>, vector<32x24xf32>
    %21 = arith.truncf %20 : vector<32x24xf32> to vector<32x24xbf16>
    %c0_23 = arith.constant 0 : index
    %c0_24 = arith.constant 0 : index
    %22 = vector.load %arg1[%c0_23, %c0_24] : memref<24x128xbf16, #tpu.memory_space<vmem>>, vector<24x128xbf16>
    %cst_25 = arith.constant dense<0.000000e+00> : vector<32x128xf32>
    %23 = tpu.matmul %21, %22, %cst_25 {dimension_numbers = #tpu.dot_dimension_numbers<[1], [0], [0], [1], [0, 0, 1, 1], [], []>} : vector<32x24xbf16>, vector<24x128xbf16>, vector<32x128xf32> -> vector<32x128xf32>
    %c3 = arith.constant 3 : index
    %c0_26 = arith.constant 0 : index
    %24 = vector.load %arg5[%c3, %c0_26] : memref<4x512xf32, #tpu.memory_space<vmem>>, vector<1x128xf32>
    %25 = vector.broadcast %24 : vector<1x128xf32> to vector<32x128xf32>
    %26 = arith.addf %23, %25 : vector<32x128xf32>
    %cst_27 = arith.constant 0.000000e+00 : f32
    %27 = vector.broadcast %cst_27 : f32 to vector<32x128xf32>
    %28 = arith.maximumf %26, %27 : vector<32x128xf32>
    %29 = vector.extract_strided_slice %28 {offsets = [0, 0], sizes = [16, 128], strides = [1, 1]} : vector<32x128xf32> to vector<16x128xf32>
    %c1_28 = arith.constant 1 : index
    %c0_29 = arith.constant 0 : index
    %30 = vector.load %arg9[%c1_28, %c0_29] : memref<36x128xf32, #tpu.memory_space<vmem>>, vector<16x128xf32>
    tpu.vector_store %arg9[%c1_28, %c0_29], %29 {strides = array<i32>} : memref<36x128xf32, #tpu.memory_space<vmem>>, vector<16x128xf32>,
    %c0_30 = arith.constant 0 : index
    %c0_31 = arith.constant 0 : index
    %31 = tpu.strided_load %arg9[%c0_30, %c0_31] {strides = array<i32: 2, 1>} : memref<36x128xf32, #tpu.memory_space<vmem>>, vector<9x128xf32>
    %c1_32 = arith.constant 1 : index
    %c0_33 = arith.constant 0 : index
    %32 = tpu.strided_load %arg9[%c1_32, %c0_33] {strides = array<i32: 2, 1>} : memref<36x128xf32, #tpu.memory_space<vmem>>, vector<9x128xf32>
    %33 = arith.maximumf %31, %32 : vector<9x128xf32>
    %34 = vector.extract_strided_slice %33 {offsets = [0, 0], sizes = [8, 128], strides = [1, 1]} : vector<9x128xf32> to vector<8x128xf32>
    %c1_34 = arith.constant 1 : index
    %c0_35 = arith.constant 0 : index
    %35 = vector.load %arg8[%c1_34, %c0_35] : memref<18x384xf32, #tpu.memory_space<vmem>>, vector<8x128xf32>
    tpu.vector_store %arg8[%c1_34, %c0_35], %34 {strides = array<i32>} : memref<18x384xf32, #tpu.memory_space<vmem>>, vector<8x128xf32>,
    %c0_36 = arith.constant 0 : index
    %c128 = arith.constant 128 : index
    %36 = vector.load %arg8[%c0_36, %c128] : memref<18x384xf32, #tpu.memory_space<vmem>>, vector<9x128xf32>
    tpu.vector_store %arg8[%c0_36, %c128], %33 {strides = array<i32>} : memref<18x384xf32, #tpu.memory_space<vmem>>, vector<9x128xf32>,
    %37 = vector.extract_strided_slice %33 {offsets = [1, 0], sizes = [8, 128], strides = [1, 1]} : vector<9x128xf32> to vector<8x128xf32>
    %c0_37 = arith.constant 0 : index
    %c256 = arith.constant 256 : index
    %38 = vector.load %arg8[%c0_37, %c256] : memref<18x384xf32, #tpu.memory_space<vmem>>, vector<8x128xf32>
    tpu.vector_store %arg8[%c0_37, %c256], %37 {strides = array<i32>} : memref<18x384xf32, #tpu.memory_space<vmem>>, vector<8x128xf32>,
    %39 = vector.extract_strided_slice %28 {offsets = [16, 0], sizes = [16, 128], strides = [1, 1]} : vector<32x128xf32> to vector<16x128xf32>
    %c19 = arith.constant 19 : index
    %c0_38 = arith.constant 0 : index
    %40 = vector.load %arg9[%c19, %c0_38] : memref<36x128xf32, #tpu.memory_space<vmem>>, vector<16x128xf32>
    tpu.vector_store %arg9[%c19, %c0_38], %39 {strides = array<i32>} : memref<36x128xf32, #tpu.memory_space<vmem>>, vector<16x128xf32>,
    %c18 = arith.constant 18 : index
    %c0_39 = arith.constant 0 : index
    %41 = tpu.strided_load %arg9[%c18, %c0_39] {strides = array<i32: 2, 1>} : memref<36x128xf32, #tpu.memory_space<vmem>>, vector<9x128xf32>
    %c19_40 = arith.constant 19 : index
    %c0_41 = arith.constant 0 : index
    %42 = tpu.strided_load %arg9[%c19_40, %c0_41] {strides = array<i32: 2, 1>} : memref<36x128xf32, #tpu.memory_space<vmem>>, vector<9x128xf32>
    %43 = arith.maximumf %41, %42 : vector<9x128xf32>
    %44 = vector.extract_strided_slice %43 {offsets = [0, 0], sizes = [8, 128], strides = [1, 1]} : vector<9x128xf32> to vector<8x128xf32>
    %c10 = arith.constant 10 : index
    %c0_42 = arith.constant 0 : index
    %45 = vector.load %arg8[%c10, %c0_42] : memref<18x384xf32, #tpu.memory_space<vmem>>, vector<8x128xf32>
    tpu.vector_store %arg8[%c10, %c0_42], %44 {strides = array<i32>} : memref<18x384xf32, #tpu.memory_space<vmem>>, vector<8x128xf32>,
    %c9 = arith.constant 9 : index
    %c128_43 = arith.constant 128 : index
    %46 = vector.load %arg8[%c9, %c128_43] : memref<18x384xf32, #tpu.memory_space<vmem>>, vector<9x128xf32>
    tpu.vector_store %arg8[%c9, %c128_43], %43 {strides = array<i32>} : memref<18x384xf32, #tpu.memory_space<vmem>>, vector<9x128xf32>,
    %47 = vector.extract_strided_slice %43 {offsets = [1, 0], sizes = [8, 128], strides = [1, 1]} : vector<9x128xf32> to vector<8x128xf32>
    %c9_44 = arith.constant 9 : index
    %c256_45 = arith.constant 256 : index
    %48 = vector.load %arg8[%c9_44, %c256_45] : memref<18x384xf32, #tpu.memory_space<vmem>>, vector<8x128xf32>
    tpu.vector_store %arg8[%c9_44, %c256_45], %47 {strides = array<i32>} : memref<18x384xf32, #tpu.memory_space<vmem>>, vector<8x128xf32>,
    %c0_46 = arith.constant 0 : index
    %c0_47 = arith.constant 0 : index
    %49 = vector.load %arg8[%c0_46, %c0_47] : memref<18x384xf32, #tpu.memory_space<vmem>>, vector<18x384xf32>
    %50 = arith.truncf %49 : vector<18x384xf32> to vector<18x384xbf16>
    %c0_48 = arith.constant 0 : index
    %c0_49 = arith.constant 0 : index
    %51 = vector.load %arg2[%c0_48, %c0_49] : memref<896x128xbf16, #tpu.memory_space<vmem>>, vector<384x128xbf16>
    %cst_50 = arith.constant dense<0.000000e+00> : vector<18x128xf32>
    %52 = tpu.matmul %50, %51, %cst_50 {dimension_numbers = #tpu.dot_dimension_numbers<[1], [0], [0], [1], [0, 0, 1, 1], [], []>} : vector<18x384xbf16>, vector<384x128xbf16>, vector<18x128xf32> -> vector<18x128xf32>
    %c3_51 = arith.constant 3 : index
    %c128_52 = arith.constant 128 : index
    %53 = vector.load %arg5[%c3_51, %c128_52] : memref<4x512xf32, #tpu.memory_space<vmem>>, vector<1x128xf32>
    %54 = vector.broadcast %53 : vector<1x128xf32> to vector<18x128xf32>
    %55 = arith.addf %52, %54 : vector<18x128xf32>
    %cst_53 = arith.constant 0.000000e+00 : f32
    %56 = vector.broadcast %cst_53 : f32 to vector<18x128xf32>
    %57 = arith.maximumf %55, %56 : vector<18x128xf32>
    %58 = vector.extract_strided_slice %57 {offsets = [0, 0], sizes = [9, 128], strides = [1, 1]} : vector<18x128xf32> to vector<9x128xf32>
    %c1_54 = arith.constant 1 : index
    %c0_55 = arith.constant 0 : index
    %59 = vector.load %arg9[%c1_54, %c0_55] : memref<36x128xf32, #tpu.memory_space<vmem>>, vector<9x128xf32>
    tpu.vector_store %arg9[%c1_54, %c0_55], %58 {strides = array<i32>} : memref<36x128xf32, #tpu.memory_space<vmem>>, vector<9x128xf32>,
    %c0_56 = arith.constant 0 : index
    %c0_57 = arith.constant 0 : index
    %60 = tpu.strided_load %arg9[%c0_56, %c0_57] {strides = array<i32: 2, 1>} : memref<36x128xf32, #tpu.memory_space<vmem>>, vector<5x128xf32>
    %c1_58 = arith.constant 1 : index
    %c0_59 = arith.constant 0 : index
    %61 = tpu.strided_load %arg9[%c1_58, %c0_59] {strides = array<i32: 2, 1>} : memref<36x128xf32, #tpu.memory_space<vmem>>, vector<5x128xf32>
    %62 = arith.maximumf %60, %61 : vector<5x128xf32>
    %c0_60 = arith.constant 0 : index
    %c0_61 = arith.constant 0 : index
    %63 = tpu.strided_load %arg10[%c0_60, %c0_61] {strides = array<i32: 2, 1>} : memref<10x128xf32, #tpu.memory_space<vmem>>, vector<5x128xf32>
    tpu.strided_store %arg10[%c0_60, %c0_61], %62 {strides = array<i32: 2, 1>} : memref<10x128xf32, #tpu.memory_space<vmem>>, vector<5x128xf32>
    %64 = vector.extract_strided_slice %57 {offsets = [9, 0], sizes = [9, 128], strides = [1, 1]} : vector<18x128xf32> to vector<9x128xf32>
    %c19_62 = arith.constant 19 : index
    %c0_63 = arith.constant 0 : index
    %65 = vector.load %arg9[%c19_62, %c0_63] : memref<36x128xf32, #tpu.memory_space<vmem>>, vector<9x128xf32>
    tpu.vector_store %arg9[%c19_62, %c0_63], %64 {strides = array<i32>} : memref<36x128xf32, #tpu.memory_space<vmem>>, vector<9x128xf32>,
    %c18_64 = arith.constant 18 : index
    %c0_65 = arith.constant 0 : index
    %66 = tpu.strided_load %arg9[%c18_64, %c0_65] {strides = array<i32: 2, 1>} : memref<36x128xf32, #tpu.memory_space<vmem>>, vector<5x128xf32>
    %c19_66 = arith.constant 19 : index
    %c0_67 = arith.constant 0 : index
    %67 = tpu.strided_load %arg9[%c19_66, %c0_67] {strides = array<i32: 2, 1>} : memref<36x128xf32, #tpu.memory_space<vmem>>, vector<5x128xf32>
    %68 = arith.maximumf %66, %67 : vector<5x128xf32>
    %c1_68 = arith.constant 1 : index
    %c0_69 = arith.constant 0 : index
    %69 = tpu.strided_load %arg10[%c1_68, %c0_69] {strides = array<i32: 2, 1>} : memref<10x128xf32, #tpu.memory_space<vmem>>, vector<5x128xf32>
    tpu.strided_store %arg10[%c1_68, %c0_69], %68 {strides = array<i32: 2, 1>} : memref<10x128xf32, #tpu.memory_space<vmem>>, vector<5x128xf32>
    %c0_70 = arith.constant 0 : index
    %c0_71 = arith.constant 0 : index
    %70 = vector.load %arg10[%c0_70, %c0_71] : memref<10x128xf32, #tpu.memory_space<vmem>>, vector<10x128xf32>
    %71 = arith.truncf %70 : vector<10x128xf32> to vector<10x128xbf16>
    %c0_72 = arith.constant 0 : index
    %c0_73 = arith.constant 0 : index
    %72 = vector.load %arg3[%c0_72, %c0_73] : memref<128x1664xbf16, #tpu.memory_space<vmem>>, vector<128x512xbf16>
    %cst_74 = arith.constant dense<0.000000e+00> : vector<10x512xf32>
    %73 = tpu.matmul %71, %72, %cst_74 {dimension_numbers = #tpu.dot_dimension_numbers<[1], [0], [0], [1], [0, 0, 1, 1], [], []>} : vector<10x128xbf16>, vector<128x512xbf16>, vector<10x512xf32> -> vector<10x512xf32>
    %c0_75 = arith.constant 0 : index
    %c0_76 = arith.constant 0 : index
    %74 = vector.load %arg5[%c0_75, %c0_76] : memref<4x512xf32, #tpu.memory_space<vmem>>, vector<1x512xf32>
    %75 = vector.broadcast %74 : vector<1x512xf32> to vector<10x512xf32>
    %76 = arith.addf %73, %75 : vector<10x512xf32>
    %c1_77 = arith.constant 1 : index
    %c0_78 = arith.constant 0 : index
    %77 = vector.load %arg5[%c1_77, %c0_78] : memref<4x512xf32, #tpu.memory_space<vmem>>, vector<1x512xf32>
    %cst_79 = arith.constant 0.000000e+00 : f32
    %78 = vector.broadcast %cst_79 : f32 to vector<2x128xf32>
    %cst_80 = arith.constant 0.000000e+00 : f32
    %79 = vector.broadcast %cst_80 : f32 to vector<2x128xf32>
    %cst_81 = arith.constant 0.000000e+00 : f32
    %80 = vector.broadcast %cst_81 : f32 to vector<2x128xf32>
    %cst_82 = arith.constant 0.000000e+00 : f32
    %81 = vector.broadcast %cst_82 : f32 to vector<2x128xf32>
    %82 = tpu.concatenate %78, %80 in 1 : vector<2x128xf32>, vector<2x128xf32> -> vector<2x256xf32>
    %83 = arith.truncf %82 : vector<2x256xf32> to vector<2x256xbf16>
    %c0_83 = arith.constant 0 : index
    %c0_84 = arith.constant 0 : index
    %84 = vector.load %arg4[%c0_83, %c0_84] : memref<256x1024xbf16, #tpu.memory_space<vmem>>, vector<256x1024xbf16>
    %cst_85 = arith.constant dense<0.000000e+00> : vector<2x1024xf32>
    %85 = tpu.matmul %83, %84, %cst_85 {dimension_numbers = #tpu.dot_dimension_numbers<[1], [0], [0], [1], [0, 0, 1, 1], [], []>} : vector<2x256xbf16>, vector<256x1024xbf16>, vector<2x1024xf32> -> vector<2x1024xf32>
    %86 = vector.extract_strided_slice %76 {offsets = [0, 0], sizes = [2, 512], strides = [1, 1]} : vector<10x512xf32> to vector<2x512xf32>
    %87 = vector.extract_strided_slice %85 {offsets = [0, 0], sizes = [2, 512], strides = [1, 1]} : vector<2x1024xf32> to vector<2x512xf32>
    %88 = arith.addf %86, %87 : vector<2x512xf32>
    %89 = vector.extract_strided_slice %88 {offsets = [0, 0], sizes = [2, 128], strides = [1, 1]} : vector<2x512xf32> to vector<2x128xf32>
    %90 = arith.negf %89 : vector<2x128xf32>
    %91 = math.exp %90 : vector<2x128xf32>
    %cst_86 = arith.constant 1.000000e+00 : f32
    %92 = vector.broadcast %cst_86 : f32 to vector<2x128xf32>
    %93 = arith.addf %92, %91 : vector<2x128xf32>
    %94 = arith.divf %92, %93 : vector<2x128xf32>
    %95 = vector.extract_strided_slice %88 {offsets = [0, 128], sizes = [2, 128], strides = [1, 1]} : vector<2x512xf32> to vector<2x128xf32>
    %96 = arith.negf %95 : vector<2x128xf32>
    %97 = math.exp %96 : vector<2x128xf32>
    %cst_87 = arith.constant 1.000000e+00 : f32
    %98 = vector.broadcast %cst_87 : f32 to vector<2x128xf32>
    %99 = arith.addf %98, %97 : vector<2x128xf32>
    %100 = arith.divf %98, %99 : vector<2x128xf32>
    %101 = vector.extract_strided_slice %88 {offsets = [0, 256], sizes = [2, 128], strides = [1, 1]} : vector<2x512xf32> to vector<2x128xf32>
    %102 = math.tanh %101 : vector<2x128xf32>
    %103 = vector.extract_strided_slice %88 {offsets = [0, 384], sizes = [2, 128], strides = [1, 1]} : vector<2x512xf32> to vector<2x128xf32>
    %104 = arith.negf %103 : vector<2x128xf32>
    %105 = math.exp %104 : vector<2x128xf32>
    %cst_88 = arith.constant 1.000000e+00 : f32
    %106 = vector.broadcast %cst_88 : f32 to vector<2x128xf32>
    %107 = arith.addf %106, %105 : vector<2x128xf32>
    %108 = arith.divf %106, %107 : vector<2x128xf32>
    %109 = arith.mulf %100, %79 : vector<2x128xf32>
    %110 = arith.mulf %94, %102 : vector<2x128xf32>
    %111 = arith.addf %109, %110 : vector<2x128xf32>
    %112 = math.tanh %111 : vector<2x128xf32>
    %113 = arith.mulf %108, %112 : vector<2x128xf32>
    %114 = arith.truncf %113 : vector<2x128xf32> to vector<2x128xbf16>
    %c0_89 = arith.constant 0 : index
    %c512 = arith.constant 512 : index
    %115 = vector.load %arg3[%c0_89, %c512] : memref<128x1664xbf16, #tpu.memory_space<vmem>>, vector<128x512xbf16>
    %cst_90 = arith.constant dense<0.000000e+00> : vector<2x512xf32>
    %116 = tpu.matmul %114, %115, %cst_90 {dimension_numbers = #tpu.dot_dimension_numbers<[1], [0], [0], [1], [0, 0, 1, 1], [], []>} : vector<2x128xbf16>, vector<128x512xbf16>, vector<2x512xf32> -> vector<2x512xf32>
    %117 = vector.extract_strided_slice %85 {offsets = [0, 512], sizes = [2, 512], strides = [1, 1]} : vector<2x1024xf32> to vector<2x512xf32>
    %118 = arith.addf %116, %117 : vector<2x512xf32>
    %119 = vector.broadcast %77 : vector<1x512xf32> to vector<2x512xf32>
    %120 = arith.addf %118, %119 : vector<2x512xf32>
    %121 = vector.extract_strided_slice %120 {offsets = [0, 0], sizes = [2, 128], strides = [1, 1]} : vector<2x512xf32> to vector<2x128xf32>
    %122 = arith.negf %121 : vector<2x128xf32>
    %123 = math.exp %122 : vector<2x128xf32>
    %cst_91 = arith.constant 1.000000e+00 : f32
    %124 = vector.broadcast %cst_91 : f32 to vector<2x128xf32>
    %125 = arith.addf %124, %123 : vector<2x128xf32>
    %126 = arith.divf %124, %125 : vector<2x128xf32>
    %127 = vector.extract_strided_slice %120 {offsets = [0, 128], sizes = [2, 128], strides = [1, 1]} : vector<2x512xf32> to vector<2x128xf32>
    %128 = arith.negf %127 : vector<2x128xf32>
    %129 = math.exp %128 : vector<2x128xf32>
    %cst_92 = arith.constant 1.000000e+00 : f32
    %130 = vector.broadcast %cst_92 : f32 to vector<2x128xf32>
    %131 = arith.addf %130, %129 : vector<2x128xf32>
    %132 = arith.divf %130, %131 : vector<2x128xf32>
    %133 = vector.extract_strided_slice %120 {offsets = [0, 256], sizes = [2, 128], strides = [1, 1]} : vector<2x512xf32> to vector<2x128xf32>
    %134 = math.tanh %133 : vector<2x128xf32>
    %135 = vector.extract_strided_slice %120 {offsets = [0, 384], sizes = [2, 128], strides = [1, 1]} : vector<2x512xf32> to vector<2x128xf32>
    %136 = arith.negf %135 : vector<2x128xf32>
    %137 = math.exp %136 : vector<2x128xf32>
    %cst_93 = arith.constant 1.000000e+00 : f32
    %138 = vector.broadcast %cst_93 : f32 to vector<2x128xf32>
    %139 = arith.addf %138, %137 : vector<2x128xf32>
    %140 = arith.divf %138, %139 : vector<2x128xf32>
    %141 = arith.mulf %132, %81 : vector<2x128xf32>
    %142 = arith.mulf %126, %134 : vector<2x128xf32>
    %143 = arith.addf %141, %142 : vector<2x128xf32>
    %144 = math.tanh %143 : vector<2x128xf32>
    %145 = arith.mulf %140, %144 : vector<2x128xf32>
    %146 = tpu.concatenate %113, %145 in 1 : vector<2x128xf32>, vector<2x128xf32> -> vector<2x256xf32>
    %147 = arith.truncf %146 : vector<2x256xf32> to vector<2x256xbf16>
    %c0_94 = arith.constant 0 : index
    %c0_95 = arith.constant 0 : index
    %148 = vector.load %arg4[%c0_94, %c0_95] : memref<256x1024xbf16, #tpu.memory_space<vmem>>, vector<256x1024xbf16>
    %cst_96 = arith.constant dense<0.000000e+00> : vector<2x1024xf32>
    %149 = tpu.matmul %147, %148, %cst_96 {dimension_numbers = #tpu.dot_dimension_numbers<[1], [0], [0], [1], [0, 0, 1, 1], [], []>} : vector<2x256xbf16>, vector<256x1024xbf16>, vector<2x1024xf32> -> vector<2x1024xf32>
    %150 = vector.extract_strided_slice %76 {offsets = [2, 0], sizes = [2, 512], strides = [1, 1]} : vector<10x512xf32> to vector<2x512xf32>
    %151 = vector.extract_strided_slice %149 {offsets = [0, 0], sizes = [2, 512], strides = [1, 1]} : vector<2x1024xf32> to vector<2x512xf32>
    %152 = arith.addf %150, %151 : vector<2x512xf32>
    %153 = vector.extract_strided_slice %152 {offsets = [0, 0], sizes = [2, 128], strides = [1, 1]} : vector<2x512xf32> to vector<2x128xf32>
    %154 = arith.negf %153 : vector<2x128xf32>
    %155 = math.exp %154 : vector<2x128xf32>
    %cst_97 = arith.constant 1.000000e+00 : f32
    %156 = vector.broadcast %cst_97 : f32 to vector<2x128xf32>
    %157 = arith.addf %156, %155 : vector<2x128xf32>
    %158 = arith.divf %156, %157 : vector<2x128xf32>
    %159 = vector.extract_strided_slice %152 {offsets = [0, 128], sizes = [2, 128], strides = [1, 1]} : vector<2x512xf32> to vector<2x128xf32>
    %160 = arith.negf %159 : vector<2x128xf32>
    %161 = math.exp %160 : vector<2x128xf32>
    %cst_98 = arith.constant 1.000000e+00 : f32
    %162 = vector.broadcast %cst_98 : f32 to vector<2x128xf32>
    %163 = arith.addf %162, %161 : vector<2x128xf32>
    %164 = arith.divf %162, %163 : vector<2x128xf32>
    %165 = vector.extract_strided_slice %152 {offsets = [0, 256], sizes = [2, 128], strides = [1, 1]} : vector<2x512xf32> to vector<2x128xf32>
    %166 = math.tanh %165 : vector<2x128xf32>
    %167 = vector.extract_strided_slice %152 {offsets = [0, 384], sizes = [2, 128], strides = [1, 1]} : vector<2x512xf32> to vector<2x128xf32>
    %168 = arith.negf %167 : vector<2x128xf32>
    %169 = math.exp %168 : vector<2x128xf32>
    %cst_99 = arith.constant 1.000000e+00 : f32
    %170 = vector.broadcast %cst_99 : f32 to vector<2x128xf32>
    %171 = arith.addf %170, %169 : vector<2x128xf32>
    %172 = arith.divf %170, %171 : vector<2x128xf32>
    %173 = arith.mulf %164, %111 : vector<2x128xf32>
    %174 = arith.mulf %158, %166 : vector<2x128xf32>
    %175 = arith.addf %173, %174 : vector<2x128xf32>
    %176 = math.tanh %175 : vector<2x128xf32>
    %177 = arith.mulf %172, %176 : vector<2x128xf32>
    %178 = arith.truncf %177 : vector<2x128xf32> to vector<2x128xbf16>
    %c0_100 = arith.constant 0 : index
    %c512_101 = arith.constant 512 : index
    %179 = vector.load %arg3[%c0_100, %c512_101] : memref<128x1664xbf16, #tpu.memory_space<vmem>>, vector<128x512xbf16>
    %cst_102 = arith.constant dense<0.000000e+00> : vector<2x512xf32>
    %180 = tpu.matmul %178, %179, %cst_102 {dimension_numbers = #tpu.dot_dimension_numbers<[1], [0], [0], [1], [0, 0, 1, 1], [], []>} : vector<2x128xbf16>, vector<128x512xbf16>, vector<2x512xf32> -> vector<2x512xf32>
    %181 = vector.extract_strided_slice %149 {offsets = [0, 512], sizes = [2, 512], strides = [1, 1]} : vector<2x1024xf32> to vector<2x512xf32>
    %182 = arith.addf %180, %181 : vector<2x512xf32>
    %183 = vector.broadcast %77 : vector<1x512xf32> to vector<2x512xf32>
    %184 = arith.addf %182, %183 : vector<2x512xf32>
    %185 = vector.extract_strided_slice %184 {offsets = [0, 0], sizes = [2, 128], strides = [1, 1]} : vector<2x512xf32> to vector<2x128xf32>
    %186 = arith.negf %185 : vector<2x128xf32>
    %187 = math.exp %186 : vector<2x128xf32>
    %cst_103 = arith.constant 1.000000e+00 : f32
    %188 = vector.broadcast %cst_103 : f32 to vector<2x128xf32>
    %189 = arith.addf %188, %187 : vector<2x128xf32>
    %190 = arith.divf %188, %189 : vector<2x128xf32>
    %191 = vector.extract_strided_slice %184 {offsets = [0, 128], sizes = [2, 128], strides = [1, 1]} : vector<2x512xf32> to vector<2x128xf32>
    %192 = arith.negf %191 : vector<2x128xf32>
    %193 = math.exp %192 : vector<2x128xf32>
    %cst_104 = arith.constant 1.000000e+00 : f32
    %194 = vector.broadcast %cst_104 : f32 to vector<2x128xf32>
    %195 = arith.addf %194, %193 : vector<2x128xf32>
    %196 = arith.divf %194, %195 : vector<2x128xf32>
    %197 = vector.extract_strided_slice %184 {offsets = [0, 256], sizes = [2, 128], strides = [1, 1]} : vector<2x512xf32> to vector<2x128xf32>
    %198 = math.tanh %197 : vector<2x128xf32>
    %199 = vector.extract_strided_slice %184 {offsets = [0, 384], sizes = [2, 128], strides = [1, 1]} : vector<2x512xf32> to vector<2x128xf32>
    %200 = arith.negf %199 : vector<2x128xf32>
    %201 = math.exp %200 : vector<2x128xf32>
    %cst_105 = arith.constant 1.000000e+00 : f32
    %202 = vector.broadcast %cst_105 : f32 to vector<2x128xf32>
    %203 = arith.addf %202, %201 : vector<2x128xf32>
    %204 = arith.divf %202, %203 : vector<2x128xf32>
    %205 = arith.mulf %196, %143 : vector<2x128xf32>
    %206 = arith.mulf %190, %198 : vector<2x128xf32>
    %207 = arith.addf %205, %206 : vector<2x128xf32>
    %208 = math.tanh %207 : vector<2x128xf32>
    %209 = arith.mulf %204, %208 : vector<2x128xf32>
    %210 = tpu.concatenate %177, %209 in 1 : vector<2x128xf32>, vector<2x128xf32> -> vector<2x256xf32>
    %211 = arith.truncf %210 : vector<2x256xf32> to vector<2x256xbf16>
    %c0_106 = arith.constant 0 : index
    %c0_107 = arith.constant 0 : index
    %212 = vector.load %arg4[%c0_106, %c0_107] : memref<256x1024xbf16, #tpu.memory_space<vmem>>, vector<256x1024xbf16>
    %cst_108 = arith.constant dense<0.000000e+00> : vector<2x1024xf32>
    %213 = tpu.matmul %211, %212, %cst_108 {dimension_numbers = #tpu.dot_dimension_numbers<[1], [0], [0], [1], [0, 0, 1, 1], [], []>} : vector<2x256xbf16>, vector<256x1024xbf16>, vector<2x1024xf32> -> vector<2x1024xf32>
    %214 = vector.extract_strided_slice %76 {offsets = [4, 0], sizes = [2, 512], strides = [1, 1]} : vector<10x512xf32> to vector<2x512xf32>
    %215 = vector.extract_strided_slice %213 {offsets = [0, 0], sizes = [2, 512], strides = [1, 1]} : vector<2x1024xf32> to vector<2x512xf32>
    %216 = arith.addf %214, %215 : vector<2x512xf32>
    %217 = vector.extract_strided_slice %216 {offsets = [0, 0], sizes = [2, 128], strides = [1, 1]} : vector<2x512xf32> to vector<2x128xf32>
    %218 = arith.negf %217 : vector<2x128xf32>
    %219 = math.exp %218 : vector<2x128xf32>
    %cst_109 = arith.constant 1.000000e+00 : f32
    %220 = vector.broadcast %cst_109 : f32 to vector<2x128xf32>
    %221 = arith.addf %220, %219 : vector<2x128xf32>
    %222 = arith.divf %220, %221 : vector<2x128xf32>
    %223 = vector.extract_strided_slice %216 {offsets = [0, 128], sizes = [2, 128], strides = [1, 1]} : vector<2x512xf32> to vector<2x128xf32>
    %224 = arith.negf %223 : vector<2x128xf32>
    %225 = math.exp %224 : vector<2x128xf32>
    %cst_110 = arith.constant 1.000000e+00 : f32
    %226 = vector.broadcast %cst_110 : f32 to vector<2x128xf32>
    %227 = arith.addf %226, %225 : vector<2x128xf32>
    %228 = arith.divf %226, %227 : vector<2x128xf32>
    %229 = vector.extract_strided_slice %216 {offsets = [0, 256], sizes = [2, 128], strides = [1, 1]} : vector<2x512xf32> to vector<2x128xf32>
    %230 = math.tanh %229 : vector<2x128xf32>
    %231 = vector.extract_strided_slice %216 {offsets = [0, 384], sizes = [2, 128], strides = [1, 1]} : vector<2x512xf32> to vector<2x128xf32>
    %232 = arith.negf %231 : vector<2x128xf32>
    %233 = math.exp %232 : vector<2x128xf32>
    %cst_111 = arith.constant 1.000000e+00 : f32
    %234 = vector.broadcast %cst_111 : f32 to vector<2x128xf32>
    %235 = arith.addf %234, %233 : vector<2x128xf32>
    %236 = arith.divf %234, %235 : vector<2x128xf32>
    %237 = arith.mulf %228, %175 : vector<2x128xf32>
    %238 = arith.mulf %222, %230 : vector<2x128xf32>
    %239 = arith.addf %237, %238 : vector<2x128xf32>
    %240 = math.tanh %239 : vector<2x128xf32>
    %241 = arith.mulf %236, %240 : vector<2x128xf32>
    %242 = arith.truncf %241 : vector<2x128xf32> to vector<2x128xbf16>
    %c0_112 = arith.constant 0 : index
    %c512_113 = arith.constant 512 : index
    %243 = vector.load %arg3[%c0_112, %c512_113] : memref<128x1664xbf16, #tpu.memory_space<vmem>>, vector<128x512xbf16>
    %cst_114 = arith.constant dense<0.000000e+00> : vector<2x512xf32>
    %244 = tpu.matmul %242, %243, %cst_114 {dimension_numbers = #tpu.dot_dimension_numbers<[1], [0], [0], [1], [0, 0, 1, 1], [], []>} : vector<2x128xbf16>, vector<128x512xbf16>, vector<2x512xf32> -> vector<2x512xf32>
    %245 = vector.extract_strided_slice %213 {offsets = [0, 512], sizes = [2, 512], strides = [1, 1]} : vector<2x1024xf32> to vector<2x512xf32>
    %246 = arith.addf %244, %245 : vector<2x512xf32>
    %247 = vector.broadcast %77 : vector<1x512xf32> to vector<2x512xf32>
    %248 = arith.addf %246, %247 : vector<2x512xf32>
    %249 = vector.extract_strided_slice %248 {offsets = [0, 0], sizes = [2, 128], strides = [1, 1]} : vector<2x512xf32> to vector<2x128xf32>
    %250 = arith.negf %249 : vector<2x128xf32>
    %251 = math.exp %250 : vector<2x128xf32>
    %cst_115 = arith.constant 1.000000e+00 : f32
    %252 = vector.broadcast %cst_115 : f32 to vector<2x128xf32>
    %253 = arith.addf %252, %251 : vector<2x128xf32>
    %254 = arith.divf %252, %253 : vector<2x128xf32>
    %255 = vector.extract_strided_slice %248 {offsets = [0, 128], sizes = [2, 128], strides = [1, 1]} : vector<2x512xf32> to vector<2x128xf32>
    %256 = arith.negf %255 : vector<2x128xf32>
    %257 = math.exp %256 : vector<2x128xf32>
    %cst_116 = arith.constant 1.000000e+00 : f32
    %258 = vector.broadcast %cst_116 : f32 to vector<2x128xf32>
    %259 = arith.addf %258, %257 : vector<2x128xf32>
    %260 = arith.divf %258, %259 : vector<2x128xf32>
    %261 = vector.extract_strided_slice %248 {offsets = [0, 256], sizes = [2, 128], strides = [1, 1]} : vector<2x512xf32> to vector<2x128xf32>
    %262 = math.tanh %261 : vector<2x128xf32>
    %263 = vector.extract_strided_slice %248 {offsets = [0, 384], sizes = [2, 128], strides = [1, 1]} : vector<2x512xf32> to vector<2x128xf32>
    %264 = arith.negf %263 : vector<2x128xf32>
    %265 = math.exp %264 : vector<2x128xf32>
    %cst_117 = arith.constant 1.000000e+00 : f32
    %266 = vector.broadcast %cst_117 : f32 to vector<2x128xf32>
    %267 = arith.addf %266, %265 : vector<2x128xf32>
    %268 = arith.divf %266, %267 : vector<2x128xf32>
    %269 = arith.mulf %260, %207 : vector<2x128xf32>
    %270 = arith.mulf %254, %262 : vector<2x128xf32>
    %271 = arith.addf %269, %270 : vector<2x128xf32>
    %272 = math.tanh %271 : vector<2x128xf32>
    %273 = arith.mulf %268, %272 : vector<2x128xf32>
    %274 = tpu.concatenate %241, %273 in 1 : vector<2x128xf32>, vector<2x128xf32> -> vector<2x256xf32>
    %275 = arith.truncf %274 : vector<2x256xf32> to vector<2x256xbf16>
    %c0_118 = arith.constant 0 : index
    %c0_119 = arith.constant 0 : index
    %276 = vector.load %arg4[%c0_118, %c0_119] : memref<256x1024xbf16, #tpu.memory_space<vmem>>, vector<256x1024xbf16>
    %cst_120 = arith.constant dense<0.000000e+00> : vector<2x1024xf32>
    %277 = tpu.matmul %275, %276, %cst_120 {dimension_numbers = #tpu.dot_dimension_numbers<[1], [0], [0], [1], [0, 0, 1, 1], [], []>} : vector<2x256xbf16>, vector<256x1024xbf16>, vector<2x1024xf32> -> vector<2x1024xf32>
    %278 = vector.extract_strided_slice %76 {offsets = [6, 0], sizes = [2, 512], strides = [1, 1]} : vector<10x512xf32> to vector<2x512xf32>
    %279 = vector.extract_strided_slice %277 {offsets = [0, 0], sizes = [2, 512], strides = [1, 1]} : vector<2x1024xf32> to vector<2x512xf32>
    %280 = arith.addf %278, %279 : vector<2x512xf32>
    %281 = vector.extract_strided_slice %280 {offsets = [0, 0], sizes = [2, 128], strides = [1, 1]} : vector<2x512xf32> to vector<2x128xf32>
    %282 = arith.negf %281 : vector<2x128xf32>
    %283 = math.exp %282 : vector<2x128xf32>
    %cst_121 = arith.constant 1.000000e+00 : f32
    %284 = vector.broadcast %cst_121 : f32 to vector<2x128xf32>
    %285 = arith.addf %284, %283 : vector<2x128xf32>
    %286 = arith.divf %284, %285 : vector<2x128xf32>
    %287 = vector.extract_strided_slice %280 {offsets = [0, 128], sizes = [2, 128], strides = [1, 1]} : vector<2x512xf32> to vector<2x128xf32>
    %288 = arith.negf %287 : vector<2x128xf32>
    %289 = math.exp %288 : vector<2x128xf32>
    %cst_122 = arith.constant 1.000000e+00 : f32
    %290 = vector.broadcast %cst_122 : f32 to vector<2x128xf32>
    %291 = arith.addf %290, %289 : vector<2x128xf32>
    %292 = arith.divf %290, %291 : vector<2x128xf32>
    %293 = vector.extract_strided_slice %280 {offsets = [0, 256], sizes = [2, 128], strides = [1, 1]} : vector<2x512xf32> to vector<2x128xf32>
    %294 = math.tanh %293 : vector<2x128xf32>
    %295 = vector.extract_strided_slice %280 {offsets = [0, 384], sizes = [2, 128], strides = [1, 1]} : vector<2x512xf32> to vector<2x128xf32>
    %296 = arith.negf %295 : vector<2x128xf32>
    %297 = math.exp %296 : vector<2x128xf32>
    %cst_123 = arith.constant 1.000000e+00 : f32
    %298 = vector.broadcast %cst_123 : f32 to vector<2x128xf32>
    %299 = arith.addf %298, %297 : vector<2x128xf32>
    %300 = arith.divf %298, %299 : vector<2x128xf32>
    %301 = arith.mulf %292, %239 : vector<2x128xf32>
    %302 = arith.mulf %286, %294 : vector<2x128xf32>
    %303 = arith.addf %301, %302 : vector<2x128xf32>
    %304 = math.tanh %303 : vector<2x128xf32>
    %305 = arith.mulf %300, %304 : vector<2x128xf32>
    %306 = arith.truncf %305 : vector<2x128xf32> to vector<2x128xbf16>
    %c0_124 = arith.constant 0 : index
    %c512_125 = arith.constant 512 : index
    %307 = vector.load %arg3[%c0_124, %c512_125] : memref<128x1664xbf16, #tpu.memory_space<vmem>>, vector<128x512xbf16>
    %cst_126 = arith.constant dense<0.000000e+00> : vector<2x512xf32>
    %308 = tpu.matmul %306, %307, %cst_126 {dimension_numbers = #tpu.dot_dimension_numbers<[1], [0], [0], [1], [0, 0, 1, 1], [], []>} : vector<2x128xbf16>, vector<128x512xbf16>, vector<2x512xf32> -> vector<2x512xf32>
    %309 = vector.extract_strided_slice %277 {offsets = [0, 512], sizes = [2, 512], strides = [1, 1]} : vector<2x1024xf32> to vector<2x512xf32>
    %310 = arith.addf %308, %309 : vector<2x512xf32>
    %311 = vector.broadcast %77 : vector<1x512xf32> to vector<2x512xf32>
    %312 = arith.addf %310, %311 : vector<2x512xf32>
    %313 = vector.extract_strided_slice %312 {offsets = [0, 0], sizes = [2, 128], strides = [1, 1]} : vector<2x512xf32> to vector<2x128xf32>
    %314 = arith.negf %313 : vector<2x128xf32>
    %315 = math.exp %314 : vector<2x128xf32>
    %cst_127 = arith.constant 1.000000e+00 : f32
    %316 = vector.broadcast %cst_127 : f32 to vector<2x128xf32>
    %317 = arith.addf %316, %315 : vector<2x128xf32>
    %318 = arith.divf %316, %317 : vector<2x128xf32>
    %319 = vector.extract_strided_slice %312 {offsets = [0, 128], sizes = [2, 128], strides = [1, 1]} : vector<2x512xf32> to vector<2x128xf32>
    %320 = arith.negf %319 : vector<2x128xf32>
    %321 = math.exp %320 : vector<2x128xf32>
    %cst_128 = arith.constant 1.000000e+00 : f32
    %322 = vector.broadcast %cst_128 : f32 to vector<2x128xf32>
    %323 = arith.addf %322, %321 : vector<2x128xf32>
    %324 = arith.divf %322, %323 : vector<2x128xf32>
    %325 = vector.extract_strided_slice %312 {offsets = [0, 256], sizes = [2, 128], strides = [1, 1]} : vector<2x512xf32> to vector<2x128xf32>
    %326 = math.tanh %325 : vector<2x128xf32>
    %327 = vector.extract_strided_slice %312 {offsets = [0, 384], sizes = [2, 128], strides = [1, 1]} : vector<2x512xf32> to vector<2x128xf32>
    %328 = arith.negf %327 : vector<2x128xf32>
    %329 = math.exp %328 : vector<2x128xf32>
    %cst_129 = arith.constant 1.000000e+00 : f32
    %330 = vector.broadcast %cst_129 : f32 to vector<2x128xf32>
    %331 = arith.addf %330, %329 : vector<2x128xf32>
    %332 = arith.divf %330, %331 : vector<2x128xf32>
    %333 = arith.mulf %324, %271 : vector<2x128xf32>
    %334 = arith.mulf %318, %326 : vector<2x128xf32>
    %335 = arith.addf %333, %334 : vector<2x128xf32>
    %336 = math.tanh %335 : vector<2x128xf32>
    %337 = arith.mulf %332, %336 : vector<2x128xf32>
    %338 = tpu.concatenate %305, %337 in 1 : vector<2x128xf32>, vector<2x128xf32> -> vector<2x256xf32>
    %339 = arith.truncf %338 : vector<2x256xf32> to vector<2x256xbf16>
    %c0_130 = arith.constant 0 : index
    %c0_131 = arith.constant 0 : index
    %340 = vector.load %arg4[%c0_130, %c0_131] : memref<256x1024xbf16, #tpu.memory_space<vmem>>, vector<256x1024xbf16>
    %cst_132 = arith.constant dense<0.000000e+00> : vector<2x1024xf32>
    %341 = tpu.matmul %339, %340, %cst_132 {dimension_numbers = #tpu.dot_dimension_numbers<[1], [0], [0], [1], [0, 0, 1, 1], [], []>} : vector<2x256xbf16>, vector<256x1024xbf16>, vector<2x1024xf32> -> vector<2x1024xf32>
    %342 = vector.extract_strided_slice %76 {offsets = [8, 0], sizes = [2, 512], strides = [1, 1]} : vector<10x512xf32> to vector<2x512xf32>
    %343 = vector.extract_strided_slice %341 {offsets = [0, 0], sizes = [2, 512], strides = [1, 1]} : vector<2x1024xf32> to vector<2x512xf32>
    %344 = arith.addf %342, %343 : vector<2x512xf32>
    %345 = vector.extract_strided_slice %344 {offsets = [0, 0], sizes = [2, 128], strides = [1, 1]} : vector<2x512xf32> to vector<2x128xf32>
    %346 = arith.negf %345 : vector<2x128xf32>
    %347 = math.exp %346 : vector<2x128xf32>
    %cst_133 = arith.constant 1.000000e+00 : f32
    %348 = vector.broadcast %cst_133 : f32 to vector<2x128xf32>
    %349 = arith.addf %348, %347 : vector<2x128xf32>
    %350 = arith.divf %348, %349 : vector<2x128xf32>
    %351 = vector.extract_strided_slice %344 {offsets = [0, 128], sizes = [2, 128], strides = [1, 1]} : vector<2x512xf32> to vector<2x128xf32>
    %352 = arith.negf %351 : vector<2x128xf32>
    %353 = math.exp %352 : vector<2x128xf32>
    %cst_134 = arith.constant 1.000000e+00 : f32
    %354 = vector.broadcast %cst_134 : f32 to vector<2x128xf32>
    %355 = arith.addf %354, %353 : vector<2x128xf32>
    %356 = arith.divf %354, %355 : vector<2x128xf32>
    %357 = vector.extract_strided_slice %344 {offsets = [0, 256], sizes = [2, 128], strides = [1, 1]} : vector<2x512xf32> to vector<2x128xf32>
    %358 = math.tanh %357 : vector<2x128xf32>
    %359 = vector.extract_strided_slice %344 {offsets = [0, 384], sizes = [2, 128], strides = [1, 1]} : vector<2x512xf32> to vector<2x128xf32>
    %360 = arith.negf %359 : vector<2x128xf32>
    %361 = math.exp %360 : vector<2x128xf32>
    %cst_135 = arith.constant 1.000000e+00 : f32
    %362 = vector.broadcast %cst_135 : f32 to vector<2x128xf32>
    %363 = arith.addf %362, %361 : vector<2x128xf32>
    %364 = arith.divf %362, %363 : vector<2x128xf32>
    %365 = arith.mulf %356, %303 : vector<2x128xf32>
    %366 = arith.mulf %350, %358 : vector<2x128xf32>
    %367 = arith.addf %365, %366 : vector<2x128xf32>
    %368 = math.tanh %367 : vector<2x128xf32>
    %369 = arith.mulf %364, %368 : vector<2x128xf32>
    %370 = arith.truncf %369 : vector<2x128xf32> to vector<2x128xbf16>
    %c0_136 = arith.constant 0 : index
    %c512_137 = arith.constant 512 : index
    %371 = vector.load %arg3[%c0_136, %c512_137] : memref<128x1664xbf16, #tpu.memory_space<vmem>>, vector<128x512xbf16>
    %cst_138 = arith.constant dense<0.000000e+00> : vector<2x512xf32>
    %372 = tpu.matmul %370, %371, %cst_138 {dimension_numbers = #tpu.dot_dimension_numbers<[1], [0], [0], [1], [0, 0, 1, 1], [], []>} : vector<2x128xbf16>, vector<128x512xbf16>, vector<2x512xf32> -> vector<2x512xf32>
    %373 = vector.extract_strided_slice %341 {offsets = [0, 512], sizes = [2, 512], strides = [1, 1]} : vector<2x1024xf32> to vector<2x512xf32>
    %374 = arith.addf %372, %373 : vector<2x512xf32>
    %375 = vector.broadcast %77 : vector<1x512xf32> to vector<2x512xf32>
    %376 = arith.addf %374, %375 : vector<2x512xf32>
    %377 = vector.extract_strided_slice %376 {offsets = [0, 0], sizes = [2, 128], strides = [1, 1]} : vector<2x512xf32> to vector<2x128xf32>
    %378 = arith.negf %377 : vector<2x128xf32>
    %379 = math.exp %378 : vector<2x128xf32>
    %cst_139 = arith.constant 1.000000e+00 : f32
    %380 = vector.broadcast %cst_139 : f32 to vector<2x128xf32>
    %381 = arith.addf %380, %379 : vector<2x128xf32>
    %382 = arith.divf %380, %381 : vector<2x128xf32>
    %383 = vector.extract_strided_slice %376 {offsets = [0, 128], sizes = [2, 128], strides = [1, 1]} : vector<2x512xf32> to vector<2x128xf32>
    %384 = arith.negf %383 : vector<2x128xf32>
    %385 = math.exp %384 : vector<2x128xf32>
    %cst_140 = arith.constant 1.000000e+00 : f32
    %386 = vector.broadcast %cst_140 : f32 to vector<2x128xf32>
    %387 = arith.addf %386, %385 : vector<2x128xf32>
    %388 = arith.divf %386, %387 : vector<2x128xf32>
    %389 = vector.extract_strided_slice %376 {offsets = [0, 256], sizes = [2, 128], strides = [1, 1]} : vector<2x512xf32> to vector<2x128xf32>
    %390 = math.tanh %389 : vector<2x128xf32>
    %391 = vector.extract_strided_slice %376 {offsets = [0, 384], sizes = [2, 128], strides = [1, 1]} : vector<2x512xf32> to vector<2x128xf32>
    %392 = arith.negf %391 : vector<2x128xf32>
    %393 = math.exp %392 : vector<2x128xf32>
    %cst_141 = arith.constant 1.000000e+00 : f32
    %394 = vector.broadcast %cst_141 : f32 to vector<2x128xf32>
    %395 = arith.addf %394, %393 : vector<2x128xf32>
    %396 = arith.divf %394, %395 : vector<2x128xf32>
    %397 = arith.mulf %388, %335 : vector<2x128xf32>
    %398 = arith.mulf %382, %390 : vector<2x128xf32>
    %399 = arith.addf %397, %398 : vector<2x128xf32>
    %400 = math.tanh %399 : vector<2x128xf32>
    %401 = arith.mulf %396, %400 : vector<2x128xf32>
    %402 = arith.truncf %401 : vector<2x128xf32> to vector<2x128xbf16>
    %c0_142 = arith.constant 0 : index
    %c1024 = arith.constant 1024 : index
    %403 = vector.load %arg3[%c0_142, %c1024] : memref<128x1664xbf16, #tpu.memory_space<vmem>>, vector<128x512xbf16>
    %cst_143 = arith.constant dense<0.000000e+00> : vector<2x512xf32>
    %404 = tpu.matmul %402, %403, %cst_143 {dimension_numbers = #tpu.dot_dimension_numbers<[1], [0], [0], [1], [0, 0, 1, 1], [], []>} : vector<2x128xbf16>, vector<128x512xbf16>, vector<2x512xf32> -> vector<2x512xf32>
    %c2 = arith.constant 2 : index
    %c0_144 = arith.constant 0 : index
    %405 = vector.load %arg5[%c2, %c0_144] : memref<4x512xf32, #tpu.memory_space<vmem>>, vector<1x512xf32>
    %406 = vector.broadcast %405 : vector<1x512xf32> to vector<2x512xf32>
    %407 = arith.addf %404, %406 : vector<2x512xf32>
    %cst_145 = arith.constant 0.000000e+00 : f32
    %408 = vector.broadcast %cst_145 : f32 to vector<2x512xf32>
    %409 = arith.maximumf %407, %408 : vector<2x512xf32>
    %410 = arith.truncf %409 : vector<2x512xf32> to vector<2x512xbf16>
    %c384 = arith.constant 384 : index
    %c0_146 = arith.constant 0 : index
    %411 = vector.load %arg2[%c384, %c0_146] : memref<896x128xbf16, #tpu.memory_space<vmem>>, vector<512x128xbf16>
    %cst_147 = arith.constant dense<0.000000e+00> : vector<2x128xf32>
    %412 = tpu.matmul %410, %411, %cst_147 {dimension_numbers = #tpu.dot_dimension_numbers<[1], [0], [0], [1], [0, 0, 1, 1], [], []>} : vector<2x512xbf16>, vector<512x128xbf16>, vector<2x128xf32> -> vector<2x128xf32>
    %c3_148 = arith.constant 3 : index
    %c256_149 = arith.constant 256 : index
    %413 = vector.load %arg5[%c3_148, %c256_149] : memref<4x512xf32, #tpu.memory_space<vmem>>, vector<1x128xf32>
    %414 = vector.broadcast %413 : vector<1x128xf32> to vector<2x128xf32>
    %415 = arith.addf %412, %414 : vector<2x128xf32>
    %cst_150 = arith.constant 0.000000e+00 : f32
    %416 = vector.broadcast %cst_150 : f32 to vector<2x128xf32>
    %417 = arith.maximumf %415, %416 : vector<2x128xf32>
    %418 = arith.truncf %417 : vector<2x128xf32> to vector<2x128xbf16>
    %c0_151 = arith.constant 0 : index
    %c1536 = arith.constant 1536 : index
    %419 = vector.load %arg3[%c0_151, %c1536] : memref<128x1664xbf16, #tpu.memory_space<vmem>>, vector<128x128xbf16>
    %cst_152 = arith.constant dense<0.000000e+00> : vector<2x128xf32>
    %420 = tpu.matmul %418, %419, %cst_152 {dimension_numbers = #tpu.dot_dimension_numbers<[1], [0], [0], [1], [0, 0, 1, 1], [], []>} : vector<2x128xbf16>, vector<128x128xbf16>, vector<2x128xf32> -> vector<2x128xf32>
    %c3_153 = arith.constant 3 : index
    %c384_154 = arith.constant 384 : index
    %421 = vector.load %arg5[%c3_153, %c384_154] : memref<4x512xf32, #tpu.memory_space<vmem>>, vector<1x128xf32>
    %422 = vector.broadcast %421 : vector<1x128xf32> to vector<2x128xf32>
    %423 = arith.addf %420, %422 : vector<2x128xf32>
    %c0_155 = arith.constant 0 : index
    %c0_156 = arith.constant 0 : index
    %424 = vector.load %arg6[%c0_155, %c0_156] : memref<2x128xf32, #tpu.memory_space<vmem>>, vector<2x128xf32>
    tpu.vector_store %arg6[%c0_155, %c0_156], %423 {strides = array<i32>} : memref<2x128xf32, #tpu.memory_space<vmem>>, vector<2x128xf32>,
    return
  }
}

</mosaic_0001>

<llo_original>
// kernel: conv_lstm_forward.1
$region0: #{conv_lstm_forward.1}
  #allocation0 [shape = 'u32[]', space=smem, size = 0x4, offset = 0x4, fixed_abs, tag = 'smem constant byte address 0x4 - core index']
  #allocation1 [shape = 'u32[144,128]{1,0:T(1,128)}', space=vmem, size = 0x12000, scoped, tag = 'internal scratch']
  #allocation2 [shape = 'f32[32,24]{1,0:T(8,128)}', space=vmem, size = 0x4000, scoped, tag = 'scratch operand']
  #allocation3 [shape = 'f32[18,384]{1,0:T(8,128)}', space=vmem, size = 0x9000, scoped, tag = 'scratch operand']
  #allocation4 [shape = 'f32[36,128]{1,0:T(8,128)}', space=vmem, size = 0x5000, scoped, tag = 'scratch operand']
  #allocation5 [shape = 'f32[10,128]{1,0:T(8,128)}', space=vmem, size = 0x2000, scoped, tag = 'scratch operand']
  %s0 = inlined_call_operand.vmem [shape: f32[2,16,8], index: 0, kind: input, shape index: {}]
  %s1 = inlined_call_operand.vmem [shape: bf16[24,128], index: 1, kind: input, shape index: {}]
  %s2 = inlined_call_operand.hbm [shape: bf16[896,128], index: 2, kind: input, shape index: {}]
  %s3 = inlined_call_operand.hbm [shape: bf16[128,1664], index: 3, kind: input, shape index: {}]
  %s4 = inlined_call_operand.hbm [shape: bf16[256,1024], index: 4, kind: input, shape index: {}]
  %s5 = inlined_call_operand.vmem [shape: f32[4,512], index: 5, kind: input, shape index: {}]
  %s6 = inlined_call_operand.vmem [shape: f32[2,128], index: 6, kind: output, shape index: {}]
  %s7 = sld [smem:[#allocation0]]
  $region46: #{conv_lstm_forward.1} parent=0
    _
  %s9 = ssub.s32 1, %s7
  %s10 = scalar_select 0, %s9, %s7
  $region1: #{conv_lstm_forward.1} parent=0
    #allocation6 [shape = 'u8[229376]{0}', space=vmem, size = 0x38000, scoped, tag = 'input window, operand 2, single buffered']
    #allocation7 [shape = 's32[1]{0}', space=sflag, size = 0x4, scoped, tag = 'scoped memory for conv_lstm_forward.1']
    #allocation8 [shape = 'u8[425984]{0}', space=vmem, size = 0x68000, scoped, tag = 'input window, operand 3, single buffered']
    #allocation9 [shape = 's32[1]{0}', space=sflag, size = 0x4, scoped, tag = 'scoped memory for conv_lstm_forward.1']
    #allocation10 [shape = 'u8[524288]{0}', space=vmem, size = 0x80000, scoped, tag = 'input window, operand 4, single buffered']
    %11 = vsyncpa [#allocation7], 0
    %12 = vsyncpa [#allocation9], 0
    // Predicated region
    $region2: #{conv_lstm_forward.1} parent=1 // pred_check
      _
    $region3: #{conv_lstm_forward.1} parent=1 // pred_check_branch
      %14 = sbr.rel (0) target = $region5
    $region4: #{conv_lstm_forward.1} parent=1 // pred_region
      _
    $region5: #{conv_lstm_forward.1} parent=1 // pred_fallthru
      _
    // Predicated region
    $region6: #{conv_lstm_forward.1} parent=1 // pred_check
      _
    $region7: #{conv_lstm_forward.1} parent=1 // pred_check_branch
      %16 = sbr.rel (0) target = $region9
    $region8: #{conv_lstm_forward.1} parent=1 // pred_region
      _
    $region9: #{conv_lstm_forward.1} parent=1 // pred_fallthru
      _
    // Predicated region
    $region10: #{conv_lstm_forward.1} parent=1 // pred_check
      _
    $region11: #{conv_lstm_forward.1} parent=1 // pred_check_branch
      %18 = sbr.rel (0) target = $region13
    $region12: #{conv_lstm_forward.1} parent=1 // pred_region
      %s20 = ssub.s32 7168, 7168
      %21 = vsyncadd [#allocation7], %s20
      %s22 = sshll.u32 [#allocation6], 4
      %s23 = int_to_ptr.vmem [resolvable:$true] %s22
      %28 = dma.hbm_to_vmem [thread:$0]  %s2, 7168, %s23, [#allocation7], 64, 64, 4
    $region13: #{conv_lstm_forward.1} parent=1 // pred_fallthru
      _
    // Predicated region
    $region14: #{conv_lstm_forward.1} parent=1 // pred_check
      _
    $region15: #{conv_lstm_forward.1} parent=1 // pred_check_branch
      %30 = sbr.rel (0) target = $region17
    $region16: #{conv_lstm_forward.1} parent=1 // pred_region
      %s32 = ssub.s32 13312, 13312
      %33 = vsyncadd [#allocation9], %s32
      %s34 = sshll.u32 [#allocation8], 4
      %s35 = int_to_ptr.vmem [resolvable:$true] %s34
      %40 = dma.hbm_to_vmem [thread:$0]  %s3, 13312, %s35, [#allocation9], 832, 832, 52
    $region17: #{conv_lstm_forward.1} parent=1 // pred_fallthru
      _
    // Predicated region
    $region18: #{conv_lstm_forward.1} parent=1 // pred_check
      _
    $region19: #{conv_lstm_forward.1} parent=1 // pred_check_branch
      %42 = sbr.rel (0) target = $region21
    $region20: #{conv_lstm_forward.1} parent=1 // pred_region
      %s44 = ssub.s32 16384, 16384
      %45 = vsyncadd [#allocation9], %s44
      %s46 = sshll.u32 [#allocation10], 4
      %s47 = int_to_ptr.vmem [resolvable:$true] %s46
      %52 = dma.hbm_to_vmem [thread:$0]  %s4, 16384, %s47, [#allocation9], 512, 512, 32
    $region21: #{conv_lstm_forward.1} parent=1 // pred_fallthru
      _
    // Predicated region
    $region22: #{conv_lstm_forward.1} parent=1 // pred_check
      _
    $region23: #{conv_lstm_forward.1} parent=1 // pred_check_branch
      %54 = sbr.rel (0) target = $region25
    $region24: #{conv_lstm_forward.1} parent=1 // pred_region
      _
    $region25: #{conv_lstm_forward.1} parent=1 // pred_fallthru
      _
    // Predicated region
    $region26: #{conv_lstm_forward.1} parent=1 // pred_check
      _
    $region27: #{conv_lstm_forward.1} parent=1 // pred_check_branch
      %56 = sbr.rel (0) target = $region29
    $region28: #{conv_lstm_forward.1} parent=1 // pred_region
      %57 = dma.done [#allocation7], 7168
    $region29: #{conv_lstm_forward.1} parent=1 // pred_fallthru
      _
    // Predicated region
    $region30: #{conv_lstm_forward.1} parent=1 // pred_check
      _
    $region31: #{conv_lstm_forward.1} parent=1 // pred_check_branch
      %59 = sbr.rel (0) target = $region33
    $region32: #{conv_lstm_forward.1} parent=1 // pred_region
      %60 = dma.done [#allocation9], 13312
    $region33: #{conv_lstm_forward.1} parent=1 // pred_fallthru
      _
    // Predicated region
    $region34: #{conv_lstm_forward.1} parent=1 // pred_check
      _
    $region35: #{conv_lstm_forward.1} parent=1 // pred_check_branch
      %62 = sbr.rel (0) target = $region37
    $region36: #{conv_lstm_forward.1} parent=1 // pred_region
      %63 = dma.done [#allocation9], 16384
    $region37: #{conv_lstm_forward.1} parent=1 // pred_fallthru
      _
    %vm65 = vcmask 195584
    %66 = vst.msk [vmem:[#allocation2] sm:$0xff] %vm65, 0.0
    %67 = vst.msk [vmem:[#allocation2 + $0x8] sm:$0xff] %vm65, 0.0
    %68 = vst.msk [vmem:[#allocation2 + $0x10] sm:$0xff] %vm65, 0.0
    %69 = vst.msk [vmem:[#allocation2 + $0x18] sm:$0xff] %vm65, 0.0
    %70 = vst [vmem:[#allocation3] sm:$0xff] 0.0
    %71 = vst [vmem:[#allocation3 + $0x8] sm:$0xff] 0.0
    %72 = vst [vmem:[#allocation3 + $0x10] sm:$0xff] 0.0
    %73 = vst [vmem:[#allocation3 + $0x18] sm:$0xff] 0.0
    %74 = vst [vmem:[#allocation3 + $0x20] sm:$0xff] 0.0
    %75 = vst [vmem:[#allocation3 + $0x28] sm:$0xff] 0.0
    %76 = vst [vmem:[#allocation3 + $0x30] sm:$0x3] 0.0
    %77 = vst [vmem:[#allocation3 + $0x38] sm:$0x3] 0.0
    %78 = vst [vmem:[#allocation3 + $0x40] sm:$0x3] 0.0
    %79 = vst [vmem:[#allocation4] sm:$0xff] 0.0
    %80 = vst [vmem:[#allocation4 + $0x8] sm:$0xff] 0.0
    %81 = vst [vmem:[#allocation4 + $0x10] sm:$0xff] 0.0
    %82 = vst [vmem:[#allocation4 + $0x18] sm:$0xff] 0.0
    %83 = vst [vmem:[#allocation4 + $0x20] sm:$0xf] 0.0
    %v84 = vld [vmem:[%s0] sm:$0xff]
    %v85 = vld [vmem:[%s0 + $0x8] sm:$0xff]
    %vm86 = vcmask 64512
    %87 = vst.msk [vmem:[#allocation2 + $0x1] sm:$0xff] %vm86, %v84
    %vm88 = vcmask 63488
    %89 = vst.msk [vmem:[#allocation2 + $0x9] sm:$0x7f] %vm88, %v85
    %92 = vrot.lane.b32.xlu0 %v84, 8
    %v93 = vpop.permute.xlu0 %92
    %94 = vrot.lane.b32.xlu0 %v85, 8
    %v95 = vpop.permute.xlu0 %94
    %vm98 = vcmask 130112
    %99 = vst.msk [vmem:[#allocation2] sm:$0xff] %vm98, %v93
    %100 = vst.msk [vmem:[#allocation2 + $0x8] sm:$0xff] %vm98, %v95
    %101 = vrot.lane.b32.xlu0 %v84, 16
    %v102 = vpop.permute.xlu0 %101
    %103 = vrot.lane.b32.xlu0 %v85, 16
    %v104 = vpop.permute.xlu0 %103
    %vm107 = vcmask 195713
    %108 = vst.msk [vmem:[#allocation2 - $0x1] sm:$0xfe] %vm107, %v102
    %vm109 = vcmask 195712
    %110 = vst.msk [vmem:[#allocation2 + $0x7] sm:$0xff] %vm109, %v104
    %s111 = scalar_lea.vmem %s0, 16
    %v112 = vld [vmem:[%s111] sm:$0xff]
    %v113 = vld [vmem:[%s111 + $0x8] sm:$0xff]
    %114 = vst.msk [vmem:[#allocation2 + $0x11] sm:$0xff] %vm86, %v112
    %115 = vst.msk [vmem:[#allocation2 + $0x19] sm:$0x7f] %vm88, %v113
    %118 = vrot.lane.b32.xlu0 %v112, 8
    %v119 = vpop.permute.xlu0 %118
    %120 = vrot.lane.b32.xlu0 %v113, 8
    %v121 = vpop.permute.xlu0 %120
    %124 = vst.msk [vmem:[#allocation2 + $0x10] sm:$0xff] %vm98, %v119
    %125 = vst.msk [vmem:[#allocation2 + $0x18] sm:$0xff] %vm98, %v121
    %126 = vrot.lane.b32.xlu0 %v112, 16
    %v127 = vpop.permute.xlu0 %126
    %128 = vrot.lane.b32.xlu0 %v113, 16
    %v129 = vpop.permute.xlu0 %128
    %132 = vst.msk [vmem:[#allocation2 + $0xf] sm:$0xfe] %vm107, %v127
    %133 = vst.msk [vmem:[#allocation2 + $0x17] sm:$0xff] %vm109, %v129
    %v134 = vld [vmem:[#allocation2] sm:$0xff]
    %v135 = vld [vmem:[#allocation2 + $0x8] sm:$0xff]
    %v136 = vld [vmem:[#allocation2 + $0x10] sm:$0xff]
    %v137 = vld [vmem:[#allocation2 + $0x18] sm:$0xff]
    %v138 = vpack.c.bf16 %v135, %v134
    %v139 = vpack.c.bf16 %v137, %v136
    %v140 = vld [vmem:[%s1] sm:$0xf]
    %v141 = vld [vmem:[%s1 + $0x4] sm:$0xf]
    %v142 = vld [vmem:[%s1 + $0x8] sm:$0xf]
    %v143 = vld [vmem:[%s5 + $0x3] sm:$0x1]
    %v144 = vlaneseq
    %v145 = vshrl.u32 %v144, 7
    %v146 = vsub.s32 0, %v145
    %v147 = vrot.slane %v143, %v146
    %v151 = vunpack.c.l.b16 %v140
    %v152 = vunpack.c.l.b16 %v141
    %v153 = vunpack.c.l.b16 %v142
    %v154 = vpack.c.b16 %v152, %v151
    %v155 = vpack.c.b16 %v153, %v153
    %v158 = vsel %vm65, %v138, 0
    %v161 = vsel %vm65, %v139, 0
    %vm163 = vcmask 1043456
    %v165 = vsel %vm163, %v155, 0
    %167 = vmatprep.subr.bf16.mxu0 0
    %168 = vmatpush1.bf16.msra.mxu0 %v154
    %169 = vmatprep.subr.bf16.mxu0 0
    %170 = vmatpush1.bf16.msra.mxu0 %v165
    %171 = vmatprep.subr.bf16.mxu0 0
    %172 = vmatpush1.bf16.msra.mxu0 0
    %173 = vmatprep.subr.bf16.mxu0 0
    %174 = vmatpush1.bf16.msra.mxu0 0
    %175 = vmatprep.subr.bf16.mxu0 0
    %176 = vmatpush1.bf16.msra.mxu0 0
    %177 = vmatprep.subr.bf16.mxu0 0
    %178 = vmatpush1.bf16.msra.mxu0 0
    %179 = vmatprep.subr.bf16.mxu0 0
    %180 = vmatpush1.bf16.msra.mxu0 0
    %181 = vmatprep.subr.bf16.mxu0 0
    %182 = vmatpush1.bf16.msra.mxu0 0
    %183 = vmatprep.subr.bf16.mxu0 0
    %184 = vmatpush1.bf16.msra.mxu0 0
    %185 = vmatprep.subr.bf16.mxu0 0
    %186 = vmatpush1.bf16.msra.mxu0 0
    %187 = vmatprep.subr.bf16.mxu0 0
    %188 = vmatpush1.bf16.msra.mxu0 0
    %189 = vmatprep.subr.bf16.mxu0 0
    %190 = vmatpush1.bf16.msra.mxu0 0
    %191 = vmatprep.subr.bf16.mxu0 0
    %192 = vmatpush1.bf16.msra.mxu0 0
    %193 = vmatprep.subr.bf16.mxu0 0
    %194 = vmatpush1.bf16.msra.mxu0 0
    %195 = vmatprep.subr.bf16.mxu0 0
    %196 = vmatpush1.bf16.msra.mxu0 0
    %197 = vmatprep.subr.bf16.mxu0 0
    %198 = vmatpush1.bf16.msra.mxu0 0
    %199 = vmatprep.mubr.bf16.mxu0 0
    %200 = vmatmul.mubr.bf16.gmra.mrb[0].mxu0 %v158
    %v201 = vpop.f32.mrb[0].mxu0
    %v202 = vadd.f32 %v147, %v201
    %v203 = vpop.f32.mrb[0].mxu0
    %v204 = vpop.f32.mrb[0].mxu0
    %v205 = vadd.f32 %v147, %v204
    %v206 = vpop.f32.mrb[0].mxu0
    %207 = vmatprep.mubr.bf16.mxu0 0
    %208 = vmatmul.mubr.bf16.gmra.mrb[0].mxu0 %v161
    %v209 = vpop.f32.mrb[0].mxu0
    %v210 = vadd.f32 %v147, %v209
    %v211 = vpop.f32.mrb[0].mxu0
    %v212 = vpop.f32.mrb[0].mxu0
    %v213 = vadd.f32 %v147, %v212
    %v214 = vpop.f32.mrb[0].mxu0
    %215 = vdwg.mxu0
    %v216 = vmax.f32 %v202, 0.0
    %v217 = vmax.f32 %v205, 0.0
    %v218 = vmax.f32 %v210, 0.0
    %v219 = vmax.f32 %v213, 0.0
    %220 = vst [vmem:[#allocation4 + $0x1] sm:$0xff] %v216
    %221 = vst [vmem:[#allocation4 + $0x9] sm:$0xff] %v217
    %v222 = vld [vmem:[#allocation4] ss:$2 sm:$0xff]
    %s223 = scalar_lea.vmem [#allocation4], 16
    %v224 = vld [vmem:[%s223] ss:$2 sm:$0x1]
    %s225 = scalar_lea.vmem [#allocation4], 1
    %v226 = vld [vmem:[%s225] ss:$2 sm:$0xff]
    %s227 = scalar_lea.vmem [#allocation4], 17
    %v228 = vld [vmem:[%s227] ss:$2 sm:$0x1]
    %v229 = vmax.f32 %v222, %v226
    %v230 = vmax.f32 %v224, %v228
    %v232 = vrot.slane %v229, 7
    %234 = vst [vmem:[#allocation3] sm:$0xfe] %v232
    %235 = vst [vmem:[#allocation3 + $0x18] sm:$0x1] %v232
    %236 = vst [vmem:[#allocation3 + $0x8] sm:$0xff] %v229
    %237 = vst [vmem:[#allocation3 + $0x20] sm:$0x1] %v230
    %vm239 = vcmask 1046528
    %v240 = vrot.slane %v229, 1
    %v241 = vrot.slane %v230, 1
    %v242 = vsel %vm239, %v240, %v241
    %244 = vst [vmem:[#allocation3 + $0x10] sm:$0xff] %v242
    %245 = vst [vmem:[#allocation4 + $0x13] sm:$0xff] %v218
    %246 = vst [vmem:[#allocation4 + $0x1b] sm:$0xff] %v219
    %s247 = scalar_lea.vmem [#allocation4], 18
    %v248 = vld [vmem:[%s247] ss:$2 sm:$0xff]
    %s249 = scalar_lea.vmem [#allocation4], 34
    %v250 = vld [vmem:[%s249] ss:$2 sm:$0x1]
    %s251 = scalar_lea.vmem [#allocation4], 19
    %v252 = vld [vmem:[%s251] ss:$2 sm:$0xff]
    %s253 = scalar_lea.vmem [#allocation4], 35
    %v254 = vld [vmem:[%s253] ss:$2 sm:$0x1]
    %v255 = vmax.f32 %v248, %v252
    %v256 = vmax.f32 %v250, %v254
    %v258 = vrot.slane %v255, 6
    %260 = vst [vmem:[#allocation3 + $0x18] sm:$0xfc] %v258
    %261 = vst [vmem:[#allocation3 + $0x30] sm:$0x3] %v258
    %vm263 = vcmask 1040384
    %v264 = vrot.slane %v255, 7
    %v265 = vrot.slane %v256, 7
    %v266 = vsel %vm263, %v264, %v265
    %269 = vst [vmem:[#allocation3 + $0x20] sm:$0xfe] %v264
    %270 = vst [vmem:[#allocation3 + $0x38] sm:$0x3] %v266
    %271 = vst [vmem:[#allocation3 + $0x28] sm:$0xfe] %v255
    %272 = vst [vmem:[#allocation3 + $0x40] sm:$0x1] %v256
    %v273 = vld [vmem:[#allocation3] sm:$0xff]
    %v274 = vld [vmem:[#allocation3 + $0x8] sm:$0xff]
    %v275 = vld [vmem:[#allocation3 + $0x10] sm:$0xff]
    %v276 = vld [vmem:[#allocation3 + $0x18] sm:$0xff]
    %v277 = vld [vmem:[#allocation3 + $0x20] sm:$0xff]
    %v278 = vld [vmem:[#allocation3 + $0x28] sm:$0xff]
    %v279 = vld [vmem:[#allocation3 + $0x30] sm:$0x3]
    %v280 = vld [vmem:[#allocation3 + $0x38] sm:$0x3]
    %v281 = vld [vmem:[#allocation3 + $0x40] sm:$0x3]
    %v282 = vpack.c.bf16 %v276, %v273
    %v283 = vpack.c.bf16 %v277, %v274
    %v284 = vpack.c.bf16 %v278, %v275
    %v285 = vpack.c.bf16 %v279, %v279
    %v286 = vpack.c.bf16 %v280, %v280
    %v287 = vpack.c.bf16 %v281, %v281
    %v288 = vld [vmem:[#allocation6] sm:$0xf]
    %v289 = vld [vmem:[#allocation6 + $0x4] sm:$0xf]
    %v290 = vld [vmem:[#allocation6 + $0x8] sm:$0xf]
    %v291 = vld [vmem:[#allocation6 + $0xc] sm:$0xf]
    %v292 = vld [vmem:[#allocation6 + $0x10] sm:$0xf]
    %v293 = vld [vmem:[#allocation6 + $0x14] sm:$0xf]
    %v294 = vld [vmem:[#allocation6 + $0x18] sm:$0xf]
    %v295 = vld [vmem:[#allocation6 + $0x1c] sm:$0xf]
    %v296 = vld [vmem:[#allocation6 + $0x20] sm:$0xf]
    %v297 = vld [vmem:[#allocation6 + $0x24] sm:$0xf]
    %v298 = vld [vmem:[#allocation6 + $0x28] sm:$0xf]
    %v299 = vld [vmem:[#allocation6 + $0x2c] sm:$0xf]
    %v300 = vld [vmem:[#allocation6 + $0x30] sm:$0xf]
    %v301 = vld [vmem:[#allocation6 + $0x34] sm:$0xf]
    %v302 = vld [vmem:[#allocation6 + $0x38] sm:$0xf]
    %v303 = vld [vmem:[#allocation6 + $0x3c] sm:$0xf]
    %v304 = vld [vmem:[#allocation6 + $0x40] sm:$0xf]
    %v305 = vld [vmem:[#allocation6 + $0x44] sm:$0xf]
    %v306 = vld [vmem:[#allocation6 + $0x48] sm:$0xf]
    %v307 = vld [vmem:[#allocation6 + $0x4c] sm:$0xf]
    %v308 = vld [vmem:[#allocation6 + $0x50] sm:$0xf]
    %v309 = vld [vmem:[#allocation6 + $0x54] sm:$0xf]
    %v310 = vld [vmem:[#allocation6 + $0x58] sm:$0xf]
    %v311 = vld [vmem:[#allocation6 + $0x5c] sm:$0xf]
    %v312 = vld [vmem:[#allocation6 + $0x60] sm:$0xf]
    %v313 = vld [vmem:[#allocation6 + $0x64] sm:$0xf]
    %v314 = vld [vmem:[#allocation6 + $0x68] sm:$0xf]
    %v315 = vld [vmem:[#allocation6 + $0x6c] sm:$0xf]
    %v316 = vld [vmem:[#allocation6 + $0x70] sm:$0xf]
    %v317 = vld [vmem:[#allocation6 + $0x74] sm:$0xf]
    %v318 = vld [vmem:[#allocation6 + $0x78] sm:$0xf]
    %v319 = vld [vmem:[#allocation6 + $0x7c] sm:$0xf]
    %v320 = vld [vmem:[#allocation6 + $0x80] sm:$0xf]
    %v321 = vld [vmem:[#allocation6 + $0x84] sm:$0xf]
    %v322 = vld [vmem:[#allocation6 + $0x88] sm:$0xf]
    %v323 = vld [vmem:[#allocation6 + $0x8c] sm:$0xf]
    %v324 = vld [vmem:[#allocation6 + $0x90] sm:$0xf]
    %v325 = vld [vmem:[#allocation6 + $0x94] sm:$0xf]
    %v326 = vld [vmem:[#allocation6 + $0x98] sm:$0xf]
    %v327 = vld [vmem:[#allocation6 + $0x9c] sm:$0xf]
    %v328 = vld [vmem:[#allocation6 + $0xa0] sm:$0xf]
    %v329 = vld [vmem:[#allocation6 + $0xa4] sm:$0xf]
    %v330 = vld [vmem:[#allocation6 + $0xa8] sm:$0xf]
    %v331 = vld [vmem:[#allocation6 + $0xac] sm:$0xf]
    %v332 = vld [vmem:[#allocation6 + $0xb0] sm:$0xf]
    %v333 = vld [vmem:[#allocation6 + $0xb4] sm:$0xf]
    %v334 = vld [vmem:[#allocation6 + $0xb8] sm:$0xf]
    %v335 = vld [vmem:[#allocation6 + $0xbc] sm:$0xf]
    %v336 = vld [vmem:[%s5 + $0x7] sm:$0x1]
    %v337 = vlaneseq
    %v338 = vshrl.u32 %v337, 7
    %v339 = vsub.s32 0, %v338
    %v340 = vrot.slane %v336, %v339
    %v389 = vunpack.c.l.b16 %v288
    %v390 = vunpack.c.l.b16 %v289
    %v391 = vunpack.c.l.b16 %v290
    %v392 = vunpack.c.l.b16 %v291
    %v393 = vunpack.c.l.b16 %v292
    %v394 = vunpack.c.l.b16 %v293
    %v395 = vunpack.c.l.b16 %v294
    %v396 = vunpack.c.l.b16 %v295
    %v397 = vunpack.c.l.b16 %v296
    %v398 = vunpack.c.l.b16 %v297
    %v399 = vunpack.c.l.b16 %v298
    %v400 = vunpack.c.l.b16 %v299
    %v401 = vunpack.c.l.b16 %v300
    %v402 = vunpack.c.l.b16 %v301
    %v403 = vunpack.c.l.b16 %v302
    %v404 = vunpack.c.l.b16 %v303
    %v405 = vunpack.c.l.b16 %v304
    %v406 = vunpack.c.l.b16 %v305
    %v407 = vunpack.c.l.b16 %v306
    %v408 = vunpack.c.l.b16 %v307
    %v409 = vunpack.c.l.b16 %v308
    %v410 = vunpack.c.l.b16 %v309
    %v411 = vunpack.c.l.b16 %v310
    %v412 = vunpack.c.l.b16 %v311
    %v413 = vunpack.c.l.b16 %v312
    %v414 = vunpack.c.l.b16 %v313
    %v415 = vunpack.c.l.b16 %v314
    %v416 = vunpack.c.l.b16 %v315
    %v417 = vunpack.c.l.b16 %v316
    %v418 = vunpack.c.l.b16 %v317
    %v419 = vunpack.c.l.b16 %v318
    %v420 = vunpack.c.l.b16 %v319
    %v421 = vunpack.c.l.b16 %v320
    %v422 = vunpack.c.l.b16 %v321
    %v423 = vunpack.c.l.b16 %v322
    %v424 = vunpack.c.l.b16 %v323
    %v425 = vunpack.c.l.b16 %v324
    %v426 = vunpack.c.l.b16 %v325
    %v427 = vunpack.c.l.b16 %v326
    %v428 = vunpack.c.l.b16 %v327
    %v429 = vunpack.c.l.b16 %v328
    %v430 = vunpack.c.l.b16 %v329
    %v431 = vunpack.c.l.b16 %v330
    %v432 = vunpack.c.l.b16 %v331
    %v433 = vunpack.c.l.b16 %v332
    %v434 = vunpack.c.l.b16 %v333
    %v435 = vunpack.c.l.b16 %v334
    %v436 = vunpack.c.l.b16 %v335
    %v437 = vpack.c.b16 %v390, %v389
    %v438 = vpack.c.b16 %v392, %v391
    %v439 = vpack.c.b16 %v394, %v393
    %v440 = vpack.c.b16 %v396, %v395
    %v441 = vpack.c.b16 %v398, %v397
    %v442 = vpack.c.b16 %v400, %v399
    %v443 = vpack.c.b16 %v402, %v401
    %v444 = vpack.c.b16 %v404, %v403
    %v445 = vpack.c.b16 %v406, %v405
    %v446 = vpack.c.b16 %v408, %v407
    %v447 = vpack.c.b16 %v410, %v409
    %v448 = vpack.c.b16 %v412, %v411
    %v449 = vpack.c.b16 %v414, %v413
    %v450 = vpack.c.b16 %v416, %v415
    %v451 = vpack.c.b16 %v418, %v417
    %v452 = vpack.c.b16 %v420, %v419
    %v453 = vpack.c.b16 %v422, %v421
    %v454 = vpack.c.b16 %v424, %v423
    %v455 = vpack.c.b16 %v426, %v425
    %v456 = vpack.c.b16 %v428, %v427
    %v457 = vpack.c.b16 %v430, %v429
    %v458 = vpack.c.b16 %v432, %v431
    %v459 = vpack.c.b16 %v434, %v433
    %v460 = vpack.c.b16 %v436, %v435
    %485 = vmatprep.subr.bf16.mxu0 0
    %486 = vmatpush1.bf16.msra.mxu0 %v437
    %487 = vmatprep.subr.bf16.mxu0 0
    %488 = vmatpush1.bf16.msra.mxu0 %v438
    %489 = vmatprep.subr.bf16.mxu0 0
    %490 = vmatpush1.bf16.msra.mxu0 %v439
    %491 = vmatprep.subr.bf16.mxu0 0
    %492 = vmatpush1.bf16.msra.mxu0 %v440
    %493 = vmatprep.subr.bf16.mxu0 0
    %494 = vmatpush1.bf16.msra.mxu0 %v441
    %495 = vmatprep.subr.bf16.mxu0 0
    %496 = vmatpush1.bf16.msra.mxu0 %v442
    %497 = vmatprep.subr.bf16.mxu0 0
    %498 = vmatpush1.bf16.msra.mxu0 %v443
    %499 = vmatprep.subr.bf16.mxu0 0
    %500 = vmatpush1.bf16.msra.mxu0 %v444
    %501 = vmatprep.subr.bf16.mxu0 0
    %502 = vmatpush1.bf16.msra.mxu0 %v445
    %503 = vmatprep.subr.bf16.mxu0 0
    %504 = vmatpush1.bf16.msra.mxu0 %v446
    %505 = vmatprep.subr.bf16.mxu0 0
    %506 = vmatpush1.bf16.msra.mxu0 %v447
    %507 = vmatprep.subr.bf16.mxu0 0
    %508 = vmatpush1.bf16.msra.mxu0 %v448
    %509 = vmatprep.subr.bf16.mxu0 0
    %510 = vmatpush1.bf16.msra.mxu0 %v449
    %511 = vmatprep.subr.bf16.mxu0 0
    %512 = vmatpush1.bf16.msra.mxu0 %v450
    %513 = vmatprep.subr.bf16.mxu0 0
    %514 = vmatpush1.bf16.msra.mxu0 %v451
    %515 = vmatprep.subr.bf16.mxu0 0
    %516 = vmatpush1.bf16.msra.mxu0 %v452
    %517 = vmatprep.mubr.bf16.mxu0 %v283
    %518 = vmatmul.mubr.bf16.gmra.mrb[0].mxu0 %v282
    %v519 = vpop.f32.mrb[0].mxu0
    %v520 = vadd.f32 %v340, %v519
    %v521 = vpop.f32.mrb[0].mxu0
    %v522 = vpop.f32.mrb[0].mxu0
    %v523 = vadd.f32 %v340, %v522
    %v524 = vpop.f32.mrb[0].mxu0
    %525 = vmatprep.mubr.bf16.mxu0 %v286
    %526 = vmatmul.mubr.bf16.gmra.mrb[0].mxu0 %v285
    %v527 = vpop.f32.mrb[0].mxu0
    %v528 = vadd.f32 %v340, %v527
    %v529 = vpop.f32.mrb[0].mxu0
    %v530 = vpop.f32.mrb[0].mxu0
    %v531 = vpop.f32.mrb[0].mxu0
    %532 = vdwg.mxu0
    %533 = vmatprep.subr.bf16.mxu0 0
    %534 = vmatpush1.bf16.msra.mxu0 %v453
    %535 = vmatprep.subr.bf16.mxu0 0
    %536 = vmatpush1.bf16.msra.mxu0 %v454
    %537 = vmatprep.subr.bf16.mxu0 0
    %538 = vmatpush1.bf16.msra.mxu0 %v455
    %539 = vmatprep.subr.bf16.mxu0 0
    %540 = vmatpush1.bf16.msra.mxu0 %v456
    %541 = vmatprep.subr.bf16.mxu0 0
    %542 = vmatpush1.bf16.msra.mxu0 %v457
    %543 = vmatprep.subr.bf16.mxu0 0
    %544 = vmatpush1.bf16.msra.mxu0 %v458
    %545 = vmatprep.subr.bf16.mxu0 0
    %546 = vmatpush1.bf16.msra.mxu0 %v459
    %547 = vmatprep.subr.bf16.mxu0 0
    %548 = vmatpush1.bf16.msra.mxu0 %v460
    %549 = vmatprep.subr.bf16.mxu0 0
    %550 = vmatpush1.bf16.msra.mxu0 0
    %551 = vmatprep.subr.bf16.mxu0 0
    %552 = vmatpush1.bf16.msra.mxu0 0
    %553 = vmatprep.subr.bf16.mxu0 0
    %554 = vmatpush1.bf16.msra.mxu0 0
    %555 = vmatprep.subr.bf16.mxu0 0
    %556 = vmatpush1.bf16.msra.mxu0 0
    %557 = vmatprep.subr.bf16.mxu0 0
    %558 = vmatpush1.bf16.msra.mxu0 0
    %559 = vmatprep.subr.bf16.mxu0 0
    %560 = vmatpush1.bf16.msra.mxu0 0
    %561 = vmatprep.subr.bf16.mxu0 0
    %562 = vmatpush1.bf16.msra.mxu0 0
    %563 = vmatprep.subr.bf16.mxu0 0
    %564 = vmatpush1.bf16.msra.mxu0 0
    %565 = vmatprep.mubr.bf16.mxu0 0
    %566 = vmatmul.mubr.bf16.gmra.mrb[0].mxu0 %v284
    %v567 = vpop.f32.mrb[0].mxu0
    %v568 = vadd.f32 %v520, %v567
    %v569 = vpop.f32.mrb[0].mxu0
    %v570 = vpop.f32.mrb[0].mxu0
    %v571 = vadd.f32 %v523, %v570
    %v572 = vpop.f32.mrb[0].mxu0
    %573 = vmatprep.mubr.bf16.mxu0 0
    %574 = vmatmul.mubr.bf16.gmra.mrb[0].mxu0 %v287
    %v575 = vpop.f32.mrb[0].mxu0
    %v576 = vadd.f32 %v528, %v575
    %v577 = vpop.f32.mrb[0].mxu0
    %v578 = vpop.f32.mrb[0].mxu0
    %v579 = vpop.f32.mrb[0].mxu0
    %580 = vdwg.mxu0
    %v581 = vmax.f32 %v568, 0.0
    %v582 = vmax.f32 %v571, 0.0
    %v583 = vmax.f32 %v576, 0.0
    %584 = vst [vmem:[#allocation4 + $0x1] sm:$0xff] %v581
    %585 = vst [vmem:[#allocation4 + $0x9] sm:$0x1] %v582
    %v586 = vld [vmem:[#allocation4] ss:$2 sm:$0x1f]
    %v587 = vld [vmem:[%s225] ss:$2 sm:$0x1f]
    %v588 = vmax.f32 %v586, %v587
    %589 = vst [vmem:[#allocation5] ss:$2 sm:$0x1f] %v588
    %590 = vst [vmem:[#allocation4 + $0x12] sm:$0xfe] %v582
    %591 = vst [vmem:[#allocation4 + $0x1a] sm:$0x3] %v583
    %s592 = scalar_lea.vmem [#allocation4], 18
    %v593 = vld [vmem:[%s592] ss:$2 sm:$0x1f]
    %v594 = vld [vmem:[%s251] ss:$2 sm:$0x1f]
    %v595 = vmax.f32 %v593, %v594
    %s596 = scalar_lea.vmem [#allocation5], 1
    %597 = vst [vmem:[%s596] ss:$2 sm:$0x1f] %v595
    %v598 = vld [vmem:[#allocation5] sm:$0xff]
    %v599 = vld [vmem:[#allocation5 + $0x8] sm:$0x3]
    %v600 = vpack.c.bf16 %v599, %v598
    %v601 = vld [vmem:[#allocation8] sm:$0xff]
    %v602 = vld [vmem:[#allocation8 + $0x8] sm:$0xff]
    %v603 = vld [vmem:[#allocation8 + $0x34] sm:$0xff]
    %v604 = vld [vmem:[#allocation8 + $0x3c] sm:$0xff]
    %v605 = vld [vmem:[#allocation8 + $0x68] sm:$0xff]
    %v606 = vld [vmem:[#allocation8 + $0x70] sm:$0xff]
    %v607 = vld [vmem:[#allocation8 + $0x9c] sm:$0xff]
    %v608 = vld [vmem:[#allocation8 + $0xa4] sm:$0xff]
    %v609 = vld [vmem:[#allocation8 + $0xd0] sm:$0xff]
    %v610 = vld [vmem:[#allocation8 + $0xd8] sm:$0xff]
    %v611 = vld [vmem:[#allocation8 + $0x104] sm:$0xff]
    %v612 = vld [vmem:[#allocation8 + $0x10c] sm:$0xff]
    %v613 = vld [vmem:[#allocation8 + $0x138] sm:$0xff]
    %v614 = vld [vmem:[#allocation8 + $0x140] sm:$0xff]
    %v615 = vld [vmem:[#allocation8 + $0x16c] sm:$0xff]
    %v616 = vld [vmem:[#allocation8 + $0x174] sm:$0xff]
    %v617 = vld [vmem:[#allocation8 + $0x1a0] sm:$0xff]
    %v618 = vld [vmem:[#allocation8 + $0x1a8] sm:$0xff]
    %v619 = vld [vmem:[#allocation8 + $0x1d4] sm:$0xff]
    %v620 = vld [vmem:[#allocation8 + $0x1dc] sm:$0xff]
    %v621 = vld [vmem:[#allocation8 + $0x208] sm:$0xff]
    %v622 = vld [vmem:[#allocation8 + $0x210] sm:$0xff]
    %v623 = vld [vmem:[#allocation8 + $0x23c] sm:$0xff]
    %v624 = vld [vmem:[#allocation8 + $0x244] sm:$0xff]
    %v625 = vld [vmem:[#allocation8 + $0x270] sm:$0xff]
    %v626 = vld [vmem:[#allocation8 + $0x278] sm:$0xff]
    %v627 = vld [vmem:[#allocation8 + $0x2a4] sm:$0xff]
    %v628 = vld [vmem:[#allocation8 + $0x2ac] sm:$0xff]
    %v629 = vld [vmem:[#allocation8 + $0x2d8] sm:$0xff]
    %v630 = vld [vmem:[#allocation8 + $0x2e0] sm:$0xff]
    %v631 = vld [vmem:[#allocation8 + $0x30c] sm:$0xff]
    %v632 = vld [vmem:[#allocation8 + $0x314] sm:$0xff]
    %v633 = vld [vmem:[%s5] ss:$4 sm:$0xf]
    %v635 = vlaneseq
    %v636 = vshrl.u32 %v635, 7
    %v637 = vsub.s32 0, %v636
    %v638 = vrot.slane %v633, %v637
    %v639 = vlaneseq
    %v640 = vshrl.u32 %v639, 7
    %v641 = vsub.s32 1, %v640
    %v642 = vrot.slane %v633, %v641
    %v643 = vlaneseq
    %v644 = vshrl.u32 %v643, 7
    %v645 = vsub.s32 2, %v644
    %v646 = vrot.slane %v633, %v645
    %v647 = vlaneseq
    %v648 = vshrl.u32 %v647, 7
    %v649 = vsub.s32 3, %v648
    %v650 = vrot.slane %v633, %v649
    %v687 = vunpack.c.l.b16 %v601
    %v688 = vunpack.c.h.b16 %v601
    %v689 = vunpack.c.l.b16 %v602
    %v690 = vunpack.c.h.b16 %v602
    %v691 = vunpack.c.l.b16 %v603
    %v692 = vunpack.c.h.b16 %v603
    %v693 = vunpack.c.l.b16 %v604
    %v694 = vunpack.c.h.b16 %v604
    %v695 = vunpack.c.l.b16 %v605
    %v696 = vunpack.c.h.b16 %v605
    %v697 = vunpack.c.l.b16 %v606
    %v698 = vunpack.c.h.b16 %v606
    %v699 = vunpack.c.l.b16 %v607
    %v700 = vunpack.c.h.b16 %v607
    %v701 = vunpack.c.l.b16 %v608
    %v702 = vunpack.c.h.b16 %v608
    %v703 = vunpack.c.l.b16 %v609
    %v704 = vunpack.c.h.b16 %v609
    %v705 = vunpack.c.l.b16 %v610
    %v706 = vunpack.c.h.b16 %v610
    %v707 = vunpack.c.l.b16 %v611
    %v708 = vunpack.c.h.b16 %v611
    %v709 = vunpack.c.l.b16 %v612
    %v710 = vunpack.c.h.b16 %v612
    %v711 = vunpack.c.l.b16 %v613
    %v712 = vunpack.c.h.b16 %v613
    %v713 = vunpack.c.l.b16 %v614
    %v714 = vunpack.c.h.b16 %v614
    %v715 = vunpack.c.l.b16 %v615
    %v716 = vunpack.c.h.b16 %v615
    %v717 = vunpack.c.l.b16 %v616
    %v718 = vunpack.c.h.b16 %v616
    %v719 = vunpack.c.l.b16 %v617
    %v720 = vunpack.c.h.b16 %v617
    %v721 = vunpack.c.l.b16 %v618
    %v722 = vunpack.c.h.b16 %v618
    %v723 = vunpack.c.l.b16 %v619
    %v724 = vunpack.c.h.b16 %v619
    %v725 = vunpack.c.l.b16 %v620
    %v726 = vunpack.c.h.b16 %v620
    %v727 = vunpack.c.l.b16 %v621
    %v728 = vunpack.c.h.b16 %v621
    %v729 = vunpack.c.l.b16 %v622
    %v730 = vunpack.c.h.b16 %v622
    %v731 = vunpack.c.l.b16 %v623
    %v732 = vunpack.c.h.b16 %v623
    %v733 = vunpack.c.l.b16 %v624
    %v734 = vunpack.c.h.b16 %v624
    %v735 = vunpack.c.l.b16 %v625
    %v736 = vunpack.c.h.b16 %v625
    %v737 = vunpack.c.l.b16 %v626
    %v738 = vunpack.c.h.b16 %v626
    %v739 = vunpack.c.l.b16 %v627
    %v740 = vunpack.c.h.b16 %v627
    %v741 = vunpack.c.l.b16 %v628
    %v742 = vunpack.c.h.b16 %v628
    %v743 = vunpack.c.l.b16 %v629
    %v744 = vunpack.c.h.b16 %v629
    %v745 = vunpack.c.l.b16 %v630
    %v746 = vunpack.c.h.b16 %v630
    %v747 = vunpack.c.l.b16 %v631
    %v748 = vunpack.c.h.b16 %v631
    %v749 = vunpack.c.l.b16 %v632
    %v750 = vunpack.c.h.b16 %v632
    %v751 = vpack.c.b16 %v691, %v687
    %v752 = vpack.c.b16 %v692, %v688
    %v753 = vpack.c.b16 %v693, %v689
    %v754 = vpack.c.b16 %v694, %v690
    %v755 = vpack.c.b16 %v699, %v695
    %v756 = vpack.c.b16 %v700, %v696
    %v757 = vpack.c.b16 %v701, %v697
    %v758 = vpack.c.b16 %v702, %v698
    %v759 = vpack.c.b16 %v707, %v703
    %v760 = vpack.c.b16 %v708, %v704
    %v761 = vpack.c.b16 %v709, %v705
    %v762 = vpack.c.b16 %v710, %v706
    %v763 = vpack.c.b16 %v715, %v711
    %v764 = vpack.c.b16 %v716, %v712
    %v765 = vpack.c.b16 %v717, %v713
    %v766 = vpack.c.b16 %v718, %v714
    %v767 = vpack.c.b16 %v723, %v719
    %v768 = vpack.c.b16 %v724, %v720
    %v769 = vpack.c.b16 %v725, %v721
    %v770 = vpack.c.b16 %v726, %v722
    %v771 = vpack.c.b16 %v731, %v727
    %v772 = vpack.c.b16 %v732, %v728
    %v773 = vpack.c.b16 %v733, %v729
    %v774 = vpack.c.b16 %v734, %v730
    %v775 = vpack.c.b16 %v739, %v735
    %v776 = vpack.c.b16 %v740, %v736
    %v777 = vpack.c.b16 %v741, %v737
    %v778 = vpack.c.b16 %v742, %v738
    %v779 = vpack.c.b16 %v747, %v743
    %v780 = vpack.c.b16 %v748, %v744
    %v781 = vpack.c.b16 %v749, %v745
    %v782 = vpack.c.b16 %v750, %v746
    %815 = vmatprep.subr.bf16.mxu0 %v752
    %816 = vmatpush1.bf16.msra.mxu0 %v751
    %817 = vmatprep.subr.bf16.mxu0 %v756
    %818 = vmatpush1.bf16.msra.mxu0 %v755
    %819 = vmatprep.subr.bf16.mxu0 %v760
    %820 = vmatpush1.bf16.msra.mxu0 %v759
    %821 = vmatprep.subr.bf16.mxu0 %v764
    %822 = vmatpush1.bf16.msra.mxu0 %v763
    %823 = vmatprep.subr.bf16.mxu0 %v768
    %824 = vmatpush1.bf16.msra.mxu0 %v767
    %825 = vmatprep.subr.bf16.mxu0 %v772
    %826 = vmatpush1.bf16.msra.mxu0 %v771
    %827 = vmatprep.subr.bf16.mxu0 %v776
    %828 = vmatpush1.bf16.msra.mxu0 %v775
    %829 = vmatprep.subr.bf16.mxu0 %v780
    %830 = vmatpush1.bf16.msra.mxu0 %v779
    %831 = vmatprep.subr.bf16.mxu0 0
    %832 = vmatpush1.bf16.msra.mxu0 0
    %833 = vmatprep.subr.bf16.mxu0 0
    %834 = vmatpush1.bf16.msra.mxu0 0
    %835 = vmatprep.subr.bf16.mxu0 0
    %836 = vmatpush1.bf16.msra.mxu0 0
    %837 = vmatprep.subr.bf16.mxu0 0
    %838 = vmatpush1.bf16.msra.mxu0 0
    %839 = vmatprep.subr.bf16.mxu0 0
    %840 = vmatpush1.bf16.msra.mxu0 0
    %841 = vmatprep.subr.bf16.mxu0 0
    %842 = vmatpush1.bf16.msra.mxu0 0
    %843 = vmatprep.subr.bf16.mxu0 0
    %844 = vmatpush1.bf16.msra.mxu0 0
    %845 = vmatprep.subr.bf16.mxu0 0
    %846 = vmatpush1.bf16.msra.mxu0 0
    %847 = vmatprep.mubr.bf16.mxu0 0
    %848 = vmatmul.mubr.bf16.gmra.mrb[0].mxu0 %v600
    %v849 = vpop.f32.mrb[0].mxu0
    %v850 = vadd.f32 %v638, %v849
    %v851 = vpop.f32.mrb[0].mxu0
    %v852 = vadd.f32 %v642, %v851
    %v853 = vpop.f32.mrb[0].mxu0
    %v854 = vadd.f32 %v638, %v853
    %v855 = vpop.f32.mrb[0].mxu0
    %v856 = vadd.f32 %v642, %v855
    %857 = vdwg.mxu0
    %858 = vmatprep.subr.bf16.mxu0 %v754
    %859 = vmatpush1.bf16.msra.mxu0 %v753
    %860 = vmatprep.subr.bf16.mxu0 %v758
    %861 = vmatpush1.bf16.msra.mxu0 %v757
    %862 = vmatprep.subr.bf16.mxu0 %v762
    %863 = vmatpush1.bf16.msra.mxu0 %v761
    %864 = vmatprep.subr.bf16.mxu0 %v766
    %865 = vmatpush1.bf16.msra.mxu0 %v765
    %866 = vmatprep.subr.bf16.mxu0 %v770
    %867 = vmatpush1.bf16.msra.mxu0 %v769
    %868 = vmatprep.subr.bf16.mxu0 %v774
    %869 = vmatpush1.bf16.msra.mxu0 %v773
    %870 = vmatprep.subr.bf16.mxu0 %v778
    %871 = vmatpush1.bf16.msra.mxu0 %v777
    %872 = vmatprep.subr.bf16.mxu0 %v782
    %873 = vmatpush1.bf16.msra.mxu0 %v781
    %874 = vmatprep.subr.bf16.mxu0 0
    %875 = vmatpush1.bf16.msra.mxu0 0
    %876 = vmatprep.subr.bf16.mxu0 0
    %877 = vmatpush1.bf16.msra.mxu0 0
    %878 = vmatprep.subr.bf16.mxu0 0
    %879 = vmatpush1.bf16.msra.mxu0 0
    %880 = vmatprep.subr.bf16.mxu0 0
    %881 = vmatpush1.bf16.msra.mxu0 0
    %882 = vmatprep.subr.bf16.mxu0 0
    %883 = vmatpush1.bf16.msra.mxu0 0
    %884 = vmatprep.subr.bf16.mxu0 0
    %885 = vmatpush1.bf16.msra.mxu0 0
    %886 = vmatprep.subr.bf16.mxu0 0
    %887 = vmatpush1.bf16.msra.mxu0 0
    %888 = vmatprep.subr.bf16.mxu0 0
    %889 = vmatpush1.bf16.msra.mxu0 0
    %890 = vmatprep.mubr.bf16.mxu0 0
    %891 = vmatmul.mubr.bf16.gmra.mrb[0].mxu0 %v600
    %v892 = vpop.f32.mrb[0].mxu0
    %v893 = vadd.f32 %v646, %v892
    %v894 = vpop.f32.mrb[0].mxu0
    %v895 = vadd.f32 %v650, %v894
    %v896 = vpop.f32.mrb[0].mxu0
    %v897 = vadd.f32 %v646, %v896
    %v898 = vpop.f32.mrb[0].mxu0
    %v899 = vadd.f32 %v650, %v898
    %900 = vdwg.mxu0
    %s901 = scalar_lea.vmem %s5, 1
    %v902 = vld [vmem:[%s901] ss:$4 sm:$0xf]
    %v903 = vpack.c.bf16 0.0, 0.0
    %v904 = vld [vmem:[#allocation10] sm:$0xff]
    %v905 = vld [vmem:[#allocation10 + $0x8] sm:$0xff]
    %v906 = vld [vmem:[#allocation10 + $0x10] sm:$0xff]
    %v907 = vld [vmem:[#allocation10 + $0x18] sm:$0xff]
    %v908 = vld [vmem:[#allocation10 + $0x20] sm:$0xff]
    %v909 = vld [vmem:[#allocation10 + $0x28] sm:$0xff]
    %v910 = vld [vmem:[#allocation10 + $0x30] sm:$0xff]
    %v911 = vld [vmem:[#allocation10 + $0x38] sm:$0xff]
    %v912 = vld [vmem:[#allocation10 + $0x40] sm:$0xff]
    %v913 = vld [vmem:[#allocation10 + $0x48] sm:$0xff]
    %v914 = vld [vmem:[#allocation10 + $0x50] sm:$0xff]
    %v915 = vld [vmem:[#allocation10 + $0x58] sm:$0xff]
    %v916 = vld [vmem:[#allocation10 + $0x60] sm:$0xff]
    %v917 = vld [vmem:[#allocation10 + $0x68] sm:$0xff]
    %v918 = vld [vmem:[#allocation10 + $0x70] sm:$0xff]
    %v919 = vld [vmem:[#allocation10 + $0x78] sm:$0xff]
    %v920 = vld [vmem:[#allocation10 + $0x80] sm:$0xff]
    %v921 = vld [vmem:[#allocation10 + $0x88] sm:$0xff]
    %v922 = vld [vmem:[#allocation10 + $0x90] sm:$0xff]
    %v923 = vld [vmem:[#allocation10 + $0x98] sm:$0xff]
    %v924 = vld [vmem:[#allocation10 + $0xa0] sm:$0xff]
    %v925 = vld [vmem:[#allocation10 + $0xa8] sm:$0xff]
    %v926 = vld [vmem:[#allocation10 + $0xb0] sm:$0xff]
    %v927 = vld [vmem:[#allocation10 + $0xb8] sm:$0xff]
    %v928 = vld [vmem:[#allocation10 + $0xc0] sm:$0xff]
    %v929 = vld [vmem:[#allocation10 + $0xc8] sm:$0xff]
    %v930 = vld [vmem:[#allocation10 + $0xd0] sm:$0xff]
    %v931 = vld [vmem:[#allocation10 + $0xd8] sm:$0xff]
    %v932 = vld [vmem:[#allocation10 + $0xe0] sm:$0xff]
    %v933 = vld [vmem:[#allocation10 + $0xe8] sm:$0xff]
    %v934 = vld [vmem:[#allocation10 + $0xf0] sm:$0xff]
    %v935 = vld [vmem:[#allocation10 + $0xf8] sm:$0xff]
    %v936 = vld [vmem:[#allocation10 + $0x100] sm:$0xff]
    %v937 = vld [vmem:[#allocation10 + $0x108] sm:$0xff]
    %v938 = vld [vmem:[#allocation10 + $0x110] sm:$0xff]
    %v939 = vld [vmem:[#allocation10 + $0x118] sm:$0xff]
    %v940 = vld [vmem:[#allocation10 + $0x120] sm:$0xff]
    %v941 = vld [vmem:[#allocation10 + $0x128] sm:$0xff]
    %v942 = vld [vmem:[#allocation10 + $0x130] sm:$0xff]
    %v943 = vld [vmem:[#allocation10 + $0x138] sm:$0xff]
    %v944 = vld [vmem:[#allocation10 + $0x140] sm:$0xff]
    %v945 = vld [vmem:[#allocation10 + $0x148] sm:$0xff]
    %v946 = vld [vmem:[#allocation10 + $0x150] sm:$0xff]
    %v947 = vld [vmem:[#allocation10 + $0x158] sm:$0xff]
    %v948 = vld [vmem:[#allocation10 + $0x160] sm:$0xff]
    %v949 = vld [vmem:[#allocation10 + $0x168] sm:$0xff]
    %v950 = vld [vmem:[#allocation10 + $0x170] sm:$0xff]
    %v951 = vld [vmem:[#allocation10 + $0x178] sm:$0xff]
    %v952 = vld [vmem:[#allocation10 + $0x180] sm:$0xff]
    %v953 = vld [vmem:[#allocation10 + $0x188] sm:$0xff]
    %v954 = vld [vmem:[#allocation10 + $0x190] sm:$0xff]
    %v955 = vld [vmem:[#allocation10 + $0x198] sm:$0xff]
    %v956 = vld [vmem:[#allocation10 + $0x1a0] sm:$0xff]
    %v957 = vld [vmem:[#allocation10 + $0x1a8] sm:$0xff]
    %v958 = vld [vmem:[#allocation10 + $0x1b0] sm:$0xff]
    %v959 = vld [vmem:[#allocation10 + $0x1b8] sm:$0xff]
    %v960 = vld [vmem:[#allocation10 + $0x1c0] sm:$0xff]
    %v961 = vld [vmem:[#allocation10 + $0x1c8] sm:$0xff]
    %v962 = vld [vmem:[#allocation10 + $0x1d0] sm:$0xff]
    %v963 = vld [vmem:[#allocation10 + $0x1d8] sm:$0xff]
    %v964 = vld [vmem:[#allocation10 + $0x1e0] sm:$0xff]
    %v965 = vld [vmem:[#allocation10 + $0x1e8] sm:$0xff]
    %v966 = vld [vmem:[#allocation10 + $0x1f0] sm:$0xff]
    %v967 = vld [vmem:[#allocation10 + $0x1f8] sm:$0xff]
    %v968 = vld [vmem:[#allocation10 + $0x200] sm:$0xff]
    %v969 = vld [vmem:[#allocation10 + $0x208] sm:$0xff]
    %v970 = vld [vmem:[#allocation10 + $0x210] sm:$0xff]
    %v971 = vld [vmem:[#allocation10 + $0x218] sm:$0xff]
    %v972 = vld [vmem:[#allocation10 + $0x220] sm:$0xff]
    %v973 = vld [vmem:[#allocation10 + $0x228] sm:$0xff]
    %v974 = vld [vmem:[#allocation10 + $0x230] sm:$0xff]
    %v975 = vld [vmem:[#allocation10 + $0x238] sm:$0xff]
    %v976 = vld [vmem:[#allocation10 + $0x240] sm:$0xff]
    %v977 = vld [vmem:[#allocation10 + $0x248] sm:$0xff]
    %v978 = vld [vmem:[#allocation10 + $0x250] sm:$0xff]
    %v979 = vld [vmem:[#allocation10 + $0x258] sm:$0xff]
    %v980 = vld [vmem:[#allocation10 + $0x260] sm:$0xff]
    %v981 = vld [vmem:[#allocation10 + $0x268] sm:$0xff]
    %v982 = vld [vmem:[#allocation10 + $0x270] sm:$0xff]
    %v983 = vld [vmem:[#allocation10 + $0x278] sm:$0xff]
    %v984 = vld [vmem:[#allocation10 + $0x280] sm:$0xff]
    %v985 = vld [vmem:[#allocation10 + $0x288] sm:$0xff]
    %v986 = vld [vmem:[#allocation10 + $0x290] sm:$0xff]
    %v987 = vld [vmem:[#allocation10 + $0x298] sm:$0xff]
    %v988 = vld [vmem:[#allocation10 + $0x2a0] sm:$0xff]
    %v989 = vld [vmem:[#allocation10 + $0x2a8] sm:$0xff]
    %v990 = vld [vmem:[#allocation10 + $0x2b0] sm:$0xff]
    %v991 = vld [vmem:[#allocation10 + $0x2b8] sm:$0xff]
    %v992 = vld [vmem:[#allocation10 + $0x2c0] sm:$0xff]
    %v993 = vld [vmem:[#allocation10 + $0x2c8] sm:$0xff]
    %v994 = vld [vmem:[#allocation10 + $0x2d0] sm:$0xff]
    %v995 = vld [vmem:[#allocation10 + $0x2d8] sm:$0xff]
    %v996 = vld [vmem:[#allocation10 + $0x2e0] sm:$0xff]
    %v997 = vld [vmem:[#allocation10 + $0x2e8] sm:$0xff]
    %v998 = vld [vmem:[#allocation10 + $0x2f0] sm:$0xff]
    %v999 = vld [vmem:[#allocation10 + $0x2f8] sm:$0xff]
    %v1000 = vld [vmem:[#allocation10 + $0x300] sm:$0xff]
    %v1001 = vld [vmem:[#allocation10 + $0x308] sm:$0xff]
    %v1002 = vld [vmem:[#allocation10 + $0x310] sm:$0xff]
    %v1003 = vld [vmem:[#allocation10 + $0x318] sm:$0xff]
    %v1004 = vld [vmem:[#allocation10 + $0x320] sm:$0xff]
    %v1005 = vld [vmem:[#allocation10 + $0x328] sm:$0xff]
    %v1006 = vld [vmem:[#allocation10 + $0x330] sm:$0xff]
    %v1007 = vld [vmem:[#allocation10 + $0x338] sm:$0xff]
    %v1008 = vld [vmem:[#allocation10 + $0x340] sm:$0xff]
    %v1009 = vld [vmem:[#allocation10 + $0x348] sm:$0xff]
    %v1010 = vld [vmem:[#allocation10 + $0x350] sm:$0xff]
    %v1011 = vld [vmem:[#allocation10 + $0x358] sm:$0xff]
    %v1012 = vld [vmem:[#allocation10 + $0x360] sm:$0xff]
    %v1013 = vld [vmem:[#allocation10 + $0x368] sm:$0xff]
    %v1014 = vld [vmem:[#allocation10 + $0x370] sm:$0xff]
    %v1015 = vld [vmem:[#allocation10 + $0x378] sm:$0xff]
    %v1016 = vld [vmem:[#allocation10 + $0x380] sm:$0xff]
    %v1017 = vld [vmem:[#allocation10 + $0x388] sm:$0xff]
    %v1018 = vld [vmem:[#allocation10 + $0x390] sm:$0xff]
    %v1019 = vld [vmem:[#allocation10 + $0x398] sm:$0xff]
    %v1020 = vld [vmem:[#allocation10 + $0x3a0] sm:$0xff]
    %v1021 = vld [vmem:[#allocation10 + $0x3a8] sm:$0xff]
    %v1022 = vld [vmem:[#allocation10 + $0x3b0] sm:$0xff]
    %v1023 = vld [vmem:[#allocation10 + $0x3b8] sm:$0xff]
    %v1024 = vld [vmem:[#allocation10 + $0x3c0] sm:$0xff]
    %v1025 = vld [vmem:[#allocation10 + $0x3c8] sm:$0xff]
    %v1026 = vld [vmem:[#allocation10 + $0x3d0] sm:$0xff]
    %v1027 = vld [vmem:[#allocation10 + $0x3d8] sm:$0xff]
    %v1028 = vld [vmem:[#allocation10 + $0x3e0] sm:$0xff]
    %v1029 = vld [vmem:[#allocation10 + $0x3e8] sm:$0xff]
    %v1030 = vld [vmem:[#allocation10 + $0x3f0] sm:$0xff]
    %v1031 = vld [vmem:[#allocation10 + $0x3f8] sm:$0xff]
    %v1160 = vunpack.c.l.b16 %v904
    %v1161 = vunpack.c.h.b16 %v904
    %v1162 = vunpack.c.l.b16 %v905
    %v1163 = vunpack.c.h.b16 %v905
    %v1164 = vunpack.c.l.b16 %v906
    %v1165 = vunpack.c.h.b16 %v906
    %v1166 = vunpack.c.l.b16 %v907
    %v1167 = vunpack.c.h.b16 %v907
    %v1168 = vunpack.c.l.b16 %v908
    %v1169 = vunpack.c.h.b16 %v908
    %v1170 = vunpack.c.l.b16 %v909
    %v1171 = vunpack.c.h.b16 %v909
    %v1172 = vunpack.c.l.b16 %v910
    %v1173 = vunpack.c.h.b16 %v910
    %v1174 = vunpack.c.l.b16 %v911
    %v1175 = vunpack.c.h.b16 %v911
    %v1176 = vunpack.c.l.b16 %v912
    %v1177 = vunpack.c.h.b16 %v912
    %v1178 = vunpack.c.l.b16 %v913
    %v1179 = vunpack.c.h.b16 %v913
    %v1180 = vunpack.c.l.b16 %v914
    %v1181 = vunpack.c.h.b16 %v914
    %v1182 = vunpack.c.l.b16 %v915
    %v1183 = vunpack.c.h.b16 %v915
    %v1184 = vunpack.c.l.b16 %v916
    %v1185 = vunpack.c.h.b16 %v916
    %v1186 = vunpack.c.l.b16 %v917
    %v1187 = vunpack.c.h.b16 %v917
    %v1188 = vunpack.c.l.b16 %v918
    %v1189 = vunpack.c.h.b16 %v918
    %v1190 = vunpack.c.l.b16 %v919
    %v1191 = vunpack.c.h.b16 %v919
    %v1192 = vunpack.c.l.b16 %v920
    %v1193 = vunpack.c.h.b16 %v920
    %v1194 = vunpack.c.l.b16 %v921
    %v1195 = vunpack.c.h.b16 %v921
    %v1196 = vunpack.c.l.b16 %v922
    %v1197 = vunpack.c.h.b16 %v922
    %v1198 = vunpack.c.l.b16 %v923
    %v1199 = vunpack.c.h.b16 %v923
    %v1200 = vunpack.c.l.b16 %v924
    %v1201 = vunpack.c.h.b16 %v924
    %v1202 = vunpack.c.l.b16 %v925
    %v1203 = vunpack.c.h.b16 %v925
    %v1204 = vunpack.c.l.b16 %v926
    %v1205 = vunpack.c.h.b16 %v926
    %v1206 = vunpack.c.l.b16 %v927
    %v1207 = vunpack.c.h.b16 %v927
    %v1208 = vunpack.c.l.b16 %v928
    %v1209 = vunpack.c.h.b16 %v928
    %v1210 = vunpack.c.l.b16 %v929
    %v1211 = vunpack.c.h.b16 %v929
    %v1212 = vunpack.c.l.b16 %v930
    %v1213 = vunpack.c.h.b16 %v930
    %v1214 = vunpack.c.l.b16 %v931
    %v1215 = vunpack.c.h.b16 %v931
    %v1216 = vunpack.c.l.b16 %v932
    %v1217 = vunpack.c.h.b16 %v932
    %v1218 = vunpack.c.l.b16 %v933
    %v1219 = vunpack.c.h.b16 %v933
    %v1220 = vunpack.c.l.b16 %v934
    %v1221 = vunpack.c.h.b16 %v934
    %v1222 = vunpack.c.l.b16 %v935
    %v1223 = vunpack.c.h.b16 %v935
    %v1224 = vunpack.c.l.b16 %v936
    %v1225 = vunpack.c.h.b16 %v936
    %v1226 = vunpack.c.l.b16 %v937
    %v1227 = vunpack.c.h.b16 %v937
    %v1228 = vunpack.c.l.b16 %v938
    %v1229 = vunpack.c.h.b16 %v938
    %v1230 = vunpack.c.l.b16 %v939
    %v1231 = vunpack.c.h.b16 %v939
    %v1232 = vunpack.c.l.b16 %v940
    %v1233 = vunpack.c.h.b16 %v940
    %v1234 = vunpack.c.l.b16 %v941
    %v1235 = vunpack.c.h.b16 %v941
    %v1236 = vunpack.c.l.b16 %v942
    %v1237 = vunpack.c.h.b16 %v942
    %v1238 = vunpack.c.l.b16 %v943
    %v1239 = vunpack.c.h.b16 %v943
    %v1240 = vunpack.c.l.b16 %v944
    %v1241 = vunpack.c.h.b16 %v944
    %v1242 = vunpack.c.l.b16 %v945
    %v1243 = vunpack.c.h.b16 %v945
    %v1244 = vunpack.c.l.b16 %v946
    %v1245 = vunpack.c.h.b16 %v946
    %v1246 = vunpack.c.l.b16 %v947
    %v1247 = vunpack.c.h.b16 %v947
    %v1248 = vunpack.c.l.b16 %v948
    %v1249 = vunpack.c.h.b16 %v948
    %v1250 = vunpack.c.l.b16 %v949
    %v1251 = vunpack.c.h.b16 %v949
    %v1252 = vunpack.c.l.b16 %v950
    %v1253 = vunpack.c.h.b16 %v950
    %v1254 = vunpack.c.l.b16 %v951
    %v1255 = vunpack.c.h.b16 %v951
    %v1256 = vunpack.c.l.b16 %v952
    %v1257 = vunpack.c.h.b16 %v952
    %v1258 = vunpack.c.l.b16 %v953
    %v1259 = vunpack.c.h.b16 %v953
    %v1260 = vunpack.c.l.b16 %v954
    %v1261 = vunpack.c.h.b16 %v954
    %v1262 = vunpack.c.l.b16 %v955
    %v1263 = vunpack.c.h.b16 %v955
    %v1264 = vunpack.c.l.b16 %v956
    %v1265 = vunpack.c.h.b16 %v956
    %v1266 = vunpack.c.l.b16 %v957
    %v1267 = vunpack.c.h.b16 %v957
    %v1268 = vunpack.c.l.b16 %v958
    %v1269 = vunpack.c.h.b16 %v958
    %v1270 = vunpack.c.l.b16 %v959
    %v1271 = vunpack.c.h.b16 %v959
    %v1272 = vunpack.c.l.b16 %v960
    %v1273 = vunpack.c.h.b16 %v960
    %v1274 = vunpack.c.l.b16 %v961
    %v1275 = vunpack.c.h.b16 %v961
    %v1276 = vunpack.c.l.b16 %v962
    %v1277 = vunpack.c.h.b16 %v962
    %v1278 = vunpack.c.l.b16 %v963
    %v1279 = vunpack.c.h.b16 %v963
    %v1280 = vunpack.c.l.b16 %v964
    %v1281 = vunpack.c.h.b16 %v964
    %v1282 = vunpack.c.l.b16 %v965
    %v1283 = vunpack.c.h.b16 %v965
    %v1284 = vunpack.c.l.b16 %v966
    %v1285 = vunpack.c.h.b16 %v966
    %v1286 = vunpack.c.l.b16 %v967
    %v1287 = vunpack.c.h.b16 %v967
    %v1288 = vunpack.c.l.b16 %v968
    %v1289 = vunpack.c.h.b16 %v968
    %v1290 = vunpack.c.l.b16 %v969
    %v1291 = vunpack.c.h.b16 %v969
    %v1292 = vunpack.c.l.b16 %v970
    %v1293 = vunpack.c.h.b16 %v970
    %v1294 = vunpack.c.l.b16 %v971
    %v1295 = vunpack.c.h.b16 %v971
    %v1296 = vunpack.c.l.b16 %v972
    %v1297 = vunpack.c.h.b16 %v972
    %v1298 = vunpack.c.l.b16 %v973
    %v1299 = vunpack.c.h.b16 %v973
    %v1300 = vunpack.c.l.b16 %v974
    %v1301 = vunpack.c.h.b16 %v974
    %v1302 = vunpack.c.l.b16 %v975
    %v1303 = vunpack.c.h.b16 %v975
    %v1304 = vunpack.c.l.b16 %v976
    %v1305 = vunpack.c.h.b16 %v976
    %v1306 = vunpack.c.l.b16 %v977
    %v1307 = vunpack.c.h.b16 %v977
    %v1308 = vunpack.c.l.b16 %v978
    %v1309 = vunpack.c.h.b16 %v978
    %v1310 = vunpack.c.l.b16 %v979
    %v1311 = vunpack.c.h.b16 %v979
    %v1312 = vunpack.c.l.b16 %v980
    %v1313 = vunpack.c.h.b16 %v980
    %v1314 = vunpack.c.l.b16 %v981
    %v1315 = vunpack.c.h.b16 %v981
    %v1316 = vunpack.c.l.b16 %v982
    %v1317 = vunpack.c.h.b16 %v982
    %v1318 = vunpack.c.l.b16 %v983
    %v1319 = vunpack.c.h.b16 %v983
    %v1320 = vunpack.c.l.b16 %v984
    %v1321 = vunpack.c.h.b16 %v984
    %v1322 = vunpack.c.l.b16 %v985
    %v1323 = vunpack.c.h.b16 %v985
    %v1324 = vunpack.c.l.b16 %v986
    %v1325 = vunpack.c.h.b16 %v986
    %v1326 = vunpack.c.l.b16 %v987
    %v1327 = vunpack.c.h.b16 %v987
    %v1328 = vunpack.c.l.b16 %v988
    %v1329 = vunpack.c.h.b16 %v988
    %v1330 = vunpack.c.l.b16 %v989
    %v1331 = vunpack.c.h.b16 %v989
    %v1332 = vunpack.c.l.b16 %v990
    %v1333 = vunpack.c.h.b16 %v990
    %v1334 = vunpack.c.l.b16 %v991
    %v1335 = vunpack.c.h.b16 %v991
    %v1336 = vunpack.c.l.b16 %v992
    %v1337 = vunpack.c.h.b16 %v992
    %v1338 = vunpack.c.l.b16 %v993
    %v1339 = vunpack.c.h.b16 %v993
    %v1340 = vunpack.c.l.b16 %v994
    %v1341 = vunpack.c.h.b16 %v994
    %v1342 = vunpack.c.l.b16 %v995
    %v1343 = vunpack.c.h.b16 %v995
    %v1344 = vunpack.c.l.b16 %v996
    %v1345 = vunpack.c.h.b16 %v996
    %v1346 = vunpack.c.l.b16 %v997
    %v1347 = vunpack.c.h.b16 %v997
    %v1348 = vunpack.c.l.b16 %v998
    %v1349 = vunpack.c.h.b16 %v998
    %v1350 = vunpack.c.l.b16 %v999
    %v1351 = vunpack.c.h.b16 %v999
    %v1352 = vunpack.c.l.b16 %v1000
    %v1353 = vunpack.c.h.b16 %v1000
    %v1354 = vunpack.c.l.b16 %v1001
    %v1355 = vunpack.c.h.b16 %v1001
    %v1356 = vunpack.c.l.b16 %v1002
    %v1357 = vunpack.c.h.b16 %v1002
    %v1358 = vunpack.c.l.b16 %v1003
    %v1359 = vunpack.c.h.b16 %v1003
    %v1360 = vunpack.c.l.b16 %v1004
    %v1361 = vunpack.c.h.b16 %v1004
    %v1362 = vunpack.c.l.b16 %v1005
    %v1363 = vunpack.c.h.b16 %v1005
    %v1364 = vunpack.c.l.b16 %v1006
    %v1365 = vunpack.c.h.b16 %v1006
    %v1366 = vunpack.c.l.b16 %v1007
    %v1367 = vunpack.c.h.b16 %v1007
    %v1368 = vunpack.c.l.b16 %v1008
    %v1369 = vunpack.c.h.b16 %v1008
    %v1370 = vunpack.c.l.b16 %v1009
    %v1371 = vunpack.c.h.b16 %v1009
    %v1372 = vunpack.c.l.b16 %v1010
    %v1373 = vunpack.c.h.b16 %v1010
    %v1374 = vunpack.c.l.b16 %v1011
    %v1375 = vunpack.c.h.b16 %v1011
    %v1376 = vunpack.c.l.b16 %v1012
    %v1377 = vunpack.c.h.b16 %v1012
    %v1378 = vunpack.c.l.b16 %v1013
    %v1379 = vunpack.c.h.b16 %v1013
    %v1380 = vunpack.c.l.b16 %v1014
    %v1381 = vunpack.c.h.b16 %v1014
    %v1382 = vunpack.c.l.b16 %v1015
    %v1383 = vunpack.c.h.b16 %v1015
    %v1384 = vunpack.c.l.b16 %v1016
    %v1385 = vunpack.c.h.b16 %v1016
    %v1386 = vunpack.c.l.b16 %v1017
    %v1387 = vunpack.c.h.b16 %v1017
    %v1388 = vunpack.c.l.b16 %v1018
    %v1389 = vunpack.c.h.b16 %v1018
    %v1390 = vunpack.c.l.b16 %v1019
    %v1391 = vunpack.c.h.b16 %v1019
    %v1392 = vunpack.c.l.b16 %v1020
    %v1393 = vunpack.c.h.b16 %v1020
    %v1394 = vunpack.c.l.b16 %v1021
    %v1395 = vunpack.c.h.b16 %v1021
    %v1396 = vunpack.c.l.b16 %v1022
    %v1397 = vunpack.c.h.b16 %v1022
    %v1398 = vunpack.c.l.b16 %v1023
    %v1399 = vunpack.c.h.b16 %v1023
    %v1400 = vunpack.c.l.b16 %v1024
    %v1401 = vunpack.c.h.b16 %v1024
    %v1402 = vunpack.c.l.b16 %v1025
    %v1403 = vunpack.c.h.b16 %v1025
    %v1404 = vunpack.c.l.b16 %v1026
    %v1405 = vunpack.c.h.b16 %v1026
    %v1406 = vunpack.c.l.b16 %v1027
    %v1407 = vunpack.c.h.b16 %v1027
    %v1408 = vunpack.c.l.b16 %v1028
    %v1409 = vunpack.c.h.b16 %v1028
    %v1410 = vunpack.c.l.b16 %v1029
    %v1411 = vunpack.c.h.b16 %v1029
    %v1412 = vunpack.c.l.b16 %v1030
    %v1413 = vunpack.c.h.b16 %v1030
    %v1414 = vunpack.c.l.b16 %v1031
    %v1415 = vunpack.c.h.b16 %v1031
    %v1416 = vpack.c.b16 %v1168, %v1160
    %v1417 = vpack.c.b16 %v1169, %v1161
    %v1418 = vpack.c.b16 %v1170, %v1162
    %v1419 = vpack.c.b16 %v1171, %v1163
    %v1420 = vpack.c.b16 %v1172, %v1164
    %v1421 = vpack.c.b16 %v1173, %v1165
    %v1422 = vpack.c.b16 %v1174, %v1166
    %v1423 = vpack.c.b16 %v1175, %v1167
    %v1424 = vpack.c.b16 %v1184, %v1176
    %v1425 = vpack.c.b16 %v1185, %v1177
    %v1426 = vpack.c.b16 %v1186, %v1178
    %v1427 = vpack.c.b16 %v1187, %v1179
    %v1428 = vpack.c.b16 %v1188, %v1180
    %v1429 = vpack.c.b16 %v1189, %v1181
    %v1430 = vpack.c.b16 %v1190, %v1182
    %v1431 = vpack.c.b16 %v1191, %v1183
    %v1432 = vpack.c.b16 %v1200, %v1192
    %v1433 = vpack.c.b16 %v1201, %v1193
    %v1434 = vpack.c.b16 %v1202, %v1194
    %v1435 = vpack.c.b16 %v1203, %v1195
    %v1436 = vpack.c.b16 %v1204, %v1196
    %v1437 = vpack.c.b16 %v1205, %v1197
    %v1438 = vpack.c.b16 %v1206, %v1198
    %v1439 = vpack.c.b16 %v1207, %v1199
    %v1440 = vpack.c.b16 %v1216, %v1208
    %v1441 = vpack.c.b16 %v1217, %v1209
    %v1442 = vpack.c.b16 %v1218, %v1210
    %v1443 = vpack.c.b16 %v1219, %v1211
    %v1444 = vpack.c.b16 %v1220, %v1212
    %v1445 = vpack.c.b16 %v1221, %v1213
    %v1446 = vpack.c.b16 %v1222, %v1214
    %v1447 = vpack.c.b16 %v1223, %v1215
    %v1448 = vpack.c.b16 %v1232, %v1224
    %v1449 = vpack.c.b16 %v1233, %v1225
    %v1450 = vpack.c.b16 %v1234, %v1226
    %v1451 = vpack.c.b16 %v1235, %v1227
    %v1452 = vpack.c.b16 %v1236, %v1228
    %v1453 = vpack.c.b16 %v1237, %v1229
    %v1454 = vpack.c.b16 %v1238, %v1230
    %v1455 = vpack.c.b16 %v1239, %v1231
    %v1456 = vpack.c.b16 %v1248, %v1240
    %v1457 = vpack.c.b16 %v1249, %v1241
    %v1458 = vpack.c.b16 %v1250, %v1242
    %v1459 = vpack.c.b16 %v1251, %v1243
    %v1460 = vpack.c.b16 %v1252, %v1244
    %v1461 = vpack.c.b16 %v1253, %v1245
    %v1462 = vpack.c.b16 %v1254, %v1246
    %v1463 = vpack.c.b16 %v1255, %v1247
    %v1464 = vpack.c.b16 %v1264, %v1256
    %v1465 = vpack.c.b16 %v1265, %v1257
    %v1466 = vpack.c.b16 %v1266, %v1258
    %v1467 = vpack.c.b16 %v1267, %v1259
    %v1468 = vpack.c.b16 %v1268, %v1260
    %v1469 = vpack.c.b16 %v1269, %v1261
    %v1470 = vpack.c.b16 %v1270, %v1262
    %v1471 = vpack.c.b16 %v1271, %v1263
    %v1472 = vpack.c.b16 %v1280, %v1272
    %v1473 = vpack.c.b16 %v1281, %v1273
    %v1474 = vpack.c.b16 %v1282, %v1274
    %v1475 = vpack.c.b16 %v1283, %v1275
    %v1476 = vpack.c.b16 %v1284, %v1276
    %v1477 = vpack.c.b16 %v1285, %v1277
    %v1478 = vpack.c.b16 %v1286, %v1278
    %v1479 = vpack.c.b16 %v1287, %v1279
    %v1480 = vpack.c.b16 %v1296, %v1288
    %v1481 = vpack.c.b16 %v1297, %v1289
    %v1482 = vpack.c.b16 %v1298, %v1290
    %v1483 = vpack.c.b16 %v1299, %v1291
    %v1484 = vpack.c.b16 %v1300, %v1292
    %v1485 = vpack.c.b16 %v1301, %v1293
    %v1486 = vpack.c.b16 %v1302, %v1294
    %v1487 = vpack.c.b16 %v1303, %v1295
    %v1488 = vpack.c.b16 %v1312, %v1304
    %v1489 = vpack.c.b16 %v1313, %v1305
    %v1490 = vpack.c.b16 %v1314, %v1306
    %v1491 = vpack.c.b16 %v1315, %v1307
    %v1492 = vpack.c.b16 %v1316, %v1308
    %v1493 = vpack.c.b16 %v1317, %v1309
    %v1494 = vpack.c.b16 %v1318, %v1310
    %v1495 = vpack.c.b16 %v1319, %v1311
    %v1496 = vpack.c.b16 %v1328, %v1320
    %v1497 = vpack.c.b16 %v1329, %v1321
    %v1498 = vpack.c.b16 %v1330, %v1322
    %v1499 = vpack.c.b16 %v1331, %v1323
    %v1500 = vpack.c.b16 %v1332, %v1324
    %v1501 = vpack.c.b16 %v1333, %v1325
    %v1502 = vpack.c.b16 %v1334, %v1326
    %v1503 = vpack.c.b16 %v1335, %v1327
    %v1504 = vpack.c.b16 %v1344, %v1336
    %v1505 = vpack.c.b16 %v1345, %v1337
    %v1506 = vpack.c.b16 %v1346, %v1338
    %v1507 = vpack.c.b16 %v1347, %v1339
    %v1508 = vpack.c.b16 %v1348, %v1340
    %v1509 = vpack.c.b16 %v1349, %v1341
    %v1510 = vpack.c.b16 %v1350, %v1342
    %v1511 = vpack.c.b16 %v1351, %v1343
    %v1512 = vpack.c.b16 %v1360, %v1352
    %v1513 = vpack.c.b16 %v1361, %v1353
    %v1514 = vpack.c.b16 %v1362, %v1354
    %v1515 = vpack.c.b16 %v1363, %v1355
    %v1516 = vpack.c.b16 %v1364, %v1356
    %v1517 = vpack.c.b16 %v1365, %v1357
    %v1518 = vpack.c.b16 %v1366, %v1358
    %v1519 = vpack.c.b16 %v1367, %v1359
    %v1520 = vpack.c.b16 %v1376, %v1368
    %v1521 = vpack.c.b16 %v1377, %v1369
    %v1522 = vpack.c.b16 %v1378, %v1370
    %v1523 = vpack.c.b16 %v1379, %v1371
    %v1524 = vpack.c.b16 %v1380, %v1372
    %v1525 = vpack.c.b16 %v1381, %v1373
    %v1526 = vpack.c.b16 %v1382, %v1374
    %v1527 = vpack.c.b16 %v1383, %v1375
    %v1528 = vpack.c.b16 %v1392, %v1384
    %v1529 = vpack.c.b16 %v1393, %v1385
    %v1530 = vpack.c.b16 %v1394, %v1386
    %v1531 = vpack.c.b16 %v1395, %v1387
    %v1532 = vpack.c.b16 %v1396, %v1388
    %v1533 = vpack.c.b16 %v1397, %v1389
    %v1534 = vpack.c.b16 %v1398, %v1390
    %v1535 = vpack.c.b16 %v1399, %v1391
    %v1536 = vpack.c.b16 %v1408, %v1400
    %v1537 = vpack.c.b16 %v1409, %v1401
    %v1538 = vpack.c.b16 %v1410, %v1402
    %v1539 = vpack.c.b16 %v1411, %v1403
    %v1540 = vpack.c.b16 %v1412, %v1404
    %v1541 = vpack.c.b16 %v1413, %v1405
    %v1542 = vpack.c.b16 %v1414, %v1406
    %v1543 = vpack.c.b16 %v1415, %v1407
    %1672 = vmatprep.subr.bf16.mxu0 %v1417
    %1673 = vmatpush1.bf16.msra.mxu0 %v1416
    %1674 = vmatprep.subr.bf16.mxu0 %v1425
    %1675 = vmatpush1.bf16.msra.mxu0 %v1424
    %1676 = vmatprep.subr.bf16.mxu0 %v1433
    %1677 = vmatpush1.bf16.msra.mxu0 %v1432
    %1678 = vmatprep.subr.bf16.mxu0 %v1441
    %1679 = vmatpush1.bf16.msra.mxu0 %v1440
    %1680 = vmatprep.subr.bf16.mxu0 %v1449
    %1681 = vmatpush1.bf16.msra.mxu0 %v1448
    %1682 = vmatprep.subr.bf16.mxu0 %v1457
    %1683 = vmatpush1.bf16.msra.mxu0 %v1456
    %1684 = vmatprep.subr.bf16.mxu0 %v1465
    %1685 = vmatpush1.bf16.msra.mxu0 %v1464
    %1686 = vmatprep.subr.bf16.mxu0 %v1473
    %1687 = vmatpush1.bf16.msra.mxu0 %v1472
    %1688 = vmatprep.subr.bf16.mxu0 %v1481
    %1689 = vmatpush1.bf16.msra.mxu0 %v1480
    %1690 = vmatprep.subr.bf16.mxu0 %v1489
    %1691 = vmatpush1.bf16.msra.mxu0 %v1488
    %1692 = vmatprep.subr.bf16.mxu0 %v1497
    %1693 = vmatpush1.bf16.msra.mxu0 %v1496
    %1694 = vmatprep.subr.bf16.mxu0 %v1505
    %1695 = vmatpush1.bf16.msra.mxu0 %v1504
    %1696 = vmatprep.subr.bf16.mxu0 %v1513
    %1697 = vmatpush1.bf16.msra.mxu0 %v1512
    %1698 = vmatprep.subr.bf16.mxu0 %v1521
    %1699 = vmatpush1.bf16.msra.mxu0 %v1520
    %1700 = vmatprep.subr.bf16.mxu0 %v1529
    %1701 = vmatpush1.bf16.msra.mxu0 %v1528
    %1702 = vmatprep.subr.bf16.mxu0 %v1537
    %1703 = vmatpush1.bf16.msra.mxu0 %v1536
    %1704 = vmatprep.mubr.bf16.mxu0 %v903
    %1705 = vmatmul.mubr.bf16.gmra.mrb[0].mxu0 %v903
    %v1706 = vpop.f32.mrb[0].mxu0
    %v1707 = vadd.f32 0.0, %v1706
    %v1708 = vpop.f32.mrb[0].mxu0
    %v1709 = vadd.f32 0.0, %v1708
    %v1710 = vpop.f32.mrb[0].mxu0
    %v1711 = vpop.f32.mrb[0].mxu0
    %1712 = vdwg.mxu0
    %1713 = vmatprep.subr.bf16.mxu0 %v1419
    %1714 = vmatpush1.bf16.msra.mxu0 %v1418
    %1715 = vmatprep.subr.bf16.mxu0 %v1427
    %1716 = vmatpush1.bf16.msra.mxu0 %v1426
    %1717 = vmatprep.subr.bf16.mxu0 %v1435
    %1718 = vmatpush1.bf16.msra.mxu0 %v1434
    %1719 = vmatprep.subr.bf16.mxu0 %v1443
    %1720 = vmatpush1.bf16.msra.mxu0 %v1442
    %1721 = vmatprep.subr.bf16.mxu0 %v1451
    %1722 = vmatpush1.bf16.msra.mxu0 %v1450
    %1723 = vmatprep.subr.bf16.mxu0 %v1459
    %1724 = vmatpush1.bf16.msra.mxu0 %v1458
    %1725 = vmatprep.subr.bf16.mxu0 %v1467
    %1726 = vmatpush1.bf16.msra.mxu0 %v1466
    %1727 = vmatprep.subr.bf16.mxu0 %v1475
    %1728 = vmatpush1.bf16.msra.mxu0 %v1474
    %1729 = vmatprep.subr.bf16.mxu0 %v1483
    %1730 = vmatpush1.bf16.msra.mxu0 %v1482
    %1731 = vmatprep.subr.bf16.mxu0 %v1491
    %1732 = vmatpush1.bf16.msra.mxu0 %v1490
    %1733 = vmatprep.subr.bf16.mxu0 %v1499
    %1734 = vmatpush1.bf16.msra.mxu0 %v1498
    %1735 = vmatprep.subr.bf16.mxu0 %v1507
    %1736 = vmatpush1.bf16.msra.mxu0 %v1506
    %1737 = vmatprep.subr.bf16.mxu0 %v1515
    %1738 = vmatpush1.bf16.msra.mxu0 %v1514
    %1739 = vmatprep.subr.bf16.mxu0 %v1523
    %1740 = vmatpush1.bf16.msra.mxu0 %v1522
    %1741 = vmatprep.subr.bf16.mxu0 %v1531
    %1742 = vmatpush1.bf16.msra.mxu0 %v1530
    %1743 = vmatprep.subr.bf16.mxu0 %v1539
    %1744 = vmatpush1.bf16.msra.mxu0 %v1538
    %1745 = vmatprep.mubr.bf16.mxu0 %v903
    %1746 = vmatmul.mubr.bf16.gmra.mrb[0].mxu0 %v903
    %v1747 = vpop.f32.mrb[0].mxu0
    %v1748 = vadd.f32 0.0, %v1747
    %v1749 = vpop.f32.mrb[0].mxu0
    %v1750 = vadd.f32 0.0, %v1749
    %v1751 = vpop.f32.mrb[0].mxu0
    %v1752 = vpop.f32.mrb[0].mxu0
    %1753 = vdwg.mxu0
    %1754 = vmatprep.subr.bf16.mxu0 %v1421
    %1755 = vmatpush1.bf16.msra.mxu0 %v1420
    %1756 = vmatprep.subr.bf16.mxu0 %v1429
    %1757 = vmatpush1.bf16.msra.mxu0 %v1428
    %1758 = vmatprep.subr.bf16.mxu0 %v1437
    %1759 = vmatpush1.bf16.msra.mxu0 %v1436
    %1760 = vmatprep.subr.bf16.mxu0 %v1445
    %1761 = vmatpush1.bf16.msra.mxu0 %v1444
    %1762 = vmatprep.subr.bf16.mxu0 %v1453
    %1763 = vmatpush1.bf16.msra.mxu0 %v1452
    %1764 = vmatprep.subr.bf16.mxu0 %v1461
    %1765 = vmatpush1.bf16.msra.mxu0 %v1460
    %1766 = vmatprep.subr.bf16.mxu0 %v1469
    %1767 = vmatpush1.bf16.msra.mxu0 %v1468
    %1768 = vmatprep.subr.bf16.mxu0 %v1477
    %1769 = vmatpush1.bf16.msra.mxu0 %v1476
    %1770 = vmatprep.subr.bf16.mxu0 %v1485
    %1771 = vmatpush1.bf16.msra.mxu0 %v1484
    %1772 = vmatprep.subr.bf16.mxu0 %v1493
    %1773 = vmatpush1.bf16.msra.mxu0 %v1492
    %1774 = vmatprep.subr.bf16.mxu0 %v1501
    %1775 = vmatpush1.bf16.msra.mxu0 %v1500
    %1776 = vmatprep.subr.bf16.mxu0 %v1509
    %1777 = vmatpush1.bf16.msra.mxu0 %v1508
    %1778 = vmatprep.subr.bf16.mxu0 %v1517
    %1779 = vmatpush1.bf16.msra.mxu0 %v1516
    %1780 = vmatprep.subr.bf16.mxu0 %v1525
    %1781 = vmatpush1.bf16.msra.mxu0 %v1524
    %1782 = vmatprep.subr.bf16.mxu0 %v1533
    %1783 = vmatpush1.bf16.msra.mxu0 %v1532
    %1784 = vmatprep.subr.bf16.mxu0 %v1541
    %1785 = vmatpush1.bf16.msra.mxu0 %v1540
    %1786 = vmatprep.mubr.bf16.mxu0 %v903
    %1787 = vmatmul.mubr.bf16.gmra.mrb[0].mxu0 %v903
    %v1788 = vpop.f32.mrb[0].mxu0
    %v1789 = vadd.f32 0.0, %v1788
    %v1790 = vpop.f32.mrb[0].mxu0
    %v1791 = vadd.f32 0.0, %v1790
    %v1792 = vpop.f32.mrb[0].mxu0
    %v1793 = vpop.f32.mrb[0].mxu0
    %1794 = vdwg.mxu0
    %1795 = vmatprep.subr.bf16.mxu0 %v1423
    %1796 = vmatpush1.bf16.msra.mxu0 %v1422
    %1797 = vmatprep.subr.bf16.mxu0 %v1431
    %1798 = vmatpush1.bf16.msra.mxu0 %v1430
    %1799 = vmatprep.subr.bf16.mxu0 %v1439
    %1800 = vmatpush1.bf16.msra.mxu0 %v1438
    %1801 = vmatprep.subr.bf16.mxu0 %v1447
    %1802 = vmatpush1.bf16.msra.mxu0 %v1446
    %1803 = vmatprep.subr.bf16.mxu0 %v1455
    %1804 = vmatpush1.bf16.msra.mxu0 %v1454
    %1805 = vmatprep.subr.bf16.mxu0 %v1463
    %1806 = vmatpush1.bf16.msra.mxu0 %v1462
    %1807 = vmatprep.subr.bf16.mxu0 %v1471
    %1808 = vmatpush1.bf16.msra.mxu0 %v1470
    %1809 = vmatprep.subr.bf16.mxu0 %v1479
    %1810 = vmatpush1.bf16.msra.mxu0 %v1478
    %1811 = vmatprep.subr.bf16.mxu0 %v1487
    %1812 = vmatpush1.bf16.msra.mxu0 %v1486
    %1813 = vmatprep.subr.bf16.mxu0 %v1495
    %1814 = vmatpush1.bf16.msra.mxu0 %v1494
    %1815 = vmatprep.subr.bf16.mxu0 %v1503
    %1816 = vmatpush1.bf16.msra.mxu0 %v1502
    %1817 = vmatprep.subr.bf16.mxu0 %v1511
    %1818 = vmatpush1.bf16.msra.mxu0 %v1510
    %1819 = vmatprep.subr.bf16.mxu0 %v1519
    %1820 = vmatpush1.bf16.msra.mxu0 %v1518
    %1821 = vmatprep.subr.bf16.mxu0 %v1527
    %1822 = vmatpush1.bf16.msra.mxu0 %v1526
    %1823 = vmatprep.subr.bf16.mxu0 %v1535
    %1824 = vmatpush1.bf16.msra.mxu0 %v1534
    %1825 = vmatprep.subr.bf16.mxu0 %v1543
    %1826 = vmatpush1.bf16.msra.mxu0 %v1542
    %1827 = vmatprep.mubr.bf16.mxu0 %v903
    %1828 = vmatmul.mubr.bf16.gmra.mrb[0].mxu0 %v903
    %v1829 = vpop.f32.mrb[0].mxu0
    %v1830 = vadd.f32 0.0, %v1829
    %v1831 = vpop.f32.mrb[0].mxu0
    %v1832 = vadd.f32 0.0, %v1831
    %v1833 = vpop.f32.mrb[0].mxu0
    %v1834 = vpop.f32.mrb[0].mxu0
    %1835 = vdwg.mxu0
    %v1836 = vadd.f32 %v850, %v1707
    %v1837 = vadd.f32 %v852, %v1709
    %v1838 = vadd.f32 %v893, %v1748
    %v1839 = vadd.f32 %v895, %v1750
    %v1840 = vxor.u32 %v1836, 2147483648
    %v1841 = vmul.f32 %v1840, 1.442695
    %v1842 = vpow.pop %v1841
    %v1843 = vadd.f32 %v1842, 1.0
    %v1844 = vrcp.pop %v1843
    %v1845 = vmul.f32 1.0, %v1844
    %v1846 = vxor.u32 %v1837, 2147483648
    %v1847 = vmul.f32 %v1846, 1.442695
    %v1848 = vpow.pop %v1847
    %v1849 = vadd.f32 %v1848, 1.0
    %v1850 = vrcp.pop %v1849
    %v1851 = vmul.f32 1.0, %v1850
    %v1852 = vtanh.pop %v1838
    %v1853 = vxor.u32 %v1839, 2147483648
    %v1854 = vmul.f32 %v1853, 1.442695
    %v1855 = vpow.pop %v1854
    %v1856 = vadd.f32 %v1855, 1.0
    %v1857 = vrcp.pop %v1856
    %v1858 = vmul.f32 1.0, %v1857
    %v1859 = vmul.f32 %v1851, 0.0
    %v1860 = vmul.f32 %v1845, %v1852
    %v1861 = vadd.f32 %v1859, %v1860
    %v1862 = vtanh.pop %v1861
    %v1863 = vmul.f32 %v1858, %v1862
    %v1864 = vpack.c.bf16 %v1863, %v1863
    %v1865 = vld [vmem:[#allocation8 + $0x10] sm:$0xff]
    %v1866 = vld [vmem:[#allocation8 + $0x18] sm:$0xff]
    %v1867 = vld [vmem:[#allocation8 + $0x44] sm:$0xff]
    %v1868 = vld [vmem:[#allocation8 + $0x4c] sm:$0xff]
    %v1869 = vld [vmem:[#allocation8 + $0x78] sm:$0xff]
    %v1870 = vld [vmem:[#allocation8 + $0x80] sm:$0xff]
    %v1871 = vld [vmem:[#allocation8 + $0xac] sm:$0xff]
    %v1872 = vld [vmem:[#allocation8 + $0xb4] sm:$0xff]
    %v1873 = vld [vmem:[#allocation8 + $0xe0] sm:$0xff]
    %v1874 = vld [vmem:[#allocation8 + $0xe8] sm:$0xff]
    %v1875 = vld [vmem:[#allocation8 + $0x114] sm:$0xff]
    %v1876 = vld [vmem:[#allocation8 + $0x11c] sm:$0xff]
    %v1877 = vld [vmem:[#allocation8 + $0x148] sm:$0xff]
    %v1878 = vld [vmem:[#allocation8 + $0x150] sm:$0xff]
    %v1879 = vld [vmem:[#allocation8 + $0x17c] sm:$0xff]
    %v1880 = vld [vmem:[#allocation8 + $0x184] sm:$0xff]
    %v1881 = vld [vmem:[#allocation8 + $0x1b0] sm:$0xff]
    %v1882 = vld [vmem:[#allocation8 + $0x1b8] sm:$0xff]
    %v1883 = vld [vmem:[#allocation8 + $0x1e4] sm:$0xff]
    %v1884 = vld [vmem:[#allocation8 + $0x1ec] sm:$0xff]
    %v1885 = vld [vmem:[#allocation8 + $0x218] sm:$0xff]
    %v1886 = vld [vmem:[#allocation8 + $0x220] sm:$0xff]
    %v1887 = vld [vmem:[#allocation8 + $0x24c] sm:$0xff]
    %v1888 = vld [vmem:[#allocation8 + $0x254] sm:$0xff]
    %v1889 = vld [vmem:[#allocation8 + $0x280] sm:$0xff]
    %v1890 = vld [vmem:[#allocation8 + $0x288] sm:$0xff]
    %v1891 = vld [vmem:[#allocation8 + $0x2b4] sm:$0xff]
    %v1892 = vld [vmem:[#allocation8 + $0x2bc] sm:$0xff]
    %v1893 = vld [vmem:[#allocation8 + $0x2e8] sm:$0xff]
    %v1894 = vld [vmem:[#allocation8 + $0x2f0] sm:$0xff]
    %v1895 = vld [vmem:[#allocation8 + $0x31c] sm:$0xff]
    %v1896 = vld [vmem:[#allocation8 + $0x324] sm:$0xff]
    %v1929 = vunpack.c.l.b16 %v1865
    %v1930 = vunpack.c.h.b16 %v1865
    %v1931 = vunpack.c.l.b16 %v1866
    %v1932 = vunpack.c.h.b16 %v1866
    %v1933 = vunpack.c.l.b16 %v1867
    %v1934 = vunpack.c.h.b16 %v1867
    %v1935 = vunpack.c.l.b16 %v1868
    %v1936 = vunpack.c.h.b16 %v1868
    %v1937 = vunpack.c.l.b16 %v1869
    %v1938 = vunpack.c.h.b16 %v1869
    %v1939 = vunpack.c.l.b16 %v1870
    %v1940 = vunpack.c.h.b16 %v1870
    %v1941 = vunpack.c.l.b16 %v1871
    %v1942 = vunpack.c.h.b16 %v1871
    %v1943 = vunpack.c.l.b16 %v1872
    %v1944 = vunpack.c.h.b16 %v1872
    %v1945 = vunpack.c.l.b16 %v1873
    %v1946 = vunpack.c.h.b16 %v1873
    %v1947 = vunpack.c.l.b16 %v1874
    %v1948 = vunpack.c.h.b16 %v1874
    %v1949 = vunpack.c.l.b16 %v1875
    %v1950 = vunpack.c.h.b16 %v1875
    %v1951 = vunpack.c.l.b16 %v1876
    %v1952 = vunpack.c.h.b16 %v1876
    %v1953 = vunpack.c.l.b16 %v1877
    %v1954 = vunpack.c.h.b16 %v1877
    %v1955 = vunpack.c.l.b16 %v1878
    %v1956 = vunpack.c.h.b16 %v1878
    %v1957 = vunpack.c.l.b16 %v1879
    %v1958 = vunpack.c.h.b16 %v1879
    %v1959 = vunpack.c.l.b16 %v1880
    %v1960 = vunpack.c.h.b16 %v1880
    %v1961 = vunpack.c.l.b16 %v1881
    %v1962 = vunpack.c.h.b16 %v1881
    %v1963 = vunpack.c.l.b16 %v1882
    %v1964 = vunpack.c.h.b16 %v1882
    %v1965 = vunpack.c.l.b16 %v1883
    %v1966 = vunpack.c.h.b16 %v1883
    %v1967 = vunpack.c.l.b16 %v1884
    %v1968 = vunpack.c.h.b16 %v1884
    %v1969 = vunpack.c.l.b16 %v1885
    %v1970 = vunpack.c.h.b16 %v1885
    %v1971 = vunpack.c.l.b16 %v1886
    %v1972 = vunpack.c.h.b16 %v1886
    %v1973 = vunpack.c.l.b16 %v1887
    %v1974 = vunpack.c.h.b16 %v1887
    %v1975 = vunpack.c.l.b16 %v1888
    %v1976 = vunpack.c.h.b16 %v1888
    %v1977 = vunpack.c.l.b16 %v1889
    %v1978 = vunpack.c.h.b16 %v1889
    %v1979 = vunpack.c.l.b16 %v1890
    %v1980 = vunpack.c.h.b16 %v1890
    %v1981 = vunpack.c.l.b16 %v1891
    %v1982 = vunpack.c.h.b16 %v1891
    %v1983 = vunpack.c.l.b16 %v1892
    %v1984 = vunpack.c.h.b16 %v1892
    %v1985 = vunpack.c.l.b16 %v1893
    %v1986 = vunpack.c.h.b16 %v1893
    %v1987 = vunpack.c.l.b16 %v1894
    %v1988 = vunpack.c.h.b16 %v1894
    %v1989 = vunpack.c.l.b16 %v1895
    %v1990 = vunpack.c.h.b16 %v1895
    %v1991 = vunpack.c.l.b16 %v1896
    %v1992 = vunpack.c.h.b16 %v1896
    %v1993 = vpack.c.b16 %v1933, %v1929
    %v1994 = vpack.c.b16 %v1934, %v1930
    %v1995 = vpack.c.b16 %v1935, %v1931
    %v1996 = vpack.c.b16 %v1936, %v1932
    %v1997 = vpack.c.b16 %v1941, %v1937
    %v1998 = vpack.c.b16 %v1942, %v1938
    %v1999 = vpack.c.b16 %v1943, %v1939
    %v2000 = vpack.c.b16 %v1944, %v1940
    %v2001 = vpack.c.b16 %v1949, %v1945
    %v2002 = vpack.c.b16 %v1950, %v1946
    %v2003 = vpack.c.b16 %v1951, %v1947
    %v2004 = vpack.c.b16 %v1952, %v1948
    %v2005 = vpack.c.b16 %v1957, %v1953
    %v2006 = vpack.c.b16 %v1958, %v1954
    %v2007 = vpack.c.b16 %v1959, %v1955
    %v2008 = vpack.c.b16 %v1960, %v1956
    %v2009 = vpack.c.b16 %v1965, %v1961
    %v2010 = vpack.c.b16 %v1966, %v1962
    %v2011 = vpack.c.b16 %v1967, %v1963
    %v2012 = vpack.c.b16 %v1968, %v1964
    %v2013 = vpack.c.b16 %v1973, %v1969
    %v2014 = vpack.c.b16 %v1974, %v1970
    %v2015 = vpack.c.b16 %v1975, %v1971
    %v2016 = vpack.c.b16 %v1976, %v1972
    %v2017 = vpack.c.b16 %v1981, %v1977
    %v2018 = vpack.c.b16 %v1982, %v1978
    %v2019 = vpack.c.b16 %v1983, %v1979
    %v2020 = vpack.c.b16 %v1984, %v1980
    %v2021 = vpack.c.b16 %v1989, %v1985
    %v2022 = vpack.c.b16 %v1990, %v1986
    %v2023 = vpack.c.b16 %v1991, %v1987
    %v2024 = vpack.c.b16 %v1992, %v1988
    %2057 = vmatprep.subr.bf16.mxu0 %v1994
    %2058 = vmatpush1.bf16.msra.mxu0 %v1993
    %2059 = vmatprep.subr.bf16.mxu0 %v1998
    %2060 = vmatpush1.bf16.msra.mxu0 %v1997
    %2061 = vmatprep.subr.bf16.mxu0 %v2002
    %2062 = vmatpush1.bf16.msra.mxu0 %v2001
    %2063 = vmatprep.subr.bf16.mxu0 %v2006
    %2064 = vmatpush1.bf16.msra.mxu0 %v2005
    %2065 = vmatprep.subr.bf16.mxu0 %v2010
    %2066 = vmatpush1.bf16.msra.mxu0 %v2009
    %2067 = vmatprep.subr.bf16.mxu0 %v2014
    %2068 = vmatpush1.bf16.msra.mxu0 %v2013
    %2069 = vmatprep.subr.bf16.mxu0 %v2018
    %2070 = vmatpush1.bf16.msra.mxu0 %v2017
    %2071 = vmatprep.subr.bf16.mxu0 %v2022
    %2072 = vmatpush1.bf16.msra.mxu0 %v2021
    %2073 = vmatprep.subr.bf16.mxu0 0
    %2074 = vmatpush1.bf16.msra.mxu0 0
    %2075 = vmatprep.subr.bf16.mxu0 0
    %2076 = vmatpush1.bf16.msra.mxu0 0
    %2077 = vmatprep.subr.bf16.mxu0 0
    %2078 = vmatpush1.bf16.msra.mxu0 0
    %2079 = vmatprep.subr.bf16.mxu0 0
    %2080 = vmatpush1.bf16.msra.mxu0 0
    %2081 = vmatprep.subr.bf16.mxu0 0
    %2082 = vmatpush1.bf16.msra.mxu0 0
    %2083 = vmatprep.subr.bf16.mxu0 0
    %2084 = vmatpush1.bf16.msra.mxu0 0
    %2085 = vmatprep.subr.bf16.mxu0 0
    %2086 = vmatpush1.bf16.msra.mxu0 0
    %2087 = vmatprep.subr.bf16.mxu0 0
    %2088 = vmatpush1.bf16.msra.mxu0 0
    %2089 = vmatprep.mubr.bf16.mxu0 0
    %2090 = vmatmul.mubr.bf16.gmra.mrb[0].mxu0 %v1864
    %v2091 = vpop.f32.mrb[0].mxu0
    %v2092 = vadd.f32 %v1789, %v2091
    %v2093 = vpop.f32.mrb[0].mxu0
    %v2094 = vadd.f32 %v1791, %v2093
    %v2095 = vpop.f32.mrb[0].mxu0
    %v2096 = vpop.f32.mrb[0].mxu0
    %2097 = vdwg.mxu0
    %2098 = vmatprep.subr.bf16.mxu0 %v1996
    %2099 = vmatpush1.bf16.msra.mxu0 %v1995
    %2100 = vmatprep.subr.bf16.mxu0 %v2000
    %2101 = vmatpush1.bf16.msra.mxu0 %v1999
    %2102 = vmatprep.subr.bf16.mxu0 %v2004
    %2103 = vmatpush1.bf16.msra.mxu0 %v2003
    %2104 = vmatprep.subr.bf16.mxu0 %v2008
    %2105 = vmatpush1.bf16.msra.mxu0 %v2007
    %2106 = vmatprep.subr.bf16.mxu0 %v2012
    %2107 = vmatpush1.bf16.msra.mxu0 %v2011
    %2108 = vmatprep.subr.bf16.mxu0 %v2016
    %2109 = vmatpush1.bf16.msra.mxu0 %v2015
    %2110 = vmatprep.subr.bf16.mxu0 %v2020
    %2111 = vmatpush1.bf16.msra.mxu0 %v2019
    %2112 = vmatprep.subr.bf16.mxu0 %v2024
    %2113 = vmatpush1.bf16.msra.mxu0 %v2023
    %2114 = vmatprep.subr.bf16.mxu0 0
    %2115 = vmatpush1.bf16.msra.mxu0 0
    %2116 = vmatprep.subr.bf16.mxu0 0
    %2117 = vmatpush1.bf16.msra.mxu0 0
    %2118 = vmatprep.subr.bf16.mxu0 0
    %2119 = vmatpush1.bf16.msra.mxu0 0
    %2120 = vmatprep.subr.bf16.mxu0 0
    %2121 = vmatpush1.bf16.msra.mxu0 0
    %2122 = vmatprep.subr.bf16.mxu0 0
    %2123 = vmatpush1.bf16.msra.mxu0 0
    %2124 = vmatprep.subr.bf16.mxu0 0
    %2125 = vmatpush1.bf16.msra.mxu0 0
    %2126 = vmatprep.subr.bf16.mxu0 0
    %2127 = vmatpush1.bf16.msra.mxu0 0
    %2128 = vmatprep.subr.bf16.mxu0 0
    %2129 = vmatpush1.bf16.msra.mxu0 0
    %2130 = vmatprep.mubr.bf16.mxu0 0
    %2131 = vmatmul.mubr.bf16.gmra.mrb[0].mxu0 %v1864
    %v2132 = vpop.f32.mrb[0].mxu0
    %v2133 = vadd.f32 %v1830, %v2132
    %v2134 = vpop.f32.mrb[0].mxu0
    %v2135 = vadd.f32 %v1832, %v2134
    %v2136 = vpop.f32.mrb[0].mxu0
    %v2137 = vpop.f32.mrb[0].mxu0
    %2138 = vdwg.mxu0
    %v2140 = vlaneseq
    %v2141 = vshrl.u32 %v2140, 7
    %v2142 = vsub.s32 0, %v2141
    %v2143 = vrot.slane %v902, %v2142
    %v2144 = vlaneseq
    %v2145 = vshrl.u32 %v2144, 7
    %v2146 = vsub.s32 1, %v2145
    %v2147 = vrot.slane %v902, %v2146
    %v2148 = vlaneseq
    %v2149 = vshrl.u32 %v2148, 7
    %v2150 = vsub.s32 2, %v2149
    %v2151 = vrot.slane %v902, %v2150
    %v2152 = vlaneseq
    %v2153 = vshrl.u32 %v2152, 7
    %v2154 = vsub.s32 3, %v2153
    %v2155 = vrot.slane %v902, %v2154
    %v2160 = vadd.f32 %v2092, %v2143
    %v2161 = vadd.f32 %v2094, %v2147
    %v2162 = vadd.f32 %v2133, %v2151
    %v2163 = vadd.f32 %v2135, %v2155
    %v2164 = vxor.u32 %v2160, 2147483648
    %v2165 = vmul.f32 %v2164, 1.442695
    %v2166 = vpow.pop %v2165
    %v2167 = vadd.f32 %v2166, 1.0
    %v2168 = vrcp.pop %v2167
    %v2169 = vmul.f32 1.0, %v2168
    %v2170 = vxor.u32 %v2161, 2147483648
    %v2171 = vmul.f32 %v2170, 1.442695
    %v2172 = vpow.pop %v2171
    %v2173 = vadd.f32 %v2172, 1.0
    %v2174 = vrcp.pop %v2173
    %v2175 = vmul.f32 1.0, %v2174
    %v2176 = vtanh.pop %v2162
    %v2177 = vxor.u32 %v2163, 2147483648
    %v2178 = vmul.f32 %v2177, 1.442695
    %v2179 = vpow.pop %v2178
    %v2180 = vadd.f32 %v2179, 1.0
    %v2181 = vrcp.pop %v2180
    %v2182 = vmul.f32 1.0, %v2181
    %v2183 = vmul.f32 %v2175, 0.0
    %v2184 = vmul.f32 %v2169, %v2176
    %v2185 = vadd.f32 %v2183, %v2184
    %v2186 = vtanh.pop %v2185
    %v2187 = vmul.f32 %v2182, %v2186
    %v2188 = vpack.c.bf16 %v2187, %v2187
    %2189 = vmatprep.subr.bf16.mxu0 %v1417
    %2190 = vmatpush1.bf16.msra.mxu0 %v1416
    %2191 = vmatprep.subr.bf16.mxu0 %v1425
    %2192 = vmatpush1.bf16.msra.mxu0 %v1424
    %2193 = vmatprep.subr.bf16.mxu0 %v1433
    %2194 = vmatpush1.bf16.msra.mxu0 %v1432
    %2195 = vmatprep.subr.bf16.mxu0 %v1441
    %2196 = vmatpush1.bf16.msra.mxu0 %v1440
    %2197 = vmatprep.subr.bf16.mxu0 %v1449
    %2198 = vmatpush1.bf16.msra.mxu0 %v1448
    %2199 = vmatprep.subr.bf16.mxu0 %v1457
    %2200 = vmatpush1.bf16.msra.mxu0 %v1456
    %2201 = vmatprep.subr.bf16.mxu0 %v1465
    %2202 = vmatpush1.bf16.msra.mxu0 %v1464
    %2203 = vmatprep.subr.bf16.mxu0 %v1473
    %2204 = vmatpush1.bf16.msra.mxu0 %v1472
    %2205 = vmatprep.subr.bf16.mxu0 %v1481
    %2206 = vmatpush1.bf16.msra.mxu0 %v1480
    %2207 = vmatprep.subr.bf16.mxu0 %v1489
    %2208 = vmatpush1.bf16.msra.mxu0 %v1488
    %2209 = vmatprep.subr.bf16.mxu0 %v1497
    %2210 = vmatpush1.bf16.msra.mxu0 %v1496
    %2211 = vmatprep.subr.bf16.mxu0 %v1505
    %2212 = vmatpush1.bf16.msra.mxu0 %v1504
    %2213 = vmatprep.subr.bf16.mxu0 %v1513
    %2214 = vmatpush1.bf16.msra.mxu0 %v1512
    %2215 = vmatprep.subr.bf16.mxu0 %v1521
    %2216 = vmatpush1.bf16.msra.mxu0 %v1520
    %2217 = vmatprep.subr.bf16.mxu0 %v1529
    %2218 = vmatpush1.bf16.msra.mxu0 %v1528
    %2219 = vmatprep.subr.bf16.mxu0 %v1537
    %2220 = vmatpush1.bf16.msra.mxu0 %v1536
    %2221 = vmatprep.mubr.bf16.mxu0 %v2188
    %2222 = vmatmul.mubr.bf16.gmra.mrb[0].mxu0 %v1864
    %v2223 = vpop.f32.mrb[0].mxu0
    %v2224 = vadd.f32 0.0, %v2223
    %v2225 = vpop.f32.mrb[0].mxu0
    %v2226 = vadd.f32 0.0, %v2225
    %v2227 = vpop.f32.mrb[0].mxu0
    %v2228 = vpop.f32.mrb[0].mxu0
    %2229 = vdwg.mxu0
    %2230 = vmatprep.subr.bf16.mxu0 %v1419
    %2231 = vmatpush1.bf16.msra.mxu0 %v1418
    %2232 = vmatprep.subr.bf16.mxu0 %v1427
    %2233 = vmatpush1.bf16.msra.mxu0 %v1426
    %2234 = vmatprep.subr.bf16.mxu0 %v1435
    %2235 = vmatpush1.bf16.msra.mxu0 %v1434
    %2236 = vmatprep.subr.bf16.mxu0 %v1443
    %2237 = vmatpush1.bf16.msra.mxu0 %v1442
    %2238 = vmatprep.subr.bf16.mxu0 %v1451
    %2239 = vmatpush1.bf16.msra.mxu0 %v1450
    %2240 = vmatprep.subr.bf16.mxu0 %v1459
    %2241 = vmatpush1.bf16.msra.mxu0 %v1458
    %2242 = vmatprep.subr.bf16.mxu0 %v1467
    %2243 = vmatpush1.bf16.msra.mxu0 %v1466
    %2244 = vmatprep.subr.bf16.mxu0 %v1475
    %2245 = vmatpush1.bf16.msra.mxu0 %v1474
    %2246 = vmatprep.subr.bf16.mxu0 %v1483
    %2247 = vmatpush1.bf16.msra.mxu0 %v1482
    %2248 = vmatprep.subr.bf16.mxu0 %v1491
    %2249 = vmatpush1.bf16.msra.mxu0 %v1490
    %2250 = vmatprep.subr.bf16.mxu0 %v1499
    %2251 = vmatpush1.bf16.msra.mxu0 %v1498
    %2252 = vmatprep.subr.bf16.mxu0 %v1507
    %2253 = vmatpush1.bf16.msra.mxu0 %v1506
    %2254 = vmatprep.subr.bf16.mxu0 %v1515
    %2255 = vmatpush1.bf16.msra.mxu0 %v1514
    %2256 = vmatprep.subr.bf16.mxu0 %v1523
    %2257 = vmatpush1.bf16.msra.mxu0 %v1522
    %2258 = vmatprep.subr.bf16.mxu0 %v1531
    %2259 = vmatpush1.bf16.msra.mxu0 %v1530
    %2260 = vmatprep.subr.bf16.mxu0 %v1539
    %2261 = vmatpush1.bf16.msra.mxu0 %v1538
    %2262 = vmatprep.mubr.bf16.mxu0 %v2188
    %2263 = vmatmul.mubr.bf16.gmra.mrb[0].mxu0 %v1864
    %v2264 = vpop.f32.mrb[0].mxu0
    %v2265 = vadd.f32 0.0, %v2264
    %v2266 = vpop.f32.mrb[0].mxu0
    %v2267 = vadd.f32 0.0, %v2266
    %v2268 = vpop.f32.mrb[0].mxu0
    %v2269 = vpop.f32.mrb[0].mxu0
    %2270 = vdwg.mxu0
    %2271 = vmatprep.subr.bf16.mxu0 %v1421
    %2272 = vmatpush1.bf16.msra.mxu0 %v1420
    %2273 = vmatprep.subr.bf16.mxu0 %v1429
    %2274 = vmatpush1.bf16.msra.mxu0 %v1428
    %2275 = vmatprep.subr.bf16.mxu0 %v1437
    %2276 = vmatpush1.bf16.msra.mxu0 %v1436
    %2277 = vmatprep.subr.bf16.mxu0 %v1445
    %2278 = vmatpush1.bf16.msra.mxu0 %v1444
    %2279 = vmatprep.subr.bf16.mxu0 %v1453
    %2280 = vmatpush1.bf16.msra.mxu0 %v1452
    %2281 = vmatprep.subr.bf16.mxu0 %v1461
    %2282 = vmatpush1.bf16.msra.mxu0 %v1460
    %2283 = vmatprep.subr.bf16.mxu0 %v1469
    %2284 = vmatpush1.bf16.msra.mxu0 %v1468
    %2285 = vmatprep.subr.bf16.mxu0 %v1477
    %2286 = vmatpush1.bf16.msra.mxu0 %v1476
    %2287 = vmatprep.subr.bf16.mxu0 %v1485
    %2288 = vmatpush1.bf16.msra.mxu0 %v1484
    %2289 = vmatprep.subr.bf16.mxu0 %v1493
    %2290 = vmatpush1.bf16.msra.mxu0 %v1492
    %2291 = vmatprep.subr.bf16.mxu0 %v1501
    %2292 = vmatpush1.bf16.msra.mxu0 %v1500
    %2293 = vmatprep.subr.bf16.mxu0 %v1509
    %2294 = vmatpush1.bf16.msra.mxu0 %v1508
    %2295 = vmatprep.subr.bf16.mxu0 %v1517
    %2296 = vmatpush1.bf16.msra.mxu0 %v1516
    %2297 = vmatprep.subr.bf16.mxu0 %v1525
    %2298 = vmatpush1.bf16.msra.mxu0 %v1524
    %2299 = vmatprep.subr.bf16.mxu0 %v1533
    %2300 = vmatpush1.bf16.msra.mxu0 %v1532
    %2301 = vmatprep.subr.bf16.mxu0 %v1541
    %2302 = vmatpush1.bf16.msra.mxu0 %v1540
    %2303 = vmatprep.mubr.bf16.mxu0 %v2188
    %2304 = vmatmul.mubr.bf16.gmra.mrb[0].mxu0 %v1864
    %v2305 = vpop.f32.mrb[0].mxu0
    %v2306 = vadd.f32 0.0, %v2305
    %v2307 = vpop.f32.mrb[0].mxu0
    %v2308 = vadd.f32 0.0, %v2307
    %v2309 = vpop.f32.mrb[0].mxu0
    %v2310 = vpop.f32.mrb[0].mxu0
    %2311 = vdwg.mxu0
    %2312 = vmatprep.subr.bf16.mxu0 %v1423
    %2313 = vmatpush1.bf16.msra.mxu0 %v1422
    %2314 = vmatprep.subr.bf16.mxu0 %v1431
    %2315 = vmatpush1.bf16.msra.mxu0 %v1430
    %2316 = vmatprep.subr.bf16.mxu0 %v1439
    %2317 = vmatpush1.bf16.msra.mxu0 %v1438
    %2318 = vmatprep.subr.bf16.mxu0 %v1447
    %2319 = vmatpush1.bf16.msra.mxu0 %v1446
    %2320 = vmatprep.subr.bf16.mxu0 %v1455
    %2321 = vmatpush1.bf16.msra.mxu0 %v1454
    %2322 = vmatprep.subr.bf16.mxu0 %v1463
    %2323 = vmatpush1.bf16.msra.mxu0 %v1462
    %2324 = vmatprep.subr.bf16.mxu0 %v1471
    %2325 = vmatpush1.bf16.msra.mxu0 %v1470
    %2326 = vmatprep.subr.bf16.mxu0 %v1479
    %2327 = vmatpush1.bf16.msra.mxu0 %v1478
    %2328 = vmatprep.subr.bf16.mxu0 %v1487
    %2329 = vmatpush1.bf16.msra.mxu0 %v1486
    %2330 = vmatprep.subr.bf16.mxu0 %v1495
    %2331 = vmatpush1.bf16.msra.mxu0 %v1494
    %2332 = vmatprep.subr.bf16.mxu0 %v1503
    %2333 = vmatpush1.bf16.msra.mxu0 %v1502
    %2334 = vmatprep.subr.bf16.mxu0 %v1511
    %2335 = vmatpush1.bf16.msra.mxu0 %v1510
    %2336 = vmatprep.subr.bf16.mxu0 %v1519
    %2337 = vmatpush1.bf16.msra.mxu0 %v1518
    %2338 = vmatprep.subr.bf16.mxu0 %v1527
    %2339 = vmatpush1.bf16.msra.mxu0 %v1526
    %2340 = vmatprep.subr.bf16.mxu0 %v1535
    %2341 = vmatpush1.bf16.msra.mxu0 %v1534
    %2342 = vmatprep.subr.bf16.mxu0 %v1543
    %2343 = vmatpush1.bf16.msra.mxu0 %v1542
    %2344 = vmatprep.mubr.bf16.mxu0 %v2188
    %2345 = vmatmul.mubr.bf16.gmra.mrb[0].mxu0 %v1864
    %v2346 = vpop.f32.mrb[0].mxu0
    %v2347 = vadd.f32 0.0, %v2346
    %v2348 = vpop.f32.mrb[0].mxu0
    %v2349 = vadd.f32 0.0, %v2348
    %v2350 = vpop.f32.mrb[0].mxu0
    %v2351 = vpop.f32.mrb[0].mxu0
    %2352 = vdwg.mxu0
    %v2357 = vrot.slane %v2224, 6
    %v2358 = vrot.slane %v2226, 6
    %v2359 = vrot.slane %v2265, 6
    %v2360 = vrot.slane %v2267, 6
    %v2365 = vadd.f32 %v850, %v2357
    %v2366 = vadd.f32 %v852, %v2358
    %v2367 = vadd.f32 %v893, %v2359
    %v2368 = vadd.f32 %v895, %v2360
    %v2369 = vxor.u32 %v2365, 2147483648
    %v2370 = vmul.f32 %v2369, 1.442695
    %v2371 = vpow.pop %v2370
    %v2372 = vadd.f32 %v2371, 1.0
    %v2373 = vrcp.pop %v2372
    %v2374 = vmul.f32 1.0, %v2373
    %v2375 = vxor.u32 %v2366, 2147483648
    %v2376 = vmul.f32 %v2375, 1.442695
    %v2377 = vpow.pop %v2376
    %v2378 = vadd.f32 %v2377, 1.0
    %v2379 = vrcp.pop %v2378
    %v2380 = vmul.f32 1.0, %v2379
    %v2381 = vtanh.pop %v2367
    %v2382 = vxor.u32 %v2368, 2147483648
    %v2383 = vmul.f32 %v2382, 1.442695
    %v2384 = vpow.pop %v2383
    %v2385 = vadd.f32 %v2384, 1.0
    %v2386 = vrcp.pop %v2385
    %v2387 = vmul.f32 1.0, %v2386
    %v2389 = vrot.slane %v1861, 6
    %v2391 = vmul.f32 %v2380, %v2389
    %v2392 = vmul.f32 %v2374, %v2381
    %v2393 = vadd.f32 %v2391, %v2392
    %v2394 = vtanh.pop %v2393
    %v2395 = vmul.f32 %v2387, %v2394
    %v2396 = vpack.c.bf16 %v2395, %v2395
    %v2398 = vrot.slane %v2396, 1
    %2400 = vmatprep.subr.bf16.mxu0 %v1994
    %2401 = vmatpush1.bf16.msra.mxu0 %v1993
    %2402 = vmatprep.subr.bf16.mxu0 %v1998
    %2403 = vmatpush1.bf16.msra.mxu0 %v1997
    %2404 = vmatprep.subr.bf16.mxu0 %v2002
    %2405 = vmatpush1.bf16.msra.mxu0 %v2001
    %2406 = vmatprep.subr.bf16.mxu0 %v2006
    %2407 = vmatpush1.bf16.msra.mxu0 %v2005
    %2408 = vmatprep.subr.bf16.mxu0 %v2010
    %2409 = vmatpush1.bf16.msra.mxu0 %v2009
    %2410 = vmatprep.subr.bf16.mxu0 %v2014
    %2411 = vmatpush1.bf16.msra.mxu0 %v2013
    %2412 = vmatprep.subr.bf16.mxu0 %v2018
    %2413 = vmatpush1.bf16.msra.mxu0 %v2017
    %2414 = vmatprep.subr.bf16.mxu0 %v2022
    %2415 = vmatpush1.bf16.msra.mxu0 %v2021
    %2416 = vmatprep.subr.bf16.mxu0 0
    %2417 = vmatpush1.bf16.msra.mxu0 0
    %2418 = vmatprep.subr.bf16.mxu0 0
    %2419 = vmatpush1.bf16.msra.mxu0 0
    %2420 = vmatprep.subr.bf16.mxu0 0
    %2421 = vmatpush1.bf16.msra.mxu0 0
    %2422 = vmatprep.subr.bf16.mxu0 0
    %2423 = vmatpush1.bf16.msra.mxu0 0
    %2424 = vmatprep.subr.bf16.mxu0 0
    %2425 = vmatpush1.bf16.msra.mxu0 0
    %2426 = vmatprep.subr.bf16.mxu0 0
    %2427 = vmatpush1.bf16.msra.mxu0 0
    %2428 = vmatprep.subr.bf16.mxu0 0
    %2429 = vmatpush1.bf16.msra.mxu0 0
    %2430 = vmatprep.subr.bf16.mxu0 0
    %2431 = vmatpush1.bf16.msra.mxu0 0
    %2432 = vmatprep.mubr.bf16.mxu0 0
    %2433 = vmatmul.mubr.bf16.gmra.mrb[0].mxu0 %v2398
    %v2434 = vpop.f32.mrb[0].mxu0
    %v2435 = vadd.f32 %v2306, %v2434
    %v2436 = vpop.f32.mrb[0].mxu0
    %v2437 = vadd.f32 %v2308, %v2436
    %v2438 = vpop.f32.mrb[0].mxu0
    %v2439 = vpop.f32.mrb[0].mxu0
    %2440 = vdwg.mxu0
    %2441 = vmatprep.subr.bf16.mxu0 %v1996
    %2442 = vmatpush1.bf16.msra.mxu0 %v1995
    %2443 = vmatprep.subr.bf16.mxu0 %v2000
    %2444 = vmatpush1.bf16.msra.mxu0 %v1999
    %2445 = vmatprep.subr.bf16.mxu0 %v2004
    %2446 = vmatpush1.bf16.msra.mxu0 %v2003
    %2447 = vmatprep.subr.bf16.mxu0 %v2008
    %2448 = vmatpush1.bf16.msra.mxu0 %v2007
    %2449 = vmatprep.subr.bf16.mxu0 %v2012
    %2450 = vmatpush1.bf16.msra.mxu0 %v2011
    %2451 = vmatprep.subr.bf16.mxu0 %v2016
    %2452 = vmatpush1.bf16.msra.mxu0 %v2015
    %2453 = vmatprep.subr.bf16.mxu0 %v2020
    %2454 = vmatpush1.bf16.msra.mxu0 %v2019
    %2455 = vmatprep.subr.bf16.mxu0 %v2024
    %2456 = vmatpush1.bf16.msra.mxu0 %v2023
    %2457 = vmatprep.subr.bf16.mxu0 0
    %2458 = vmatpush1.bf16.msra.mxu0 0
    %2459 = vmatprep.subr.bf16.mxu0 0
    %2460 = vmatpush1.bf16.msra.mxu0 0
    %2461 = vmatprep.subr.bf16.mxu0 0
    %2462 = vmatpush1.bf16.msra.mxu0 0
    %2463 = vmatprep.subr.bf16.mxu0 0
    %2464 = vmatpush1.bf16.msra.mxu0 0
    %2465 = vmatprep.subr.bf16.mxu0 0
    %2466 = vmatpush1.bf16.msra.mxu0 0
    %2467 = vmatprep.subr.bf16.mxu0 0
    %2468 = vmatpush1.bf16.msra.mxu0 0
    %2469 = vmatprep.subr.bf16.mxu0 0
    %2470 = vmatpush1.bf16.msra.mxu0 0
    %2471 = vmatprep.subr.bf16.mxu0 0
    %2472 = vmatpush1.bf16.msra.mxu0 0
    %2473 = vmatprep.mubr.bf16.mxu0 0
    %2474 = vmatmul.mubr.bf16.gmra.mrb[0].mxu0 %v2398
    %v2475 = vpop.f32.mrb[0].mxu0
    %v2476 = vadd.f32 %v2347, %v2475
    %v2477 = vpop.f32.mrb[0].mxu0
    %v2478 = vadd.f32 %v2349, %v2477
    %v2479 = vpop.f32.mrb[0].mxu0
    %v2480 = vpop.f32.mrb[0].mxu0
    %2481 = vdwg.mxu0
    %v2482 = vadd.f32 %v2435, %v2143
    %v2483 = vadd.f32 %v2437, %v2147
    %v2484 = vadd.f32 %v2476, %v2151
    %v2485 = vadd.f32 %v2478, %v2155
    %v2486 = vxor.u32 %v2482, 2147483648
    %v2487 = vmul.f32 %v2486, 1.442695
    %v2488 = vpow.pop %v2487
    %v2489 = vadd.f32 %v2488, 1.0
    %v2490 = vrcp.pop %v2489
    %v2491 = vmul.f32 1.0, %v2490
    %v2492 = vxor.u32 %v2483, 2147483648
    %v2493 = vmul.f32 %v2492, 1.442695
    %v2494 = vpow.pop %v2493
    %v2495 = vadd.f32 %v2494, 1.0
    %v2496 = vrcp.pop %v2495
    %v2497 = vmul.f32 1.0, %v2496
    %v2498 = vtanh.pop %v2484
    %v2499 = vxor.u32 %v2485, 2147483648
    %v2500 = vmul.f32 %v2499, 1.442695
    %v2501 = vpow.pop %v2500
    %v2502 = vadd.f32 %v2501, 1.0
    %v2503 = vrcp.pop %v2502
    %v2504 = vmul.f32 1.0, %v2503
    %v2505 = vmul.f32 %v2497, %v2185
    %v2506 = vmul.f32 %v2491, %v2498
    %v2507 = vadd.f32 %v2505, %v2506
    %v2508 = vtanh.pop %v2507
    %v2509 = vmul.f32 %v2504, %v2508
    %v2511 = vrot.slane %v2509, 6
    %v2513 = vpack.c.bf16 %v2511, %v2511
    %v2515 = vrot.slane %v2513, 1
    %2517 = vmatprep.subr.bf16.mxu0 %v1417
    %2518 = vmatpush1.bf16.msra.mxu0 %v1416
    %2519 = vmatprep.subr.bf16.mxu0 %v1425
    %2520 = vmatpush1.bf16.msra.mxu0 %v1424
    %2521 = vmatprep.subr.bf16.mxu0 %v1433
    %2522 = vmatpush1.bf16.msra.mxu0 %v1432
    %2523 = vmatprep.subr.bf16.mxu0 %v1441
    %2524 = vmatpush1.bf16.msra.mxu0 %v1440
    %2525 = vmatprep.subr.bf16.mxu0 %v1449
    %2526 = vmatpush1.bf16.msra.mxu0 %v1448
    %2527 = vmatprep.subr.bf16.mxu0 %v1457
    %2528 = vmatpush1.bf16.msra.mxu0 %v1456
    %2529 = vmatprep.subr.bf16.mxu0 %v1465
    %2530 = vmatpush1.bf16.msra.mxu0 %v1464
    %2531 = vmatprep.subr.bf16.mxu0 %v1473
    %2532 = vmatpush1.bf16.msra.mxu0 %v1472
    %2533 = vmatprep.subr.bf16.mxu0 %v1481
    %2534 = vmatpush1.bf16.msra.mxu0 %v1480
    %2535 = vmatprep.subr.bf16.mxu0 %v1489
    %2536 = vmatpush1.bf16.msra.mxu0 %v1488
    %2537 = vmatprep.subr.bf16.mxu0 %v1497
    %2538 = vmatpush1.bf16.msra.mxu0 %v1496
    %2539 = vmatprep.subr.bf16.mxu0 %v1505
    %2540 = vmatpush1.bf16.msra.mxu0 %v1504
    %2541 = vmatprep.subr.bf16.mxu0 %v1513
    %2542 = vmatpush1.bf16.msra.mxu0 %v1512
    %2543 = vmatprep.subr.bf16.mxu0 %v1521
    %2544 = vmatpush1.bf16.msra.mxu0 %v1520
    %2545 = vmatprep.subr.bf16.mxu0 %v1529
    %2546 = vmatpush1.bf16.msra.mxu0 %v1528
    %2547 = vmatprep.subr.bf16.mxu0 %v1537
    %2548 = vmatpush1.bf16.msra.mxu0 %v1536
    %2549 = vmatprep.mubr.bf16.mxu0 %v2515
    %2550 = vmatmul.mubr.bf16.gmra.mrb[0].mxu0 %v2398
    %v2551 = vpop.f32.mrb[0].mxu0
    %v2552 = vadd.f32 0.0, %v2551
    %v2553 = vpop.f32.mrb[0].mxu0
    %v2554 = vadd.f32 0.0, %v2553
    %v2555 = vpop.f32.mrb[0].mxu0
    %v2556 = vpop.f32.mrb[0].mxu0
    %2557 = vdwg.mxu0
    %2558 = vmatprep.subr.bf16.mxu0 %v1419
    %2559 = vmatpush1.bf16.msra.mxu0 %v1418
    %2560 = vmatprep.subr.bf16.mxu0 %v1427
    %2561 = vmatpush1.bf16.msra.mxu0 %v1426
    %2562 = vmatprep.subr.bf16.mxu0 %v1435
    %2563 = vmatpush1.bf16.msra.mxu0 %v1434
    %2564 = vmatprep.subr.bf16.mxu0 %v1443
    %2565 = vmatpush1.bf16.msra.mxu0 %v1442
    %2566 = vmatprep.subr.bf16.mxu0 %v1451
    %2567 = vmatpush1.bf16.msra.mxu0 %v1450
    %2568 = vmatprep.subr.bf16.mxu0 %v1459
    %2569 = vmatpush1.bf16.msra.mxu0 %v1458
    %2570 = vmatprep.subr.bf16.mxu0 %v1467
    %2571 = vmatpush1.bf16.msra.mxu0 %v1466
    %2572 = vmatprep.subr.bf16.mxu0 %v1475
    %2573 = vmatpush1.bf16.msra.mxu0 %v1474
    %2574 = vmatprep.subr.bf16.mxu0 %v1483
    %2575 = vmatpush1.bf16.msra.mxu0 %v1482
    %2576 = vmatprep.subr.bf16.mxu0 %v1491
    %2577 = vmatpush1.bf16.msra.mxu0 %v1490
    %2578 = vmatprep.subr.bf16.mxu0 %v1499
    %2579 = vmatpush1.bf16.msra.mxu0 %v1498
    %2580 = vmatprep.subr.bf16.mxu0 %v1507
    %2581 = vmatpush1.bf16.msra.mxu0 %v1506
    %2582 = vmatprep.subr.bf16.mxu0 %v1515
    %2583 = vmatpush1.bf16.msra.mxu0 %v1514
    %2584 = vmatprep.subr.bf16.mxu0 %v1523
    %2585 = vmatpush1.bf16.msra.mxu0 %v1522
    %2586 = vmatprep.subr.bf16.mxu0 %v1531
    %2587 = vmatpush1.bf16.msra.mxu0 %v1530
    %2588 = vmatprep.subr.bf16.mxu0 %v1539
    %2589 = vmatpush1.bf16.msra.mxu0 %v1538
    %2590 = vmatprep.mubr.bf16.mxu0 %v2515
    %2591 = vmatmul.mubr.bf16.gmra.mrb[0].mxu0 %v2398
    %v2592 = vpop.f32.mrb[0].mxu0
    %v2593 = vadd.f32 0.0, %v2592
    %v2594 = vpop.f32.mrb[0].mxu0
    %v2595 = vadd.f32 0.0, %v2594
    %v2596 = vpop.f32.mrb[0].mxu0
    %v2597 = vpop.f32.mrb[0].mxu0
    %2598 = vdwg.mxu0
    %2599 = vmatprep.subr.bf16.mxu0 %v1421
    %2600 = vmatpush1.bf16.msra.mxu0 %v1420
    %2601 = vmatprep.subr.bf16.mxu0 %v1429
    %2602 = vmatpush1.bf16.msra.mxu0 %v1428
    %2603 = vmatprep.subr.bf16.mxu0 %v1437
    %2604 = vmatpush1.bf16.msra.mxu0 %v1436
    %2605 = vmatprep.subr.bf16.mxu0 %v1445
    %2606 = vmatpush1.bf16.msra.mxu0 %v1444
    %2607 = vmatprep.subr.bf16.mxu0 %v1453
    %2608 = vmatpush1.bf16.msra.mxu0 %v1452
    %2609 = vmatprep.subr.bf16.mxu0 %v1461
    %2610 = vmatpush1.bf16.msra.mxu0 %v1460
    %2611 = vmatprep.subr.bf16.mxu0 %v1469
    %2612 = vmatpush1.bf16.msra.mxu0 %v1468
    %2613 = vmatprep.subr.bf16.mxu0 %v1477
    %2614 = vmatpush1.bf16.msra.mxu0 %v1476
    %2615 = vmatprep.subr.bf16.mxu0 %v1485
    %2616 = vmatpush1.bf16.msra.mxu0 %v1484
    %2617 = vmatprep.subr.bf16.mxu0 %v1493
    %2618 = vmatpush1.bf16.msra.mxu0 %v1492
    %2619 = vmatprep.subr.bf16.mxu0 %v1501
    %2620 = vmatpush1.bf16.msra.mxu0 %v1500
    %2621 = vmatprep.subr.bf16.mxu0 %v1509
    %2622 = vmatpush1.bf16.msra.mxu0 %v1508
    %2623 = vmatprep.subr.bf16.mxu0 %v1517
    %2624 = vmatpush1.bf16.msra.mxu0 %v1516
    %2625 = vmatprep.subr.bf16.mxu0 %v1525
    %2626 = vmatpush1.bf16.msra.mxu0 %v1524
    %2627 = vmatprep.subr.bf16.mxu0 %v1533
    %2628 = vmatpush1.bf16.msra.mxu0 %v1532
    %2629 = vmatprep.subr.bf16.mxu0 %v1541
    %2630 = vmatpush1.bf16.msra.mxu0 %v1540
    %2631 = vmatprep.mubr.bf16.mxu0 %v2515
    %2632 = vmatmul.mubr.bf16.gmra.mrb[0].mxu0 %v2398
    %v2633 = vpop.f32.mrb[0].mxu0
    %v2634 = vadd.f32 0.0, %v2633
    %v2635 = vpop.f32.mrb[0].mxu0
    %v2636 = vadd.f32 0.0, %v2635
    %v2637 = vpop.f32.mrb[0].mxu0
    %v2638 = vpop.f32.mrb[0].mxu0
    %2639 = vdwg.mxu0
    %2640 = vmatprep.subr.bf16.mxu0 %v1423
    %2641 = vmatpush1.bf16.msra.mxu0 %v1422
    %2642 = vmatprep.subr.bf16.mxu0 %v1431
    %2643 = vmatpush1.bf16.msra.mxu0 %v1430
    %2644 = vmatprep.subr.bf16.mxu0 %v1439
    %2645 = vmatpush1.bf16.msra.mxu0 %v1438
    %2646 = vmatprep.subr.bf16.mxu0 %v1447
    %2647 = vmatpush1.bf16.msra.mxu0 %v1446
    %2648 = vmatprep.subr.bf16.mxu0 %v1455
    %2649 = vmatpush1.bf16.msra.mxu0 %v1454
    %2650 = vmatprep.subr.bf16.mxu0 %v1463
    %2651 = vmatpush1.bf16.msra.mxu0 %v1462
    %2652 = vmatprep.subr.bf16.mxu0 %v1471
    %2653 = vmatpush1.bf16.msra.mxu0 %v1470
    %2654 = vmatprep.subr.bf16.mxu0 %v1479
    %2655 = vmatpush1.bf16.msra.mxu0 %v1478
    %2656 = vmatprep.subr.bf16.mxu0 %v1487
    %2657 = vmatpush1.bf16.msra.mxu0 %v1486
    %2658 = vmatprep.subr.bf16.mxu0 %v1495
    %2659 = vmatpush1.bf16.msra.mxu0 %v1494
    %2660 = vmatprep.subr.bf16.mxu0 %v1503
    %2661 = vmatpush1.bf16.msra.mxu0 %v1502
    %2662 = vmatprep.subr.bf16.mxu0 %v1511
    %2663 = vmatpush1.bf16.msra.mxu0 %v1510
    %2664 = vmatprep.subr.bf16.mxu0 %v1519
    %2665 = vmatpush1.bf16.msra.mxu0 %v1518
    %2666 = vmatprep.subr.bf16.mxu0 %v1527
    %2667 = vmatpush1.bf16.msra.mxu0 %v1526
    %2668 = vmatprep.subr.bf16.mxu0 %v1535
    %2669 = vmatpush1.bf16.msra.mxu0 %v1534
    %2670 = vmatprep.subr.bf16.mxu0 %v1543
    %2671 = vmatpush1.bf16.msra.mxu0 %v1542
    %2672 = vmatprep.mubr.bf16.mxu0 %v2515
    %2673 = vmatmul.mubr.bf16.gmra.mrb[0].mxu0 %v2398
    %v2674 = vpop.f32.mrb[0].mxu0
    %v2675 = vadd.f32 0.0, %v2674
    %v2676 = vpop.f32.mrb[0].mxu0
    %v2677 = vadd.f32 0.0, %v2676
    %v2678 = vpop.f32.mrb[0].mxu0
    %v2679 = vpop.f32.mrb[0].mxu0
    %2680 = vdwg.mxu0
    %v2685 = vrot.slane %v2552, 4
    %v2686 = vrot.slane %v2554, 4
    %v2687 = vrot.slane %v2593, 4
    %v2688 = vrot.slane %v2595, 4
    %v2693 = vadd.f32 %v850, %v2685
    %v2694 = vadd.f32 %v852, %v2686
    %v2695 = vadd.f32 %v893, %v2687
    %v2696 = vadd.f32 %v895, %v2688
    %v2697 = vxor.u32 %v2693, 2147483648
    %v2698 = vmul.f32 %v2697, 1.442695
    %v2699 = vpow.pop %v2698
    %v2700 = vadd.f32 %v2699, 1.0
    %v2701 = vrcp.pop %v2700
    %v2702 = vmul.f32 1.0, %v2701
    %v2703 = vxor.u32 %v2694, 2147483648
    %v2704 = vmul.f32 %v2703, 1.442695
    %v2705 = vpow.pop %v2704
    %v2706 = vadd.f32 %v2705, 1.0
    %v2707 = vrcp.pop %v2706
    %v2708 = vmul.f32 1.0, %v2707
    %v2709 = vtanh.pop %v2695
    %v2710 = vxor.u32 %v2696, 2147483648
    %v2711 = vmul.f32 %v2710, 1.442695
    %v2712 = vpow.pop %v2711
    %v2713 = vadd.f32 %v2712, 1.0
    %v2714 = vrcp.pop %v2713
    %v2715 = vmul.f32 1.0, %v2714
    %v2717 = vrot.slane %v2393, 6
    %v2719 = vmul.f32 %v2708, %v2717
    %v2720 = vmul.f32 %v2702, %v2709
    %v2721 = vadd.f32 %v2719, %v2720
    %v2722 = vtanh.pop %v2721
    %v2723 = vmul.f32 %v2715, %v2722
    %v2724 = vpack.c.bf16 %v2723, %v2723
    %v2726 = vrot.slane %v2724, 2
    %2728 = vmatprep.subr.bf16.mxu0 %v1994
    %2729 = vmatpush1.bf16.msra.mxu0 %v1993
    %2730 = vmatprep.subr.bf16.mxu0 %v1998
    %2731 = vmatpush1.bf16.msra.mxu0 %v1997
    %2732 = vmatprep.subr.bf16.mxu0 %v2002
    %2733 = vmatpush1.bf16.msra.mxu0 %v2001
    %2734 = vmatprep.subr.bf16.mxu0 %v2006
    %2735 = vmatpush1.bf16.msra.mxu0 %v2005
    %2736 = vmatprep.subr.bf16.mxu0 %v2010
    %2737 = vmatpush1.bf16.msra.mxu0 %v2009
    %2738 = vmatprep.subr.bf16.mxu0 %v2014
    %2739 = vmatpush1.bf16.msra.mxu0 %v2013
    %2740 = vmatprep.subr.bf16.mxu0 %v2018
    %2741 = vmatpush1.bf16.msra.mxu0 %v2017
    %2742 = vmatprep.subr.bf16.mxu0 %v2022
    %2743 = vmatpush1.bf16.msra.mxu0 %v2021
    %2744 = vmatprep.subr.bf16.mxu0 0
    %2745 = vmatpush1.bf16.msra.mxu0 0
    %2746 = vmatprep.subr.bf16.mxu0 0
    %2747 = vmatpush1.bf16.msra.mxu0 0
    %2748 = vmatprep.subr.bf16.mxu0 0
    %2749 = vmatpush1.bf16.msra.mxu0 0
    %2750 = vmatprep.subr.bf16.mxu0 0
    %2751 = vmatpush1.bf16.msra.mxu0 0
    %2752 = vmatprep.subr.bf16.mxu0 0
    %2753 = vmatpush1.bf16.msra.mxu0 0
    %2754 = vmatprep.subr.bf16.mxu0 0
    %2755 = vmatpush1.bf16.msra.mxu0 0
    %2756 = vmatprep.subr.bf16.mxu0 0
    %2757 = vmatpush1.bf16.msra.mxu0 0
    %2758 = vmatprep.subr.bf16.mxu0 0
    %2759 = vmatpush1.bf16.msra.mxu0 0
    %2760 = vmatprep.mubr.bf16.mxu0 0
    %2761 = vmatmul.mubr.bf16.gmra.mrb[0].mxu0 %v2726
    %v2762 = vpop.f32.mrb[0].mxu0
    %v2763 = vadd.f32 %v2634, %v2762
    %v2764 = vpop.f32.mrb[0].mxu0
    %v2765 = vadd.f32 %v2636, %v2764
    %v2766 = vpop.f32.mrb[0].mxu0
    %v2767 = vpop.f32.mrb[0].mxu0
    %2768 = vdwg.mxu0
    %2769 = vmatprep.subr.bf16.mxu0 %v1996
    %2770 = vmatpush1.bf16.msra.mxu0 %v1995
    %2771 = vmatprep.subr.bf16.mxu0 %v2000
    %2772 = vmatpush1.bf16.msra.mxu0 %v1999
    %2773 = vmatprep.subr.bf16.mxu0 %v2004
    %2774 = vmatpush1.bf16.msra.mxu0 %v2003
    %2775 = vmatprep.subr.bf16.mxu0 %v2008
    %2776 = vmatpush1.bf16.msra.mxu0 %v2007
    %2777 = vmatprep.subr.bf16.mxu0 %v2012
    %2778 = vmatpush1.bf16.msra.mxu0 %v2011
    %2779 = vmatprep.subr.bf16.mxu0 %v2016
    %2780 = vmatpush1.bf16.msra.mxu0 %v2015
    %2781 = vmatprep.subr.bf16.mxu0 %v2020
    %2782 = vmatpush1.bf16.msra.mxu0 %v2019
    %2783 = vmatprep.subr.bf16.mxu0 %v2024
    %2784 = vmatpush1.bf16.msra.mxu0 %v2023
    %2785 = vmatprep.subr.bf16.mxu0 0
    %2786 = vmatpush1.bf16.msra.mxu0 0
    %2787 = vmatprep.subr.bf16.mxu0 0
    %2788 = vmatpush1.bf16.msra.mxu0 0
    %2789 = vmatprep.subr.bf16.mxu0 0
    %2790 = vmatpush1.bf16.msra.mxu0 0
    %2791 = vmatprep.subr.bf16.mxu0 0
    %2792 = vmatpush1.bf16.msra.mxu0 0
    %2793 = vmatprep.subr.bf16.mxu0 0
    %2794 = vmatpush1.bf16.msra.mxu0 0
    %2795 = vmatprep.subr.bf16.mxu0 0
    %2796 = vmatpush1.bf16.msra.mxu0 0
    %2797 = vmatprep.subr.bf16.mxu0 0
    %2798 = vmatpush1.bf16.msra.mxu0 0
    %2799 = vmatprep.subr.bf16.mxu0 0
    %2800 = vmatpush1.bf16.msra.mxu0 0
    %2801 = vmatprep.mubr.bf16.mxu0 0
    %2802 = vmatmul.mubr.bf16.gmra.mrb[0].mxu0 %v2726
    %v2803 = vpop.f32.mrb[0].mxu0
    %v2804 = vadd.f32 %v2675, %v2803
    %v2805 = vpop.f32.mrb[0].mxu0
    %v2806 = vadd.f32 %v2677, %v2805
    %v2807 = vpop.f32.mrb[0].mxu0
    %v2808 = vpop.f32.mrb[0].mxu0
    %2809 = vdwg.mxu0
    %v2810 = vadd.f32 %v2763, %v2143
    %v2811 = vadd.f32 %v2765, %v2147
    %v2812 = vadd.f32 %v2804, %v2151
    %v2813 = vadd.f32 %v2806, %v2155
    %v2814 = vxor.u32 %v2810, 2147483648
    %v2815 = vmul.f32 %v2814, 1.442695
    %v2816 = vpow.pop %v2815
    %v2817 = vadd.f32 %v2816, 1.0
    %v2818 = vrcp.pop %v2817
    %v2819 = vmul.f32 1.0, %v2818
    %v2820 = vxor.u32 %v2811, 2147483648
    %v2821 = vmul.f32 %v2820, 1.442695
    %v2822 = vpow.pop %v2821
    %v2823 = vadd.f32 %v2822, 1.0
    %v2824 = vrcp.pop %v2823
    %v2825 = vmul.f32 1.0, %v2824
    %v2826 = vtanh.pop %v2812
    %v2827 = vxor.u32 %v2813, 2147483648
    %v2828 = vmul.f32 %v2827, 1.442695
    %v2829 = vpow.pop %v2828
    %v2830 = vadd.f32 %v2829, 1.0
    %v2831 = vrcp.pop %v2830
    %v2832 = vmul.f32 1.0, %v2831
    %v2833 = vmul.f32 %v2825, %v2507
    %v2834 = vmul.f32 %v2819, %v2826
    %v2835 = vadd.f32 %v2833, %v2834
    %v2836 = vtanh.pop %v2835
    %v2837 = vmul.f32 %v2832, %v2836
    %v2839 = vrot.slane %v2837, 4
    %v2841 = vpack.c.bf16 %v2839, %v2839
    %v2843 = vrot.slane %v2841, 2
    %2845 = vmatprep.subr.bf16.mxu0 %v1417
    %2846 = vmatpush1.bf16.msra.mxu0 %v1416
    %2847 = vmatprep.subr.bf16.mxu0 %v1425
    %2848 = vmatpush1.bf16.msra.mxu0 %v1424
    %2849 = vmatprep.subr.bf16.mxu0 %v1433
    %2850 = vmatpush1.bf16.msra.mxu0 %v1432
    %2851 = vmatprep.subr.bf16.mxu0 %v1441
    %2852 = vmatpush1.bf16.msra.mxu0 %v1440
    %2853 = vmatprep.subr.bf16.mxu0 %v1449
    %2854 = vmatpush1.bf16.msra.mxu0 %v1448
    %2855 = vmatprep.subr.bf16.mxu0 %v1457
    %2856 = vmatpush1.bf16.msra.mxu0 %v1456
    %2857 = vmatprep.subr.bf16.mxu0 %v1465
    %2858 = vmatpush1.bf16.msra.mxu0 %v1464
    %2859 = vmatprep.subr.bf16.mxu0 %v1473
    %2860 = vmatpush1.bf16.msra.mxu0 %v1472
    %2861 = vmatprep.subr.bf16.mxu0 %v1481
    %2862 = vmatpush1.bf16.msra.mxu0 %v1480
    %2863 = vmatprep.subr.bf16.mxu0 %v1489
    %2864 = vmatpush1.bf16.msra.mxu0 %v1488
    %2865 = vmatprep.subr.bf16.mxu0 %v1497
    %2866 = vmatpush1.bf16.msra.mxu0 %v1496
    %2867 = vmatprep.subr.bf16.mxu0 %v1505
    %2868 = vmatpush1.bf16.msra.mxu0 %v1504
    %2869 = vmatprep.subr.bf16.mxu0 %v1513
    %2870 = vmatpush1.bf16.msra.mxu0 %v1512
    %2871 = vmatprep.subr.bf16.mxu0 %v1521
    %2872 = vmatpush1.bf16.msra.mxu0 %v1520
    %2873 = vmatprep.subr.bf16.mxu0 %v1529
    %2874 = vmatpush1.bf16.msra.mxu0 %v1528
    %2875 = vmatprep.subr.bf16.mxu0 %v1537
    %2876 = vmatpush1.bf16.msra.mxu0 %v1536
    %2877 = vmatprep.mubr.bf16.mxu0 %v2843
    %2878 = vmatmul.mubr.bf16.gmra.mrb[0].mxu0 %v2726
    %v2879 = vpop.f32.mrb[0].mxu0
    %v2880 = vadd.f32 0.0, %v2879
    %v2881 = vpop.f32.mrb[0].mxu0
    %v2882 = vadd.f32 0.0, %v2881
    %v2883 = vpop.f32.mrb[0].mxu0
    %v2884 = vpop.f32.mrb[0].mxu0
    %2885 = vdwg.mxu0
    %2886 = vmatprep.subr.bf16.mxu0 %v1419
    %2887 = vmatpush1.bf16.msra.mxu0 %v1418
    %2888 = vmatprep.subr.bf16.mxu0 %v1427
    %2889 = vmatpush1.bf16.msra.mxu0 %v1426
    %2890 = vmatprep.subr.bf16.mxu0 %v1435
    %2891 = vmatpush1.bf16.msra.mxu0 %v1434
    %2892 = vmatprep.subr.bf16.mxu0 %v1443
    %2893 = vmatpush1.bf16.msra.mxu0 %v1442
    %2894 = vmatprep.subr.bf16.mxu0 %v1451
    %2895 = vmatpush1.bf16.msra.mxu0 %v1450
    %2896 = vmatprep.subr.bf16.mxu0 %v1459
    %2897 = vmatpush1.bf16.msra.mxu0 %v1458
    %2898 = vmatprep.subr.bf16.mxu0 %v1467
    %2899 = vmatpush1.bf16.msra.mxu0 %v1466
    %2900 = vmatprep.subr.bf16.mxu0 %v1475
    %2901 = vmatpush1.bf16.msra.mxu0 %v1474
    %2902 = vmatprep.subr.bf16.mxu0 %v1483
    %2903 = vmatpush1.bf16.msra.mxu0 %v1482
    %2904 = vmatprep.subr.bf16.mxu0 %v1491
    %2905 = vmatpush1.bf16.msra.mxu0 %v1490
    %2906 = vmatprep.subr.bf16.mxu0 %v1499
    %2907 = vmatpush1.bf16.msra.mxu0 %v1498
    %2908 = vmatprep.subr.bf16.mxu0 %v1507
    %2909 = vmatpush1.bf16.msra.mxu0 %v1506
    %2910 = vmatprep.subr.bf16.mxu0 %v1515
    %2911 = vmatpush1.bf16.msra.mxu0 %v1514
    %2912 = vmatprep.subr.bf16.mxu0 %v1523
    %2913 = vmatpush1.bf16.msra.mxu0 %v1522
    %2914 = vmatprep.subr.bf16.mxu0 %v1531
    %2915 = vmatpush1.bf16.msra.mxu0 %v1530
    %2916 = vmatprep.subr.bf16.mxu0 %v1539
    %2917 = vmatpush1.bf16.msra.mxu0 %v1538
    %2918 = vmatprep.mubr.bf16.mxu0 %v2843
    %2919 = vmatmul.mubr.bf16.gmra.mrb[0].mxu0 %v2726
    %v2920 = vpop.f32.mrb[0].mxu0
    %v2921 = vadd.f32 0.0, %v2920
    %v2922 = vpop.f32.mrb[0].mxu0
    %v2923 = vadd.f32 0.0, %v2922
    %v2924 = vpop.f32.mrb[0].mxu0
    %v2925 = vpop.f32.mrb[0].mxu0
    %2926 = vdwg.mxu0
    %2927 = vmatprep.subr.bf16.mxu0 %v1421
    %2928 = vmatpush1.bf16.msra.mxu0 %v1420
    %2929 = vmatprep.subr.bf16.mxu0 %v1429
    %2930 = vmatpush1.bf16.msra.mxu0 %v1428
    %2931 = vmatprep.subr.bf16.mxu0 %v1437
    %2932 = vmatpush1.bf16.msra.mxu0 %v1436
    %2933 = vmatprep.subr.bf16.mxu0 %v1445
    %2934 = vmatpush1.bf16.msra.mxu0 %v1444
    %2935 = vmatprep.subr.bf16.mxu0 %v1453
    %2936 = vmatpush1.bf16.msra.mxu0 %v1452
    %2937 = vmatprep.subr.bf16.mxu0 %v1461
    %2938 = vmatpush1.bf16.msra.mxu0 %v1460
    %2939 = vmatprep.subr.bf16.mxu0 %v1469
    %2940 = vmatpush1.bf16.msra.mxu0 %v1468
    %2941 = vmatprep.subr.bf16.mxu0 %v1477
    %2942 = vmatpush1.bf16.msra.mxu0 %v1476
    %2943 = vmatprep.subr.bf16.mxu0 %v1485
    %2944 = vmatpush1.bf16.msra.mxu0 %v1484
    %2945 = vmatprep.subr.bf16.mxu0 %v1493
    %2946 = vmatpush1.bf16.msra.mxu0 %v1492
    %2947 = vmatprep.subr.bf16.mxu0 %v1501
    %2948 = vmatpush1.bf16.msra.mxu0 %v1500
    %2949 = vmatprep.subr.bf16.mxu0 %v1509
    %2950 = vmatpush1.bf16.msra.mxu0 %v1508
    %2951 = vmatprep.subr.bf16.mxu0 %v1517
    %2952 = vmatpush1.bf16.msra.mxu0 %v1516
    %2953 = vmatprep.subr.bf16.mxu0 %v1525
    %2954 = vmatpush1.bf16.msra.mxu0 %v1524
    %2955 = vmatprep.subr.bf16.mxu0 %v1533
    %2956 = vmatpush1.bf16.msra.mxu0 %v1532
    %2957 = vmatprep.subr.bf16.mxu0 %v1541
    %2958 = vmatpush1.bf16.msra.mxu0 %v1540
    %2959 = vmatprep.mubr.bf16.mxu0 %v2843
    %2960 = vmatmul.mubr.bf16.gmra.mrb[0].mxu0 %v2726
    %v2961 = vpop.f32.mrb[0].mxu0
    %v2962 = vadd.f32 0.0, %v2961
    %v2963 = vpop.f32.mrb[0].mxu0
    %v2964 = vadd.f32 0.0, %v2963
    %v2965 = vpop.f32.mrb[0].mxu0
    %v2966 = vpop.f32.mrb[0].mxu0
    %2967 = vdwg.mxu0
    %2968 = vmatprep.subr.bf16.mxu0 %v1423
    %2969 = vmatpush1.bf16.msra.mxu0 %v1422
    %2970 = vmatprep.subr.bf16.mxu0 %v1431
    %2971 = vmatpush1.bf16.msra.mxu0 %v1430
    %2972 = vmatprep.subr.bf16.mxu0 %v1439
    %2973 = vmatpush1.bf16.msra.mxu0 %v1438
    %2974 = vmatprep.subr.bf16.mxu0 %v1447
    %2975 = vmatpush1.bf16.msra.mxu0 %v1446
    %2976 = vmatprep.subr.bf16.mxu0 %v1455
    %2977 = vmatpush1.bf16.msra.mxu0 %v1454
    %2978 = vmatprep.subr.bf16.mxu0 %v1463
    %2979 = vmatpush1.bf16.msra.mxu0 %v1462
    %2980 = vmatprep.subr.bf16.mxu0 %v1471
    %2981 = vmatpush1.bf16.msra.mxu0 %v1470
    %2982 = vmatprep.subr.bf16.mxu0 %v1479
    %2983 = vmatpush1.bf16.msra.mxu0 %v1478
    %2984 = vmatprep.subr.bf16.mxu0 %v1487
    %2985 = vmatpush1.bf16.msra.mxu0 %v1486
    %2986 = vmatprep.subr.bf16.mxu0 %v1495
    %2987 = vmatpush1.bf16.msra.mxu0 %v1494
    %2988 = vmatprep.subr.bf16.mxu0 %v1503
    %2989 = vmatpush1.bf16.msra.mxu0 %v1502
    %2990 = vmatprep.subr.bf16.mxu0 %v1511
    %2991 = vmatpush1.bf16.msra.mxu0 %v1510
    %2992 = vmatprep.subr.bf16.mxu0 %v1519
    %2993 = vmatpush1.bf16.msra.mxu0 %v1518
    %2994 = vmatprep.subr.bf16.mxu0 %v1527
    %2995 = vmatpush1.bf16.msra.mxu0 %v1526
    %2996 = vmatprep.subr.bf16.mxu0 %v1535
    %2997 = vmatpush1.bf16.msra.mxu0 %v1534
    %2998 = vmatprep.subr.bf16.mxu0 %v1543
    %2999 = vmatpush1.bf16.msra.mxu0 %v1542
    %3000 = vmatprep.mubr.bf16.mxu0 %v2843
    %3001 = vmatmul.mubr.bf16.gmra.mrb[0].mxu0 %v2726
    %v3002 = vpop.f32.mrb[0].mxu0
    %v3003 = vadd.f32 0.0, %v3002
    %v3004 = vpop.f32.mrb[0].mxu0
    %v3005 = vadd.f32 0.0, %v3004
    %v3006 = vpop.f32.mrb[0].mxu0
    %v3007 = vpop.f32.mrb[0].mxu0
    %3008 = vdwg.mxu0
    %v3013 = vrot.slane %v2880, 2
    %v3014 = vrot.slane %v2882, 2
    %v3015 = vrot.slane %v2921, 2
    %v3016 = vrot.slane %v2923, 2
    %v3021 = vadd.f32 %v850, %v3013
    %v3022 = vadd.f32 %v852, %v3014
    %v3023 = vadd.f32 %v893, %v3015
    %v3024 = vadd.f32 %v895, %v3016
    %v3025 = vxor.u32 %v3021, 2147483648
    %v3026 = vmul.f32 %v3025, 1.442695
    %v3027 = vpow.pop %v3026
    %v3028 = vadd.f32 %v3027, 1.0
    %v3029 = vrcp.pop %v3028
    %v3030 = vmul.f32 1.0, %v3029
    %v3031 = vxor.u32 %v3022, 2147483648
    %v3032 = vmul.f32 %v3031, 1.442695
    %v3033 = vpow.pop %v3032
    %v3034 = vadd.f32 %v3033, 1.0
    %v3035 = vrcp.pop %v3034
    %v3036 = vmul.f32 1.0, %v3035
    %v3037 = vtanh.pop %v3023
    %v3038 = vxor.u32 %v3024, 2147483648
    %v3039 = vmul.f32 %v3038, 1.442695
    %v3040 = vpow.pop %v3039
    %v3041 = vadd.f32 %v3040, 1.0
    %v3042 = vrcp.pop %v3041
    %v3043 = vmul.f32 1.0, %v3042
    %v3045 = vrot.slane %v2721, 6
    %v3047 = vmul.f32 %v3036, %v3045
    %v3048 = vmul.f32 %v3030, %v3037
    %v3049 = vadd.f32 %v3047, %v3048
    %v3050 = vtanh.pop %v3049
    %v3051 = vmul.f32 %v3043, %v3050
    %v3052 = vpack.c.bf16 %v3051, %v3051
    %v3054 = vrot.slane %v3052, 3
    %3056 = vmatprep.subr.bf16.mxu0 %v1994
    %3057 = vmatpush1.bf16.msra.mxu0 %v1993
    %3058 = vmatprep.subr.bf16.mxu0 %v1998
    %3059 = vmatpush1.bf16.msra.mxu0 %v1997
    %3060 = vmatprep.subr.bf16.mxu0 %v2002
    %3061 = vmatpush1.bf16.msra.mxu0 %v2001
    %3062 = vmatprep.subr.bf16.mxu0 %v2006
    %3063 = vmatpush1.bf16.msra.mxu0 %v2005
    %3064 = vmatprep.subr.bf16.mxu0 %v2010
    %3065 = vmatpush1.bf16.msra.mxu0 %v2009
    %3066 = vmatprep.subr.bf16.mxu0 %v2014
    %3067 = vmatpush1.bf16.msra.mxu0 %v2013
    %3068 = vmatprep.subr.bf16.mxu0 %v2018
    %3069 = vmatpush1.bf16.msra.mxu0 %v2017
    %3070 = vmatprep.subr.bf16.mxu0 %v2022
    %3071 = vmatpush1.bf16.msra.mxu0 %v2021
    %3072 = vmatprep.subr.bf16.mxu0 0
    %3073 = vmatpush1.bf16.msra.mxu0 0
    %3074 = vmatprep.subr.bf16.mxu0 0
    %3075 = vmatpush1.bf16.msra.mxu0 0
    %3076 = vmatprep.subr.bf16.mxu0 0
    %3077 = vmatpush1.bf16.msra.mxu0 0
    %3078 = vmatprep.subr.bf16.mxu0 0
    %3079 = vmatpush1.bf16.msra.mxu0 0
    %3080 = vmatprep.subr.bf16.mxu0 0
    %3081 = vmatpush1.bf16.msra.mxu0 0
    %3082 = vmatprep.subr.bf16.mxu0 0
    %3083 = vmatpush1.bf16.msra.mxu0 0
    %3084 = vmatprep.subr.bf16.mxu0 0
    %3085 = vmatpush1.bf16.msra.mxu0 0
    %3086 = vmatprep.subr.bf16.mxu0 0
    %3087 = vmatpush1.bf16.msra.mxu0 0
    %3088 = vmatprep.mubr.bf16.mxu0 0
    %3089 = vmatmul.mubr.bf16.gmra.mrb[0].mxu0 %v3054
    %v3090 = vpop.f32.mrb[0].mxu0
    %v3091 = vadd.f32 %v2962, %v3090
    %v3092 = vpop.f32.mrb[0].mxu0
    %v3093 = vadd.f32 %v2964, %v3092
    %v3094 = vpop.f32.mrb[0].mxu0
    %v3095 = vpop.f32.mrb[0].mxu0
    %3096 = vdwg.mxu0
    %3097 = vmatprep.subr.bf16.mxu0 %v1996
    %3098 = vmatpush1.bf16.msra.mxu0 %v1995
    %3099 = vmatprep.subr.bf16.mxu0 %v2000
    %3100 = vmatpush1.bf16.msra.mxu0 %v1999
    %3101 = vmatprep.subr.bf16.mxu0 %v2004
    %3102 = vmatpush1.bf16.msra.mxu0 %v2003
    %3103 = vmatprep.subr.bf16.mxu0 %v2008
    %3104 = vmatpush1.bf16.msra.mxu0 %v2007
    %3105 = vmatprep.subr.bf16.mxu0 %v2012
    %3106 = vmatpush1.bf16.msra.mxu0 %v2011
    %3107 = vmatprep.subr.bf16.mxu0 %v2016
    %3108 = vmatpush1.bf16.msra.mxu0 %v2015
    %3109 = vmatprep.subr.bf16.mxu0 %v2020
    %3110 = vmatpush1.bf16.msra.mxu0 %v2019
    %3111 = vmatprep.subr.bf16.mxu0 %v2024
    %3112 = vmatpush1.bf16.msra.mxu0 %v2023
    %3113 = vmatprep.subr.bf16.mxu0 0
    %3114 = vmatpush1.bf16.msra.mxu0 0
    %3115 = vmatprep.subr.bf16.mxu0 0
    %3116 = vmatpush1.bf16.msra.mxu0 0
    %3117 = vmatprep.subr.bf16.mxu0 0
    %3118 = vmatpush1.bf16.msra.mxu0 0
    %3119 = vmatprep.subr.bf16.mxu0 0
    %3120 = vmatpush1.bf16.msra.mxu0 0
    %3121 = vmatprep.subr.bf16.mxu0 0
    %3122 = vmatpush1.bf16.msra.mxu0 0
    %3123 = vmatprep.subr.bf16.mxu0 0
    %3124 = vmatpush1.bf16.msra.mxu0 0
    %3125 = vmatprep.subr.bf16.mxu0 0
    %3126 = vmatpush1.bf16.msra.mxu0 0
    %3127 = vmatprep.subr.bf16.mxu0 0
    %3128 = vmatpush1.bf16.msra.mxu0 0
    %3129 = vmatprep.mubr.bf16.mxu0 0
    %3130 = vmatmul.mubr.bf16.gmra.mrb[0].mxu0 %v3054
    %v3131 = vpop.f32.mrb[0].mxu0
    %v3132 = vadd.f32 %v3003, %v3131
    %v3133 = vpop.f32.mrb[0].mxu0
    %v3134 = vadd.f32 %v3005, %v3133
    %v3135 = vpop.f32.mrb[0].mxu0
    %v3136 = vpop.f32.mrb[0].mxu0
    %3137 = vdwg.mxu0
    %v3138 = vadd.f32 %v3091, %v2143
    %v3139 = vadd.f32 %v3093, %v2147
    %v3140 = vadd.f32 %v3132, %v2151
    %v3141 = vadd.f32 %v3134, %v2155
    %v3142 = vxor.u32 %v3138, 2147483648
    %v3143 = vmul.f32 %v3142, 1.442695
    %v3144 = vpow.pop %v3143
    %v3145 = vadd.f32 %v3144, 1.0
    %v3146 = vrcp.pop %v3145
    %v3147 = vmul.f32 1.0, %v3146
    %v3148 = vxor.u32 %v3139, 2147483648
    %v3149 = vmul.f32 %v3148, 1.442695
    %v3150 = vpow.pop %v3149
    %v3151 = vadd.f32 %v3150, 1.0
    %v3152 = vrcp.pop %v3151
    %v3153 = vmul.f32 1.0, %v3152
    %v3154 = vtanh.pop %v3140
    %v3155 = vxor.u32 %v3141, 2147483648
    %v3156 = vmul.f32 %v3155, 1.442695
    %v3157 = vpow.pop %v3156
    %v3158 = vadd.f32 %v3157, 1.0
    %v3159 = vrcp.pop %v3158
    %v3160 = vmul.f32 1.0, %v3159
    %v3161 = vmul.f32 %v3153, %v2835
    %v3162 = vmul.f32 %v3147, %v3154
    %v3163 = vadd.f32 %v3161, %v3162
    %v3164 = vtanh.pop %v3163
    %v3165 = vmul.f32 %v3160, %v3164
    %v3167 = vrot.slane %v3165, 2
    %v3169 = vpack.c.bf16 %v3167, %v3167
    %v3171 = vrot.slane %v3169, 3
    %3173 = vmatprep.subr.bf16.mxu0 %v1417
    %3174 = vmatpush1.bf16.msra.mxu0 %v1416
    %3175 = vmatprep.subr.bf16.mxu0 %v1425
    %3176 = vmatpush1.bf16.msra.mxu0 %v1424
    %3177 = vmatprep.subr.bf16.mxu0 %v1433
    %3178 = vmatpush1.bf16.msra.mxu0 %v1432
    %3179 = vmatprep.subr.bf16.mxu0 %v1441
    %3180 = vmatpush1.bf16.msra.mxu0 %v1440
    %3181 = vmatprep.subr.bf16.mxu0 %v1449
    %3182 = vmatpush1.bf16.msra.mxu0 %v1448
    %3183 = vmatprep.subr.bf16.mxu0 %v1457
    %3184 = vmatpush1.bf16.msra.mxu0 %v1456
    %3185 = vmatprep.subr.bf16.mxu0 %v1465
    %3186 = vmatpush1.bf16.msra.mxu0 %v1464
    %3187 = vmatprep.subr.bf16.mxu0 %v1473
    %3188 = vmatpush1.bf16.msra.mxu0 %v1472
    %3189 = vmatprep.subr.bf16.mxu0 %v1481
    %3190 = vmatpush1.bf16.msra.mxu0 %v1480
    %3191 = vmatprep.subr.bf16.mxu0 %v1489
    %3192 = vmatpush1.bf16.msra.mxu0 %v1488
    %3193 = vmatprep.subr.bf16.mxu0 %v1497
    %3194 = vmatpush1.bf16.msra.mxu0 %v1496
    %3195 = vmatprep.subr.bf16.mxu0 %v1505
    %3196 = vmatpush1.bf16.msra.mxu0 %v1504
    %3197 = vmatprep.subr.bf16.mxu0 %v1513
    %3198 = vmatpush1.bf16.msra.mxu0 %v1512
    %3199 = vmatprep.subr.bf16.mxu0 %v1521
    %3200 = vmatpush1.bf16.msra.mxu0 %v1520
    %3201 = vmatprep.subr.bf16.mxu0 %v1529
    %3202 = vmatpush1.bf16.msra.mxu0 %v1528
    %3203 = vmatprep.subr.bf16.mxu0 %v1537
    %3204 = vmatpush1.bf16.msra.mxu0 %v1536
    %3205 = vmatprep.mubr.bf16.mxu0 %v3171
    %3206 = vmatmul.mubr.bf16.gmra.mrb[0].mxu0 %v3054
    %v3207 = vpop.f32.mrb[0].mxu0
    %v3208 = vadd.f32 0.0, %v3207
    %v3209 = vpop.f32.mrb[0].mxu0
    %v3210 = vadd.f32 0.0, %v3209
    %v3211 = vpop.f32.mrb[0].mxu0
    %v3212 = vpop.f32.mrb[0].mxu0
    %3213 = vdwg.mxu0
    %3214 = vmatprep.subr.bf16.mxu0 %v1419
    %3215 = vmatpush1.bf16.msra.mxu0 %v1418
    %3216 = vmatprep.subr.bf16.mxu0 %v1427
    %3217 = vmatpush1.bf16.msra.mxu0 %v1426
    %3218 = vmatprep.subr.bf16.mxu0 %v1435
    %3219 = vmatpush1.bf16.msra.mxu0 %v1434
    %3220 = vmatprep.subr.bf16.mxu0 %v1443
    %3221 = vmatpush1.bf16.msra.mxu0 %v1442
    %3222 = vmatprep.subr.bf16.mxu0 %v1451
    %3223 = vmatpush1.bf16.msra.mxu0 %v1450
    %3224 = vmatprep.subr.bf16.mxu0 %v1459
    %3225 = vmatpush1.bf16.msra.mxu0 %v1458
    %3226 = vmatprep.subr.bf16.mxu0 %v1467
    %3227 = vmatpush1.bf16.msra.mxu0 %v1466
    %3228 = vmatprep.subr.bf16.mxu0 %v1475
    %3229 = vmatpush1.bf16.msra.mxu0 %v1474
    %3230 = vmatprep.subr.bf16.mxu0 %v1483
    %3231 = vmatpush1.bf16.msra.mxu0 %v1482
    %3232 = vmatprep.subr.bf16.mxu0 %v1491
    %3233 = vmatpush1.bf16.msra.mxu0 %v1490
    %3234 = vmatprep.subr.bf16.mxu0 %v1499
    %3235 = vmatpush1.bf16.msra.mxu0 %v1498
    %3236 = vmatprep.subr.bf16.mxu0 %v1507
    %3237 = vmatpush1.bf16.msra.mxu0 %v1506
    %3238 = vmatprep.subr.bf16.mxu0 %v1515
    %3239 = vmatpush1.bf16.msra.mxu0 %v1514
    %3240 = vmatprep.subr.bf16.mxu0 %v1523
    %3241 = vmatpush1.bf16.msra.mxu0 %v1522
    %3242 = vmatprep.subr.bf16.mxu0 %v1531
    %3243 = vmatpush1.bf16.msra.mxu0 %v1530
    %3244 = vmatprep.subr.bf16.mxu0 %v1539
    %3245 = vmatpush1.bf16.msra.mxu0 %v1538
    %3246 = vmatprep.mubr.bf16.mxu0 %v3171
    %3247 = vmatmul.mubr.bf16.gmra.mrb[0].mxu0 %v3054
    %v3248 = vpop.f32.mrb[0].mxu0
    %v3249 = vadd.f32 0.0, %v3248
    %v3250 = vpop.f32.mrb[0].mxu0
    %v3251 = vadd.f32 0.0, %v3250
    %v3252 = vpop.f32.mrb[0].mxu0
    %v3253 = vpop.f32.mrb[0].mxu0
    %3254 = vdwg.mxu0
    %3255 = vmatprep.subr.bf16.mxu0 %v1421
    %3256 = vmatpush1.bf16.msra.mxu0 %v1420
    %3257 = vmatprep.subr.bf16.mxu0 %v1429
    %3258 = vmatpush1.bf16.msra.mxu0 %v1428
    %3259 = vmatprep.subr.bf16.mxu0 %v1437
    %3260 = vmatpush1.bf16.msra.mxu0 %v1436
    %3261 = vmatprep.subr.bf16.mxu0 %v1445
    %3262 = vmatpush1.bf16.msra.mxu0 %v1444
    %3263 = vmatprep.subr.bf16.mxu0 %v1453
    %3264 = vmatpush1.bf16.msra.mxu0 %v1452
    %3265 = vmatprep.subr.bf16.mxu0 %v1461
    %3266 = vmatpush1.bf16.msra.mxu0 %v1460
    %3267 = vmatprep.subr.bf16.mxu0 %v1469
    %3268 = vmatpush1.bf16.msra.mxu0 %v1468
    %3269 = vmatprep.subr.bf16.mxu0 %v1477
    %3270 = vmatpush1.bf16.msra.mxu0 %v1476
    %3271 = vmatprep.subr.bf16.mxu0 %v1485
    %3272 = vmatpush1.bf16.msra.mxu0 %v1484
    %3273 = vmatprep.subr.bf16.mxu0 %v1493
    %3274 = vmatpush1.bf16.msra.mxu0 %v1492
    %3275 = vmatprep.subr.bf16.mxu0 %v1501
    %3276 = vmatpush1.bf16.msra.mxu0 %v1500
    %3277 = vmatprep.subr.bf16.mxu0 %v1509
    %3278 = vmatpush1.bf16.msra.mxu0 %v1508
    %3279 = vmatprep.subr.bf16.mxu0 %v1517
    %3280 = vmatpush1.bf16.msra.mxu0 %v1516
    %3281 = vmatprep.subr.bf16.mxu0 %v1525
    %3282 = vmatpush1.bf16.msra.mxu0 %v1524
    %3283 = vmatprep.subr.bf16.mxu0 %v1533
    %3284 = vmatpush1.bf16.msra.mxu0 %v1532
    %3285 = vmatprep.subr.bf16.mxu0 %v1541
    %3286 = vmatpush1.bf16.msra.mxu0 %v1540
    %3287 = vmatprep.mubr.bf16.mxu0 %v3171
    %3288 = vmatmul.mubr.bf16.gmra.mrb[0].mxu0 %v3054
    %v3289 = vpop.f32.mrb[0].mxu0
    %v3290 = vadd.f32 0.0, %v3289
    %v3291 = vpop.f32.mrb[0].mxu0
    %v3292 = vadd.f32 0.0, %v3291
    %v3293 = vpop.f32.mrb[0].mxu0
    %v3294 = vpop.f32.mrb[0].mxu0
    %3295 = vdwg.mxu0
    %3296 = vmatprep.subr.bf16.mxu0 %v1423
    %3297 = vmatpush1.bf16.msra.mxu0 %v1422
    %3298 = vmatprep.subr.bf16.mxu0 %v1431
    %3299 = vmatpush1.bf16.msra.mxu0 %v1430
    %3300 = vmatprep.subr.bf16.mxu0 %v1439
    %3301 = vmatpush1.bf16.msra.mxu0 %v1438
    %3302 = vmatprep.subr.bf16.mxu0 %v1447
    %3303 = vmatpush1.bf16.msra.mxu0 %v1446
    %3304 = vmatprep.subr.bf16.mxu0 %v1455
    %3305 = vmatpush1.bf16.msra.mxu0 %v1454
    %3306 = vmatprep.subr.bf16.mxu0 %v1463
    %3307 = vmatpush1.bf16.msra.mxu0 %v1462
    %3308 = vmatprep.subr.bf16.mxu0 %v1471
    %3309 = vmatpush1.bf16.msra.mxu0 %v1470
    %3310 = vmatprep.subr.bf16.mxu0 %v1479
    %3311 = vmatpush1.bf16.msra.mxu0 %v1478
    %3312 = vmatprep.subr.bf16.mxu0 %v1487
    %3313 = vmatpush1.bf16.msra.mxu0 %v1486
    %3314 = vmatprep.subr.bf16.mxu0 %v1495
    %3315 = vmatpush1.bf16.msra.mxu0 %v1494
    %3316 = vmatprep.subr.bf16.mxu0 %v1503
    %3317 = vmatpush1.bf16.msra.mxu0 %v1502
    %3318 = vmatprep.subr.bf16.mxu0 %v1511
    %3319 = vmatpush1.bf16.msra.mxu0 %v1510
    %3320 = vmatprep.subr.bf16.mxu0 %v1519
    %3321 = vmatpush1.bf16.msra.mxu0 %v1518
    %3322 = vmatprep.subr.bf16.mxu0 %v1527
    %3323 = vmatpush1.bf16.msra.mxu0 %v1526
    %3324 = vmatprep.subr.bf16.mxu0 %v1535
    %3325 = vmatpush1.bf16.msra.mxu0 %v1534
    %3326 = vmatprep.subr.bf16.mxu0 %v1543
    %3327 = vmatpush1.bf16.msra.mxu0 %v1542
    %3328 = vmatprep.mubr.bf16.mxu0 %v3171
    %3329 = vmatmul.mubr.bf16.gmra.mrb[0].mxu0 %v3054
    %v3330 = vpop.f32.mrb[0].mxu0
    %v3331 = vadd.f32 0.0, %v3330
    %v3332 = vpop.f32.mrb[0].mxu0
    %v3333 = vadd.f32 0.0, %v3332
    %v3334 = vpop.f32.mrb[0].mxu0
    %v3335 = vpop.f32.mrb[0].mxu0
    %3336 = vdwg.mxu0
    %v3337 = vadd.f32 %v854, %v3208
    %v3338 = vadd.f32 %v856, %v3210
    %v3339 = vadd.f32 %v897, %v3249
    %v3340 = vadd.f32 %v899, %v3251
    %v3341 = vxor.u32 %v3337, 2147483648
    %v3342 = vmul.f32 %v3341, 1.442695
    %v3343 = vpow.pop %v3342
    %v3344 = vadd.f32 %v3343, 1.0
    %v3345 = vrcp.pop %v3344
    %v3346 = vmul.f32 1.0, %v3345
    %v3347 = vxor.u32 %v3338, 2147483648
    %v3348 = vmul.f32 %v3347, 1.442695
    %v3349 = vpow.pop %v3348
    %v3350 = vadd.f32 %v3349, 1.0
    %v3351 = vrcp.pop %v3350
    %v3352 = vmul.f32 1.0, %v3351
    %v3353 = vtanh.pop %v3339
    %v3354 = vxor.u32 %v3340, 2147483648
    %v3355 = vmul.f32 %v3354, 1.442695
    %v3356 = vpow.pop %v3355
    %v3357 = vadd.f32 %v3356, 1.0
    %v3358 = vrcp.pop %v3357
    %v3359 = vmul.f32 1.0, %v3358
    %v3361 = vrot.slane %v3049, 6
    %v3363 = vmul.f32 %v3352, %v3361
    %v3364 = vmul.f32 %v3346, %v3353
    %v3365 = vadd.f32 %v3363, %v3364
    %v3366 = vtanh.pop %v3365
    %v3367 = vmul.f32 %v3359, %v3366
    %v3368 = vpack.c.bf16 %v3367, %v3367
    %3369 = vmatprep.subr.bf16.mxu0 %v1994
    %3370 = vmatpush1.bf16.msra.mxu0 %v1993
    %3371 = vmatprep.subr.bf16.mxu0 %v1998
    %3372 = vmatpush1.bf16.msra.mxu0 %v1997
    %3373 = vmatprep.subr.bf16.mxu0 %v2002
    %3374 = vmatpush1.bf16.msra.mxu0 %v2001
    %3375 = vmatprep.subr.bf16.mxu0 %v2006
    %3376 = vmatpush1.bf16.msra.mxu0 %v2005
    %3377 = vmatprep.subr.bf16.mxu0 %v2010
    %3378 = vmatpush1.bf16.msra.mxu0 %v2009
    %3379 = vmatprep.subr.bf16.mxu0 %v2014
    %3380 = vmatpush1.bf16.msra.mxu0 %v2013
    %3381 = vmatprep.subr.bf16.mxu0 %v2018
    %3382 = vmatpush1.bf16.msra.mxu0 %v2017
    %3383 = vmatprep.subr.bf16.mxu0 %v2022
    %3384 = vmatpush1.bf16.msra.mxu0 %v2021
    %3385 = vmatprep.subr.bf16.mxu0 0
    %3386 = vmatpush1.bf16.msra.mxu0 0
    %3387 = vmatprep.subr.bf16.mxu0 0
    %3388 = vmatpush1.bf16.msra.mxu0 0
    %3389 = vmatprep.subr.bf16.mxu0 0
    %3390 = vmatpush1.bf16.msra.mxu0 0
    %3391 = vmatprep.subr.bf16.mxu0 0
    %3392 = vmatpush1.bf16.msra.mxu0 0
    %3393 = vmatprep.subr.bf16.mxu0 0
    %3394 = vmatpush1.bf16.msra.mxu0 0
    %3395 = vmatprep.subr.bf16.mxu0 0
    %3396 = vmatpush1.bf16.msra.mxu0 0
    %3397 = vmatprep.subr.bf16.mxu0 0
    %3398 = vmatpush1.bf16.msra.mxu0 0
    %3399 = vmatprep.subr.bf16.mxu0 0
    %3400 = vmatpush1.bf16.msra.mxu0 0
    %3401 = vmatprep.mubr.bf16.mxu0 0
    %3402 = vmatmul.mubr.bf16.gmra.mrb[0].mxu0 %v3368
    %v3403 = vpop.f32.mrb[0].mxu0
    %v3404 = vadd.f32 %v3290, %v3403
    %v3405 = vpop.f32.mrb[0].mxu0
    %v3406 = vadd.f32 %v3292, %v3405
    %v3407 = vpop.f32.mrb[0].mxu0
    %v3408 = vpop.f32.mrb[0].mxu0
    %3409 = vdwg.mxu0
    %3410 = vmatprep.subr.bf16.mxu0 %v1996
    %3411 = vmatpush1.bf16.msra.mxu0 %v1995
    %3412 = vmatprep.subr.bf16.mxu0 %v2000
    %3413 = vmatpush1.bf16.msra.mxu0 %v1999
    %3414 = vmatprep.subr.bf16.mxu0 %v2004
    %3415 = vmatpush1.bf16.msra.mxu0 %v2003
    %3416 = vmatprep.subr.bf16.mxu0 %v2008
    %3417 = vmatpush1.bf16.msra.mxu0 %v2007
    %3418 = vmatprep.subr.bf16.mxu0 %v2012
    %3419 = vmatpush1.bf16.msra.mxu0 %v2011
    %3420 = vmatprep.subr.bf16.mxu0 %v2016
    %3421 = vmatpush1.bf16.msra.mxu0 %v2015
    %3422 = vmatprep.subr.bf16.mxu0 %v2020
    %3423 = vmatpush1.bf16.msra.mxu0 %v2019
    %3424 = vmatprep.subr.bf16.mxu0 %v2024
    %3425 = vmatpush1.bf16.msra.mxu0 %v2023
    %3426 = vmatprep.subr.bf16.mxu0 0
    %3427 = vmatpush1.bf16.msra.mxu0 0
    %3428 = vmatprep.subr.bf16.mxu0 0
    %3429 = vmatpush1.bf16.msra.mxu0 0
    %3430 = vmatprep.subr.bf16.mxu0 0
    %3431 = vmatpush1.bf16.msra.mxu0 0
    %3432 = vmatprep.subr.bf16.mxu0 0
    %3433 = vmatpush1.bf16.msra.mxu0 0
    %3434 = vmatprep.subr.bf16.mxu0 0
    %3435 = vmatpush1.bf16.msra.mxu0 0
    %3436 = vmatprep.subr.bf16.mxu0 0
    %3437 = vmatpush1.bf16.msra.mxu0 0
    %3438 = vmatprep.subr.bf16.mxu0 0
    %3439 = vmatpush1.bf16.msra.mxu0 0
    %3440 = vmatprep.subr.bf16.mxu0 0
    %3441 = vmatpush1.bf16.msra.mxu0 0
    %3442 = vmatprep.mubr.bf16.mxu0 0
    %3443 = vmatmul.mubr.bf16.gmra.mrb[0].mxu0 %v3368
    %v3444 = vpop.f32.mrb[0].mxu0
    %v3445 = vadd.f32 %v3331, %v3444
    %v3446 = vpop.f32.mrb[0].mxu0
    %v3447 = vadd.f32 %v3333, %v3446
    %v3448 = vpop.f32.mrb[0].mxu0
    %v3449 = vpop.f32.mrb[0].mxu0
    %3450 = vdwg.mxu0
    %v3451 = vadd.f32 %v3404, %v2143
    %v3452 = vadd.f32 %v3406, %v2147
    %v3453 = vadd.f32 %v3445, %v2151
    %v3454 = vadd.f32 %v3447, %v2155
    %v3455 = vxor.u32 %v3451, 2147483648
    %v3456 = vmul.f32 %v3455, 1.442695
    %v3457 = vpow.pop %v3456
    %v3458 = vadd.f32 %v3457, 1.0
    %v3459 = vrcp.pop %v3458
    %v3460 = vmul.f32 1.0, %v3459
    %v3461 = vxor.u32 %v3452, 2147483648
    %v3462 = vmul.f32 %v3461, 1.442695
    %v3463 = vpow.pop %v3462
    %v3464 = vadd.f32 %v3463, 1.0
    %v3465 = vrcp.pop %v3464
    %v3466 = vmul.f32 1.0, %v3465
    %v3467 = vtanh.pop %v3453
    %v3468 = vxor.u32 %v3454, 2147483648
    %v3469 = vmul.f32 %v3468, 1.442695
    %v3470 = vpow.pop %v3469
    %v3471 = vadd.f32 %v3470, 1.0
    %v3472 = vrcp.pop %v3471
    %v3473 = vmul.f32 1.0, %v3472
    %v3474 = vmul.f32 %v3466, %v3163
    %v3475 = vmul.f32 %v3460, %v3467
    %v3476 = vadd.f32 %v3474, %v3475
    %v3477 = vtanh.pop %v3476
    %v3478 = vmul.f32 %v3473, %v3477
    %v3479 = vpack.c.bf16 %v3478, %v3478
    %v3480 = vld [vmem:[#allocation8 + $0x20] sm:$0xff]
    %v3481 = vld [vmem:[#allocation8 + $0x28] sm:$0xff]
    %v3482 = vld [vmem:[#allocation8 + $0x54] sm:$0xff]
    %v3483 = vld [vmem:[#allocation8 + $0x5c] sm:$0xff]
    %v3484 = vld [vmem:[#allocation8 + $0x88] sm:$0xff]
    %v3485 = vld [vmem:[#allocation8 + $0x90] sm:$0xff]
    %v3486 = vld [vmem:[#allocation8 + $0xbc] sm:$0xff]
    %v3487 = vld [vmem:[#allocation8 + $0xc4] sm:$0xff]
    %v3488 = vld [vmem:[#allocation8 + $0xf0] sm:$0xff]
    %v3489 = vld [vmem:[#allocation8 + $0xf8] sm:$0xff]
    %v3490 = vld [vmem:[#allocation8 + $0x124] sm:$0xff]
    %v3491 = vld [vmem:[#allocation8 + $0x12c] sm:$0xff]
    %v3492 = vld [vmem:[#allocation8 + $0x158] sm:$0xff]
    %v3493 = vld [vmem:[#allocation8 + $0x160] sm:$0xff]
    %v3494 = vld [vmem:[#allocation8 + $0x18c] sm:$0xff]
    %v3495 = vld [vmem:[#allocation8 + $0x194] sm:$0xff]
    %v3496 = vld [vmem:[#allocation8 + $0x1c0] sm:$0xff]
    %v3497 = vld [vmem:[#allocation8 + $0x1c8] sm:$0xff]
    %v3498 = vld [vmem:[#allocation8 + $0x1f4] sm:$0xff]
    %v3499 = vld [vmem:[#allocation8 + $0x1fc] sm:$0xff]
    %v3500 = vld [vmem:[#allocation8 + $0x228] sm:$0xff]
    %v3501 = vld [vmem:[#allocation8 + $0x230] sm:$0xff]
    %v3502 = vld [vmem:[#allocation8 + $0x25c] sm:$0xff]
    %v3503 = vld [vmem:[#allocation8 + $0x264] sm:$0xff]
    %v3504 = vld [vmem:[#allocation8 + $0x290] sm:$0xff]
    %v3505 = vld [vmem:[#allocation8 + $0x298] sm:$0xff]
    %v3506 = vld [vmem:[#allocation8 + $0x2c4] sm:$0xff]
    %v3507 = vld [vmem:[#allocation8 + $0x2cc] sm:$0xff]
    %v3508 = vld [vmem:[#allocation8 + $0x2f8] sm:$0xff]
    %v3509 = vld [vmem:[#allocation8 + $0x300] sm:$0xff]
    %v3510 = vld [vmem:[#allocation8 + $0x32c] sm:$0xff]
    %v3511 = vld [vmem:[#allocation8 + $0x334] sm:$0xff]
    %s3512 = scalar_lea.vmem %s5, 2
    %v3513 = vld [vmem:[%s3512] ss:$4 sm:$0xf]
    %v3515 = vlaneseq
    %v3516 = vshrl.u32 %v3515, 7
    %v3517 = vsub.s32 0, %v3516
    %v3518 = vrot.slane %v3513, %v3517
    %v3519 = vlaneseq
    %v3520 = vshrl.u32 %v3519, 7
    %v3521 = vsub.s32 1, %v3520
    %v3522 = vrot.slane %v3513, %v3521
    %v3523 = vlaneseq
    %v3524 = vshrl.u32 %v3523, 7
    %v3525 = vsub.s32 2, %v3524
    %v3526 = vrot.slane %v3513, %v3525
    %v3527 = vlaneseq
    %v3528 = vshrl.u32 %v3527, 7
    %v3529 = vsub.s32 3, %v3528
    %v3530 = vrot.slane %v3513, %v3529
    %v3567 = vunpack.c.l.b16 %v3480
    %v3568 = vunpack.c.h.b16 %v3480
    %v3569 = vunpack.c.l.b16 %v3481
    %v3570 = vunpack.c.h.b16 %v3481
    %v3571 = vunpack.c.l.b16 %v3482
    %v3572 = vunpack.c.h.b16 %v3482
    %v3573 = vunpack.c.l.b16 %v3483
    %v3574 = vunpack.c.h.b16 %v3483
    %v3575 = vunpack.c.l.b16 %v3484
    %v3576 = vunpack.c.h.b16 %v3484
    %v3577 = vunpack.c.l.b16 %v3485
    %v3578 = vunpack.c.h.b16 %v3485
    %v3579 = vunpack.c.l.b16 %v3486
    %v3580 = vunpack.c.h.b16 %v3486
    %v3581 = vunpack.c.l.b16 %v3487
    %v3582 = vunpack.c.h.b16 %v3487
    %v3583 = vunpack.c.l.b16 %v3488
    %v3584 = vunpack.c.h.b16 %v3488
    %v3585 = vunpack.c.l.b16 %v3489
    %v3586 = vunpack.c.h.b16 %v3489
    %v3587 = vunpack.c.l.b16 %v3490
    %v3588 = vunpack.c.h.b16 %v3490
    %v3589 = vunpack.c.l.b16 %v3491
    %v3590 = vunpack.c.h.b16 %v3491
    %v3591 = vunpack.c.l.b16 %v3492
    %v3592 = vunpack.c.h.b16 %v3492
    %v3593 = vunpack.c.l.b16 %v3493
    %v3594 = vunpack.c.h.b16 %v3493
    %v3595 = vunpack.c.l.b16 %v3494
    %v3596 = vunpack.c.h.b16 %v3494
    %v3597 = vunpack.c.l.b16 %v3495
    %v3598 = vunpack.c.h.b16 %v3495
    %v3599 = vunpack.c.l.b16 %v3496
    %v3600 = vunpack.c.h.b16 %v3496
    %v3601 = vunpack.c.l.b16 %v3497
    %v3602 = vunpack.c.h.b16 %v3497
    %v3603 = vunpack.c.l.b16 %v3498
    %v3604 = vunpack.c.h.b16 %v3498
    %v3605 = vunpack.c.l.b16 %v3499
    %v3606 = vunpack.c.h.b16 %v3499
    %v3607 = vunpack.c.l.b16 %v3500
    %v3608 = vunpack.c.h.b16 %v3500
    %v3609 = vunpack.c.l.b16 %v3501
    %v3610 = vunpack.c.h.b16 %v3501
    %v3611 = vunpack.c.l.b16 %v3502
    %v3612 = vunpack.c.h.b16 %v3502
    %v3613 = vunpack.c.l.b16 %v3503
    %v3614 = vunpack.c.h.b16 %v3503
    %v3615 = vunpack.c.l.b16 %v3504
    %v3616 = vunpack.c.h.b16 %v3504
    %v3617 = vunpack.c.l.b16 %v3505
    %v3618 = vunpack.c.h.b16 %v3505
    %v3619 = vunpack.c.l.b16 %v3506
    %v3620 = vunpack.c.h.b16 %v3506
    %v3621 = vunpack.c.l.b16 %v3507
    %v3622 = vunpack.c.h.b16 %v3507
    %v3623 = vunpack.c.l.b16 %v3508
    %v3624 = vunpack.c.h.b16 %v3508
    %v3625 = vunpack.c.l.b16 %v3509
    %v3626 = vunpack.c.h.b16 %v3509
    %v3627 = vunpack.c.l.b16 %v3510
    %v3628 = vunpack.c.h.b16 %v3510
    %v3629 = vunpack.c.l.b16 %v3511
    %v3630 = vunpack.c.h.b16 %v3511
    %v3631 = vpack.c.b16 %v3571, %v3567
    %v3632 = vpack.c.b16 %v3572, %v3568
    %v3633 = vpack.c.b16 %v3573, %v3569
    %v3634 = vpack.c.b16 %v3574, %v3570
    %v3635 = vpack.c.b16 %v3579, %v3575
    %v3636 = vpack.c.b16 %v3580, %v3576
    %v3637 = vpack.c.b16 %v3581, %v3577
    %v3638 = vpack.c.b16 %v3582, %v3578
    %v3639 = vpack.c.b16 %v3587, %v3583
    %v3640 = vpack.c.b16 %v3588, %v3584
    %v3641 = vpack.c.b16 %v3589, %v3585
    %v3642 = vpack.c.b16 %v3590, %v3586
    %v3643 = vpack.c.b16 %v3595, %v3591
    %v3644 = vpack.c.b16 %v3596, %v3592
    %v3645 = vpack.c.b16 %v3597, %v3593
    %v3646 = vpack.c.b16 %v3598, %v3594
    %v3647 = vpack.c.b16 %v3603, %v3599
    %v3648 = vpack.c.b16 %v3604, %v3600
    %v3649 = vpack.c.b16 %v3605, %v3601
    %v3650 = vpack.c.b16 %v3606, %v3602
    %v3651 = vpack.c.b16 %v3611, %v3607
    %v3652 = vpack.c.b16 %v3612, %v3608
    %v3653 = vpack.c.b16 %v3613, %v3609
    %v3654 = vpack.c.b16 %v3614, %v3610
    %v3655 = vpack.c.b16 %v3619, %v3615
    %v3656 = vpack.c.b16 %v3620, %v3616
    %v3657 = vpack.c.b16 %v3621, %v3617
    %v3658 = vpack.c.b16 %v3622, %v3618
    %v3659 = vpack.c.b16 %v3627, %v3623
    %v3660 = vpack.c.b16 %v3628, %v3624
    %v3661 = vpack.c.b16 %v3629, %v3625
    %v3662 = vpack.c.b16 %v3630, %v3626
    %3695 = vmatprep.subr.bf16.mxu0 %v3632
    %3696 = vmatpush1.bf16.msra.mxu0 %v3631
    %3697 = vmatprep.subr.bf16.mxu0 %v3636
    %3698 = vmatpush1.bf16.msra.mxu0 %v3635
    %3699 = vmatprep.subr.bf16.mxu0 %v3640
    %3700 = vmatpush1.bf16.msra.mxu0 %v3639
    %3701 = vmatprep.subr.bf16.mxu0 %v3644
    %3702 = vmatpush1.bf16.msra.mxu0 %v3643
    %3703 = vmatprep.subr.bf16.mxu0 %v3648
    %3704 = vmatpush1.bf16.msra.mxu0 %v3647
    %3705 = vmatprep.subr.bf16.mxu0 %v3652
    %3706 = vmatpush1.bf16.msra.mxu0 %v3651
    %3707 = vmatprep.subr.bf16.mxu0 %v3656
    %3708 = vmatpush1.bf16.msra.mxu0 %v3655
    %3709 = vmatprep.subr.bf16.mxu0 %v3660
    %3710 = vmatpush1.bf16.msra.mxu0 %v3659
    %3711 = vmatprep.subr.bf16.mxu0 0
    %3712 = vmatpush1.bf16.msra.mxu0 0
    %3713 = vmatprep.subr.bf16.mxu0 0
    %3714 = vmatpush1.bf16.msra.mxu0 0
    %3715 = vmatprep.subr.bf16.mxu0 0
    %3716 = vmatpush1.bf16.msra.mxu0 0
    %3717 = vmatprep.subr.bf16.mxu0 0
    %3718 = vmatpush1.bf16.msra.mxu0 0
    %3719 = vmatprep.subr.bf16.mxu0 0
    %3720 = vmatpush1.bf16.msra.mxu0 0
    %3721 = vmatprep.subr.bf16.mxu0 0
    %3722 = vmatpush1.bf16.msra.mxu0 0
    %3723 = vmatprep.subr.bf16.mxu0 0
    %3724 = vmatpush1.bf16.msra.mxu0 0
    %3725 = vmatprep.subr.bf16.mxu0 0
    %3726 = vmatpush1.bf16.msra.mxu0 0
    %3727 = vmatprep.mubr.bf16.mxu0 0
    %3728 = vmatmul.mubr.bf16.gmra.mrb[0].mxu0 %v3479
    %v3729 = vpop.f32.mrb[0].mxu0
    %v3730 = vadd.f32 %v3518, %v3729
    %v3731 = vpop.f32.mrb[0].mxu0
    %v3732 = vadd.f32 %v3522, %v3731
    %v3733 = vpop.f32.mrb[0].mxu0
    %v3734 = vpop.f32.mrb[0].mxu0
    %3735 = vdwg.mxu0
    %3736 = vmatprep.subr.bf16.mxu0 %v3634
    %3737 = vmatpush1.bf16.msra.mxu0 %v3633
    %3738 = vmatprep.subr.bf16.mxu0 %v3638
    %3739 = vmatpush1.bf16.msra.mxu0 %v3637
    %3740 = vmatprep.subr.bf16.mxu0 %v3642
    %3741 = vmatpush1.bf16.msra.mxu0 %v3641
    %3742 = vmatprep.subr.bf16.mxu0 %v3646
    %3743 = vmatpush1.bf16.msra.mxu0 %v3645
    %3744 = vmatprep.subr.bf16.mxu0 %v3650
    %3745 = vmatpush1.bf16.msra.mxu0 %v3649
    %3746 = vmatprep.subr.bf16.mxu0 %v3654
    %3747 = vmatpush1.bf16.msra.mxu0 %v3653
    %3748 = vmatprep.subr.bf16.mxu0 %v3658
    %3749 = vmatpush1.bf16.msra.mxu0 %v3657
    %3750 = vmatprep.subr.bf16.mxu0 %v3662
    %3751 = vmatpush1.bf16.msra.mxu0 %v3661
    %3752 = vmatprep.subr.bf16.mxu0 0
    %3753 = vmatpush1.bf16.msra.mxu0 0
    %3754 = vmatprep.subr.bf16.mxu0 0
    %3755 = vmatpush1.bf16.msra.mxu0 0
    %3756 = vmatprep.subr.bf16.mxu0 0
    %3757 = vmatpush1.bf16.msra.mxu0 0
    %3758 = vmatprep.subr.bf16.mxu0 0
    %3759 = vmatpush1.bf16.msra.mxu0 0
    %3760 = vmatprep.subr.bf16.mxu0 0
    %3761 = vmatpush1.bf16.msra.mxu0 0
    %3762 = vmatprep.subr.bf16.mxu0 0
    %3763 = vmatpush1.bf16.msra.mxu0 0
    %3764 = vmatprep.subr.bf16.mxu0 0
    %3765 = vmatpush1.bf16.msra.mxu0 0
    %3766 = vmatprep.subr.bf16.mxu0 0
    %3767 = vmatpush1.bf16.msra.mxu0 0
    %3768 = vmatprep.mubr.bf16.mxu0 0
    %3769 = vmatmul.mubr.bf16.gmra.mrb[0].mxu0 %v3479
    %v3770 = vpop.f32.mrb[0].mxu0
    %v3771 = vadd.f32 %v3526, %v3770
    %v3772 = vpop.f32.mrb[0].mxu0
    %v3773 = vadd.f32 %v3530, %v3772
    %v3774 = vpop.f32.mrb[0].mxu0
    %v3775 = vpop.f32.mrb[0].mxu0
    %3776 = vdwg.mxu0
    %v3777 = vmax.f32 %v3730, 0.0
    %v3778 = vmax.f32 %v3732, 0.0
    %v3779 = vmax.f32 %v3771, 0.0
    %v3780 = vmax.f32 %v3773, 0.0
    %v3781 = vpack.c.bf16 %v3777, %v3777
    %v3782 = vpack.c.bf16 %v3778, %v3778
    %v3783 = vpack.c.bf16 %v3779, %v3779
    %v3784 = vpack.c.bf16 %v3780, %v3780
    %v3785 = vld [vmem:[#allocation6 + $0xc0] sm:$0xf]
    %v3786 = vld [vmem:[#allocation6 + $0xc4] sm:$0xf]
    %v3787 = vld [vmem:[#allocation6 + $0xc8] sm:$0xf]
    %v3788 = vld [vmem:[#allocation6 + $0xcc] sm:$0xf]
    %v3789 = vld [vmem:[#allocation6 + $0xd0] sm:$0xf]
    %v3790 = vld [vmem:[#allocation6 + $0xd4] sm:$0xf]
    %v3791 = vld [vmem:[#allocation6 + $0xd8] sm:$0xf]
    %v3792 = vld [vmem:[#allocation6 + $0xdc] sm:$0xf]
    %v3793 = vld [vmem:[#allocation6 + $0xe0] sm:$0xf]
    %v3794 = vld [vmem:[#allocation6 + $0xe4] sm:$0xf]
    %v3795 = vld [vmem:[#allocation6 + $0xe8] sm:$0xf]
    %v3796 = vld [vmem:[#allocation6 + $0xec] sm:$0xf]
    %v3797 = vld [vmem:[#allocation6 + $0xf0] sm:$0xf]
    %v3798 = vld [vmem:[#allocation6 + $0xf4] sm:$0xf]
    %v3799 = vld [vmem:[#allocation6 + $0xf8] sm:$0xf]
    %v3800 = vld [vmem:[#allocation6 + $0xfc] sm:$0xf]
    %v3801 = vld [vmem:[#allocation6 + $0x100] sm:$0xf]
    %v3802 = vld [vmem:[#allocation6 + $0x104] sm:$0xf]
    %v3803 = vld [vmem:[#allocation6 + $0x108] sm:$0xf]
    %v3804 = vld [vmem:[#allocation6 + $0x10c] sm:$0xf]
    %v3805 = vld [vmem:[#allocation6 + $0x110] sm:$0xf]
    %v3806 = vld [vmem:[#allocation6 + $0x114] sm:$0xf]
    %v3807 = vld [vmem:[#allocation6 + $0x118] sm:$0xf]
    %v3808 = vld [vmem:[#allocation6 + $0x11c] sm:$0xf]
    %v3809 = vld [vmem:[#allocation6 + $0x120] sm:$0xf]
    %v3810 = vld [vmem:[#allocation6 + $0x124] sm:$0xf]
    %v3811 = vld [vmem:[#allocation6 + $0x128] sm:$0xf]
    %v3812 = vld [vmem:[#allocation6 + $0x12c] sm:$0xf]
    %v3813 = vld [vmem:[#allocation6 + $0x130] sm:$0xf]
    %v3814 = vld [vmem:[#allocation6 + $0x134] sm:$0xf]
    %v3815 = vld [vmem:[#allocation6 + $0x138] sm:$0xf]
    %v3816 = vld [vmem:[#allocation6 + $0x13c] sm:$0xf]
    %v3817 = vld [vmem:[#allocation6 + $0x140] sm:$0xf]
    %v3818 = vld [vmem:[#allocation6 + $0x144] sm:$0xf]
    %v3819 = vld [vmem:[#allocation6 + $0x148] sm:$0xf]
    %v3820 = vld [vmem:[#allocation6 + $0x14c] sm:$0xf]
    %v3821 = vld [vmem:[#allocation6 + $0x150] sm:$0xf]
    %v3822 = vld [vmem:[#allocation6 + $0x154] sm:$0xf]
    %v3823 = vld [vmem:[#allocation6 + $0x158] sm:$0xf]
    %v3824 = vld [vmem:[#allocation6 + $0x15c] sm:$0xf]
    %v3825 = vld [vmem:[#allocation6 + $0x160] sm:$0xf]
    %v3826 = vld [vmem:[#allocation6 + $0x164] sm:$0xf]
    %v3827 = vld [vmem:[#allocation6 + $0x168] sm:$0xf]
    %v3828 = vld [vmem:[#allocation6 + $0x16c] sm:$0xf]
    %v3829 = vld [vmem:[#allocation6 + $0x170] sm:$0xf]
    %v3830 = vld [vmem:[#allocation6 + $0x174] sm:$0xf]
    %v3831 = vld [vmem:[#allocation6 + $0x178] sm:$0xf]
    %v3832 = vld [vmem:[#allocation6 + $0x17c] sm:$0xf]
    %v3833 = vld [vmem:[#allocation6 + $0x180] sm:$0xf]
    %v3834 = vld [vmem:[#allocation6 + $0x184] sm:$0xf]
    %v3835 = vld [vmem:[#allocation6 + $0x188] sm:$0xf]
    %v3836 = vld [vmem:[#allocation6 + $0x18c] sm:$0xf]
    %v3837 = vld [vmem:[#allocation6 + $0x190] sm:$0xf]
    %v3838 = vld [vmem:[#allocation6 + $0x194] sm:$0xf]
    %v3839 = vld [vmem:[#allocation6 + $0x198] sm:$0xf]
    %v3840 = vld [vmem:[#allocation6 + $0x19c] sm:$0xf]
    %v3841 = vld [vmem:[#allocation6 + $0x1a0] sm:$0xf]
    %v3842 = vld [vmem:[#allocation6 + $0x1a4] sm:$0xf]
    %v3843 = vld [vmem:[#allocation6 + $0x1a8] sm:$0xf]
    %v3844 = vld [vmem:[#allocation6 + $0x1ac] sm:$0xf]
    %v3845 = vld [vmem:[#allocation6 + $0x1b0] sm:$0xf]
    %v3846 = vld [vmem:[#allocation6 + $0x1b4] sm:$0xf]
    %v3847 = vld [vmem:[#allocation6 + $0x1b8] sm:$0xf]
    %v3848 = vld [vmem:[#allocation6 + $0x1bc] sm:$0xf]
    %v3849 = vld [vmem:[%s5 + $0xb] sm:$0x1]
    %v3850 = vlaneseq
    %v3851 = vshrl.u32 %v3850, 7
    %v3852 = vsub.s32 0, %v3851
    %v3853 = vrot.slane %v3849, %v3852
    %v3918 = vunpack.c.l.b16 %v3785
    %v3919 = vunpack.c.l.b16 %v3786
    %v3920 = vunpack.c.l.b16 %v3787
    %v3921 = vunpack.c.l.b16 %v3788
    %v3922 = vunpack.c.l.b16 %v3789
    %v3923 = vunpack.c.l.b16 %v3790
    %v3924 = vunpack.c.l.b16 %v3791
    %v3925 = vunpack.c.l.b16 %v3792
    %v3926 = vunpack.c.l.b16 %v3793
    %v3927 = vunpack.c.l.b16 %v3794
    %v3928 = vunpack.c.l.b16 %v3795
    %v3929 = vunpack.c.l.b16 %v3796
    %v3930 = vunpack.c.l.b16 %v3797
    %v3931 = vunpack.c.l.b16 %v3798
    %v3932 = vunpack.c.l.b16 %v3799
    %v3933 = vunpack.c.l.b16 %v3800
    %v3934 = vunpack.c.l.b16 %v3801
    %v3935 = vunpack.c.l.b16 %v3802
    %v3936 = vunpack.c.l.b16 %v3803
    %v3937 = vunpack.c.l.b16 %v3804
    %v3938 = vunpack.c.l.b16 %v3805
    %v3939 = vunpack.c.l.b16 %v3806
    %v3940 = vunpack.c.l.b16 %v3807
    %v3941 = vunpack.c.l.b16 %v3808
    %v3942 = vunpack.c.l.b16 %v3809
    %v3943 = vunpack.c.l.b16 %v3810
    %v3944 = vunpack.c.l.b16 %v3811
    %v3945 = vunpack.c.l.b16 %v3812
    %v3946 = vunpack.c.l.b16 %v3813
    %v3947 = vunpack.c.l.b16 %v3814
    %v3948 = vunpack.c.l.b16 %v3815
    %v3949 = vunpack.c.l.b16 %v3816
    %v3950 = vunpack.c.l.b16 %v3817
    %v3951 = vunpack.c.l.b16 %v3818
    %v3952 = vunpack.c.l.b16 %v3819
    %v3953 = vunpack.c.l.b16 %v3820
    %v3954 = vunpack.c.l.b16 %v3821
    %v3955 = vunpack.c.l.b16 %v3822
    %v3956 = vunpack.c.l.b16 %v3823
    %v3957 = vunpack.c.l.b16 %v3824
    %v3958 = vunpack.c.l.b16 %v3825
    %v3959 = vunpack.c.l.b16 %v3826
    %v3960 = vunpack.c.l.b16 %v3827
    %v3961 = vunpack.c.l.b16 %v3828
    %v3962 = vunpack.c.l.b16 %v3829
    %v3963 = vunpack.c.l.b16 %v3830
    %v3964 = vunpack.c.l.b16 %v3831
    %v3965 = vunpack.c.l.b16 %v3832
    %v3966 = vunpack.c.l.b16 %v3833
    %v3967 = vunpack.c.l.b16 %v3834
    %v3968 = vunpack.c.l.b16 %v3835
    %v3969 = vunpack.c.l.b16 %v3836
    %v3970 = vunpack.c.l.b16 %v3837
    %v3971 = vunpack.c.l.b16 %v3838
    %v3972 = vunpack.c.l.b16 %v3839
    %v3973 = vunpack.c.l.b16 %v3840
    %v3974 = vunpack.c.l.b16 %v3841
    %v3975 = vunpack.c.l.b16 %v3842
    %v3976 = vunpack.c.l.b16 %v3843
    %v3977 = vunpack.c.l.b16 %v3844
    %v3978 = vunpack.c.l.b16 %v3845
    %v3979 = vunpack.c.l.b16 %v3846
    %v3980 = vunpack.c.l.b16 %v3847
    %v3981 = vunpack.c.l.b16 %v3848
    %v3982 = vpack.c.b16 %v3919, %v3918
    %v3983 = vpack.c.b16 %v3921, %v3920
    %v3984 = vpack.c.b16 %v3923, %v3922
    %v3985 = vpack.c.b16 %v3925, %v3924
    %v3986 = vpack.c.b16 %v3927, %v3926
    %v3987 = vpack.c.b16 %v3929, %v3928
    %v3988 = vpack.c.b16 %v3931, %v3930
    %v3989 = vpack.c.b16 %v3933, %v3932
    %v3990 = vpack.c.b16 %v3935, %v3934
    %v3991 = vpack.c.b16 %v3937, %v3936
    %v3992 = vpack.c.b16 %v3939, %v3938
    %v3993 = vpack.c.b16 %v3941, %v3940
    %v3994 = vpack.c.b16 %v3943, %v3942
    %v3995 = vpack.c.b16 %v3945, %v3944
    %v3996 = vpack.c.b16 %v3947, %v3946
    %v3997 = vpack.c.b16 %v3949, %v3948
    %v3998 = vpack.c.b16 %v3951, %v3950
    %v3999 = vpack.c.b16 %v3953, %v3952
    %v4000 = vpack.c.b16 %v3955, %v3954
    %v4001 = vpack.c.b16 %v3957, %v3956
    %v4002 = vpack.c.b16 %v3959, %v3958
    %v4003 = vpack.c.b16 %v3961, %v3960
    %v4004 = vpack.c.b16 %v3963, %v3962
    %v4005 = vpack.c.b16 %v3965, %v3964
    %v4006 = vpack.c.b16 %v3967, %v3966
    %v4007 = vpack.c.b16 %v3969, %v3968
    %v4008 = vpack.c.b16 %v3971, %v3970
    %v4009 = vpack.c.b16 %v3973, %v3972
    %v4010 = vpack.c.b16 %v3975, %v3974
    %v4011 = vpack.c.b16 %v3977, %v3976
    %v4012 = vpack.c.b16 %v3979, %v3978
    %v4013 = vpack.c.b16 %v3981, %v3980
    %4046 = vmatprep.subr.bf16.mxu0 0
    %4047 = vmatpush1.bf16.msra.mxu0 %v3982
    %4048 = vmatprep.subr.bf16.mxu0 0
    %4049 = vmatpush1.bf16.msra.mxu0 %v3983
    %4050 = vmatprep.subr.bf16.mxu0 0
    %4051 = vmatpush1.bf16.msra.mxu0 %v3984
    %4052 = vmatprep.subr.bf16.mxu0 0
    %4053 = vmatpush1.bf16.msra.mxu0 %v3985
    %4054 = vmatprep.subr.bf16.mxu0 0
    %4055 = vmatpush1.bf16.msra.mxu0 %v3986
    %4056 = vmatprep.subr.bf16.mxu0 0
    %4057 = vmatpush1.bf16.msra.mxu0 %v3987
    %4058 = vmatprep.subr.bf16.mxu0 0
    %4059 = vmatpush1.bf16.msra.mxu0 %v3988
    %4060 = vmatprep.subr.bf16.mxu0 0
    %4061 = vmatpush1.bf16.msra.mxu0 %v3989
    %4062 = vmatprep.subr.bf16.mxu0 0
    %4063 = vmatpush1.bf16.msra.mxu0 %v3990
    %4064 = vmatprep.subr.bf16.mxu0 0
    %4065 = vmatpush1.bf16.msra.mxu0 %v3991
    %4066 = vmatprep.subr.bf16.mxu0 0
    %4067 = vmatpush1.bf16.msra.mxu0 %v3992
    %4068 = vmatprep.subr.bf16.mxu0 0
    %4069 = vmatpush1.bf16.msra.mxu0 %v3993
    %4070 = vmatprep.subr.bf16.mxu0 0
    %4071 = vmatpush1.bf16.msra.mxu0 %v3994
    %4072 = vmatprep.subr.bf16.mxu0 0
    %4073 = vmatpush1.bf16.msra.mxu0 %v3995
    %4074 = vmatprep.subr.bf16.mxu0 0
    %4075 = vmatpush1.bf16.msra.mxu0 %v3996
    %4076 = vmatprep.subr.bf16.mxu0 0
    %4077 = vmatpush1.bf16.msra.mxu0 %v3997
    %4078 = vmatprep.mubr.bf16.mxu0 %v3782
    %4079 = vmatmul.mubr.bf16.gmra.mrb[0].mxu0 %v3781
    %v4080 = vpop.f32.mrb[0].mxu0
    %v4081 = vadd.f32 %v3853, %v4080
    %v4082 = vpop.f32.mrb[0].mxu0
    %v4083 = vpop.f32.mrb[0].mxu0
    %v4084 = vpop.f32.mrb[0].mxu0
    %4085 = vdwg.mxu0
    %4086 = vmatprep.subr.bf16.mxu0 0
    %4087 = vmatpush1.bf16.msra.mxu0 %v3998
    %4088 = vmatprep.subr.bf16.mxu0 0
    %4089 = vmatpush1.bf16.msra.mxu0 %v3999
    %4090 = vmatprep.subr.bf16.mxu0 0
    %4091 = vmatpush1.bf16.msra.mxu0 %v4000
    %4092 = vmatprep.subr.bf16.mxu0 0
    %4093 = vmatpush1.bf16.msra.mxu0 %v4001
    %4094 = vmatprep.subr.bf16.mxu0 0
    %4095 = vmatpush1.bf16.msra.mxu0 %v4002
    %4096 = vmatprep.subr.bf16.mxu0 0
    %4097 = vmatpush1.bf16.msra.mxu0 %v4003
    %4098 = vmatprep.subr.bf16.mxu0 0
    %4099 = vmatpush1.bf16.msra.mxu0 %v4004
    %4100 = vmatprep.subr.bf16.mxu0 0
    %4101 = vmatpush1.bf16.msra.mxu0 %v4005
    %4102 = vmatprep.subr.bf16.mxu0 0
    %4103 = vmatpush1.bf16.msra.mxu0 %v4006
    %4104 = vmatprep.subr.bf16.mxu0 0
    %4105 = vmatpush1.bf16.msra.mxu0 %v4007
    %4106 = vmatprep.subr.bf16.mxu0 0
    %4107 = vmatpush1.bf16.msra.mxu0 %v4008
    %4108 = vmatprep.subr.bf16.mxu0 0
    %4109 = vmatpush1.bf16.msra.mxu0 %v4009
    %4110 = vmatprep.subr.bf16.mxu0 0
    %4111 = vmatpush1.bf16.msra.mxu0 %v4010
    %4112 = vmatprep.subr.bf16.mxu0 0
    %4113 = vmatpush1.bf16.msra.mxu0 %v4011
    %4114 = vmatprep.subr.bf16.mxu0 0
    %4115 = vmatpush1.bf16.msra.mxu0 %v4012
    %4116 = vmatprep.subr.bf16.mxu0 0
    %4117 = vmatpush1.bf16.msra.mxu0 %v4013
    %4118 = vmatprep.mubr.bf16.mxu0 %v3784
    %4119 = vmatmul.mubr.bf16.gmra.mrb[0].mxu0 %v3783
    %v4120 = vpop.f32.mrb[0].mxu0
    %v4121 = vadd.f32 %v4081, %v4120
    %v4122 = vpop.f32.mrb[0].mxu0
    %v4123 = vpop.f32.mrb[0].mxu0
    %v4124 = vpop.f32.mrb[0].mxu0
    %4125 = vdwg.mxu0
    %v4126 = vmax.f32 %v4121, 0.0
    %v4127 = vpack.c.bf16 %v4126, %v4126
    %v4128 = vld [vmem:[#allocation8 + $0x30] sm:$0xf]
    %v4129 = vld [vmem:[#allocation8 + $0x64] sm:$0xf]
    %v4130 = vld [vmem:[#allocation8 + $0x98] sm:$0xf]
    %v4131 = vld [vmem:[#allocation8 + $0xcc] sm:$0xf]
    %v4132 = vld [vmem:[#allocation8 + $0x100] sm:$0xf]
    %v4133 = vld [vmem:[#allocation8 + $0x134] sm:$0xf]
    %v4134 = vld [vmem:[#allocation8 + $0x168] sm:$0xf]
    %v4135 = vld [vmem:[#allocation8 + $0x19c] sm:$0xf]
    %v4136 = vld [vmem:[#allocation8 + $0x1d0] sm:$0xf]
    %v4137 = vld [vmem:[#allocation8 + $0x204] sm:$0xf]
    %v4138 = vld [vmem:[#allocation8 + $0x238] sm:$0xf]
    %v4139 = vld [vmem:[#allocation8 + $0x26c] sm:$0xf]
    %v4140 = vld [vmem:[#allocation8 + $0x2a0] sm:$0xf]
    %v4141 = vld [vmem:[#allocation8 + $0x2d4] sm:$0xf]
    %v4142 = vld [vmem:[#allocation8 + $0x308] sm:$0xf]
    %v4143 = vld [vmem:[#allocation8 + $0x33c] sm:$0xf]
    %v4144 = vld [vmem:[%s5 + $0xf] sm:$0x1]
    %v4145 = vlaneseq
    %v4146 = vshrl.u32 %v4145, 7
    %v4147 = vsub.s32 0, %v4146
    %v4148 = vrot.slane %v4144, %v4147
    %v4165 = vunpack.c.l.b16 %v4128
    %v4166 = vunpack.c.l.b16 %v4129
    %v4167 = vunpack.c.l.b16 %v4130
    %v4168 = vunpack.c.l.b16 %v4131
    %v4169 = vunpack.c.l.b16 %v4132
    %v4170 = vunpack.c.l.b16 %v4133
    %v4171 = vunpack.c.l.b16 %v4134
    %v4172 = vunpack.c.l.b16 %v4135
    %v4173 = vunpack.c.l.b16 %v4136
    %v4174 = vunpack.c.l.b16 %v4137
    %v4175 = vunpack.c.l.b16 %v4138
    %v4176 = vunpack.c.l.b16 %v4139
    %v4177 = vunpack.c.l.b16 %v4140
    %v4178 = vunpack.c.l.b16 %v4141
    %v4179 = vunpack.c.l.b16 %v4142
    %v4180 = vunpack.c.l.b16 %v4143
    %v4181 = vpack.c.b16 %v4166, %v4165
    %v4182 = vpack.c.b16 %v4168, %v4167
    %v4183 = vpack.c.b16 %v4170, %v4169
    %v4184 = vpack.c.b16 %v4172, %v4171
    %v4185 = vpack.c.b16 %v4174, %v4173
    %v4186 = vpack.c.b16 %v4176, %v4175
    %v4187 = vpack.c.b16 %v4178, %v4177
    %v4188 = vpack.c.b16 %v4180, %v4179
    %4197 = vmatprep.subr.bf16.mxu0 0
    %4198 = vmatpush1.bf16.msra.mxu0 %v4181
    %4199 = vmatprep.subr.bf16.mxu0 0
    %4200 = vmatpush1.bf16.msra.mxu0 %v4182
    %4201 = vmatprep.subr.bf16.mxu0 0
    %4202 = vmatpush1.bf16.msra.mxu0 %v4183
    %4203 = vmatprep.subr.bf16.mxu0 0
    %4204 = vmatpush1.bf16.msra.mxu0 %v4184
    %4205 = vmatprep.subr.bf16.mxu0 0
    %4206 = vmatpush1.bf16.msra.mxu0 %v4185
    %4207 = vmatprep.subr.bf16.mxu0 0
    %4208 = vmatpush1.bf16.msra.mxu0 %v4186
    %4209 = vmatprep.subr.bf16.mxu0 0
    %4210 = vmatpush1.bf16.msra.mxu0 %v4187
    %4211 = vmatprep.subr.bf16.mxu0 0
    %4212 = vmatpush1.bf16.msra.mxu0 %v4188
    %4213 = vmatprep.subr.bf16.mxu0 0
    %4214 = vmatpush1.bf16.msra.mxu0 0
    %4215 = vmatprep.subr.bf16.mxu0 0
    %4216 = vmatpush1.bf16.msra.mxu0 0
    %4217 = vmatprep.subr.bf16.mxu0 0
    %4218 = vmatpush1.bf16.msra.mxu0 0
    %4219 = vmatprep.subr.bf16.mxu0 0
    %4220 = vmatpush1.bf16.msra.mxu0 0
    %4221 = vmatprep.subr.bf16.mxu0 0
    %4222 = vmatpush1.bf16.msra.mxu0 0
    %4223 = vmatprep.subr.bf16.mxu0 0
    %4224 = vmatpush1.bf16.msra.mxu0 0
    %4225 = vmatprep.subr.bf16.mxu0 0
    %4226 = vmatpush1.bf16.msra.mxu0 0
    %4227 = vmatprep.subr.bf16.mxu0 0
    %4228 = vmatpush1.bf16.msra.mxu0 0
    %4229 = vmatprep.mubr.bf16.mxu0 0
    %4230 = vmatmul.mubr.bf16.gmra.mrb[0].mxu0 %v4127
    %v4231 = vpop.f32.mrb[0].mxu0
    %v4232 = vadd.f32 %v4148, %v4231
    %v4233 = vpop.f32.mrb[0].mxu0
    %v4234 = vpop.f32.mrb[0].mxu0
    %v4235 = vpop.f32.mrb[0].mxu0
    %4236 = vdwg.mxu0
    %4237 = vst [vmem:[%s6] sm:$0x3] %v4232
    // Predicated region
    $region38: #{conv_lstm_forward.1} parent=1 // pred_check
      _
    $region39: #{conv_lstm_forward.1} parent=1 // pred_check_branch
      %4239 = sbr.rel (0) target = $region41
    $region40: #{conv_lstm_forward.1} parent=1 // pred_region
      _
    $region41: #{conv_lstm_forward.1} parent=1 // pred_fallthru
      _
    // Predicated region
    $region42: #{conv_lstm_forward.1} parent=1 // pred_check
      _
    $region43: #{conv_lstm_forward.1} parent=1 // pred_check_branch
      %4241 = sbr.rel (0) target = $region45
    $region44: #{conv_lstm_forward.1} parent=1 // pred_region
      _
    $region45: #{conv_lstm_forward.1} parent=1 // pred_fallthru
      _
    %4242 = vsyncpa [#allocation7], 1
    %4243 = vsyncpa [#allocation9], 1

</llo_original>
